<compile_context>
chip_gen: v7x
topology: tpu7x:2x2x1
jax: 0.10.0
libtpu: 0.0.40
codegen_flags: <defaults>
</compile_context>

<pallas_src>
import functools

import jax
import jax.numpy as jnp
from jax import lax
from jax.experimental import pallas as pl
from jax.experimental.pallas import tpu as pltpu


# ----------------------------------------------------------------------------
# Fused kernel factory: num_layers LSTM recurrences + FC + sigmoid, one call.
# ----------------------------------------------------------------------------
def _make_fused_lstm_fc_kernel(num_layers, T, B, H, C):
    H4 = 4 * H
    # Short fixed trip counts: fully unroll at trace time (straight-line code,
    # best LLO scheduler visibility).  Long sequences: fori_loop with carry.
    python_unroll = T <= 64

    def kernel(*refs):
        # --- unpack refs: inputs..., output, scratch... ---
        pos = 0
        gx0_ref = refs[pos]; pos += 1            # (T, B, 4H) hoisted layer-0 gates
        whh_refs = [refs[pos]]; pos += 1         # layer-0 W_hh (H, 4H)
        wih_refs = [None]
        bias_refs = [None]
        for _ in range(1, num_layers):
            wih_refs.append(refs[pos])           # (H, 4H)
            bias_refs.append(refs[pos + 1])      # (1, 4H)
            whh_refs.append(refs[pos + 2])       # (H, 4H)
            pos += 3
        w_fc_ref = refs[pos]; b_fc_ref = refs[pos + 1]; pos += 2
        out_ref = refs[pos]; pos += 1
        g_scr = refs[pos] if num_layers > 1 else None  # shared inter-layer gates

        h_last = None
        for layer in range(num_layers):
            is_last = layer == num_layers - 1
            # precomputed x-projection gates for this layer (time-sliced)
            read_g = gx0_ref if layer == 0 else g_scr
            # where this layer deposits the NEXT layer's x-projection gates
            # (safe to alias read_g: slot t is read before it is overwritten)
            write_g = None if is_last else g_scr

            # hoist loop-invariant weight loads out of the time loop
            w_hh = whh_refs[layer][...]
            if not is_last:
                w_ih_n = wih_refs[layer + 1][...]
                b_n = bias_refs[layer + 1][...]
            else:
                w_ih_n = None
                b_n = None

            def step(t, carry):
                h, c = carry
                # only the recurrent matmul is on the serial critical path
                gates = read_g[t] + jnp.dot(
                    h.astype(w_hh.dtype), w_hh,
                    preferred_element_type=jnp.float32)
                # PyTorch gate order [i, f, g, o]
                i_g = jax.nn.sigmoid(gates[:, 0 * H:1 * H])
                f_g = jax.nn.sigmoid(gates[:, 1 * H:2 * H])
                g_g = jnp.tanh(gates[:, 2 * H:3 * H])
                o_g = jax.nn.sigmoid(gates[:, 3 * H:4 * H])
                c_new = f_g * c + i_g * g_g
                h_new = o_g * jnp.tanh(c_new)
                if write_g is not None:
                    # fuse the next layer's input projection (off the next
                    # layer's recurrence critical path); stays in VMEM scratch
                    write_g[t] = (
                        jnp.dot(h_new.astype(w_ih_n.dtype), w_ih_n,
                                preferred_element_type=jnp.float32) + b_n)
                return h_new, c_new

            # zero (h0, c0), matching the PyTorch module
            h = jnp.zeros((B, H), jnp.float32)
            c = jnp.zeros((B, H), jnp.float32)
            if python_unroll:
                for t in range(T):
                    h, c = step(t, (h, c))
            else:
                h, c = lax.fori_loop(0, T, step, (h, c))
            h_last = h

        # final Linear + sigmoid on the last timestep of the top layer;
        # only this tiny (B, C) result ever leaves the kernel.
        w_fc = w_fc_ref[...]
        logits = jnp.dot(h_last.astype(w_fc.dtype), w_fc,
                         preferred_element_type=jnp.float32) + b_fc_ref[...]
        out_ref[...] = jax.nn.sigmoid(logits)

    return kernel


# ----------------------------------------------------------------------------
# Wrapper: batch-first (B, T, D) -> (B, num_classes), like the PyTorch module.
# ----------------------------------------------------------------------------
@functools.partial(jax.jit, static_argnames=("compute_dtype",))
def rnn_forward(x_btd, params, compute_dtype=jnp.float32):
    B, T, D = x_btd.shape
    lstm = params["lstm"]
    num_layers = len(lstm)
    w_ih0, w_hh0, b0 = lstm[0]
    H = w_hh0.shape[0]
    H4 = 4 * H
    C = params["w_fc_t"].shape[1]

    # Hoisted layer-0 input projection: one big (T*B, D) x (D, 4H) matmul in
    # plain XLA (fused bias folded in), fed to the kernel time-sliced.
    x_tm = jnp.transpose(x_btd, (1, 0, 2)).reshape(T * B, D)
    gx0 = jnp.dot(x_tm.astype(compute_dtype), w_ih0.astype(compute_dtype),
                  preferred_element_type=jnp.float32) + b0[None, :]
    gx0 = gx0.reshape(T, B, H4)

    args = [gx0, w_hh0.astype(compute_dtype)]
    for layer in range(1, num_layers):
        w_ih_l, w_hh_l, b_l = lstm[layer]
        args += [w_ih_l.astype(compute_dtype),
                 b_l.reshape(1, H4),
                 w_hh_l.astype(compute_dtype)]
    args += [params["w_fc_t"].astype(compute_dtype),
             params["b_fc"].reshape(1, C)]

    scratch_shapes = []
    if num_layers > 1:
        scratch_shapes.append(pltpu.VMEM((T, B, H4), jnp.float32))

    kernel = _make_fused_lstm_fc_kernel(num_layers, T, B, H, C)
    return pl.pallas_call(
        kernel,
        out_shape=jax.ShapeDtypeStruct((B, C), jnp.float32),
        scratch_shapes=scratch_shapes,
    )(*args)


# ----------------------------------------------------------------------------
# Deterministic parameter initialisation (PyTorch LSTM-style uniform(-k, k)).
# Weights are stored transposed for the x @ W form; biases fused (b_ih + b_hh).
# ----------------------------------------------------------------------------
def init_params(key, input_size, hidden_size, num_layers, num_classes):
    H = hidden_size
    k = 1.0 / jnp.sqrt(jnp.float32(H))
    params = {"lstm": []}
    for layer in range(num_layers):
        d_in = input_size if layer == 0 else H
        key, k1, k2, k3, k4 = jax.random.split(key, 5)
        w_ih = jax.random.uniform(k1, (4 * H, d_in), jnp.float32, -k, k)
        w_hh = jax.random.uniform(k2, (4 * H, H), jnp.float32, -k, k)
        b_ih = jax.random.uniform(k3, (4 * H,), jnp.float32, -k, k)
        b_hh = jax.random.uniform(k4, (4 * H,), jnp.float32, -k, k)
        params["lstm"].append((w_ih.T, w_hh.T, b_ih + b_hh))
    key, k5, k6 = jax.random.split(key, 3)
    w_fc = jax.random.uniform(k5, (num_classes, H), jnp.float32, -k, k)
    b_fc = jax.random.uniform(k6, (num_classes,), jnp.float32, -k, k)
    params["w_fc_t"] = w_fc.T
    params["b_fc"] = b_fc
    return params


# ----------------------------------------------------------------------------
# Pure-JAX f32 reference (mirrors the PyTorch forward) for correctness checks.
# ----------------------------------------------------------------------------
def rnn_forward_ref(x_btd, params):
    B = x_btd.shape[0]
    x = jnp.transpose(x_btd, (1, 0, 2)).astype(jnp.float32)
    for (w_ih_t, w_hh_t, bias) in params["lstm"]:
        H = w_hh_t.shape[0]
        h = jnp.zeros((B, H), jnp.float32)
        c = jnp.zeros((B, H), jnp.float32)
        outs = []
        for t in range(x.shape[0]):
            gates = x[t] @ w_ih_t + h @ w_hh_t + bias[None, :]
            i = jax.nn.sigmoid(gates[:, 0 * H:1 * H])
            f = jax.nn.sigmoid(gates[:, 1 * H:2 * H])
            g = jnp.tanh(gates[:, 2 * H:3 * H])
            o = jax.nn.sigmoid(gates[:, 3 * H:4 * H])
            c = f * c + i * g
            h = o * jnp.tanh(c)
            outs.append(h)
        x = jnp.stack(outs, axis=0)
    return jax.nn.sigmoid(x[-1] @ params["w_fc_t"] + params["b_fc"][None, :])


if __name__ == "__main__":
    input_size = 16
    hidden_size = 32
    num_layers = 2
    num_classes = 4
    batch = 2
    seq = 8

    key = jax.random.PRNGKey(0)
    key, xkey = jax.random.split(key)
    x = jax.random.normal(xkey, (batch, seq, input_size), jnp.float32)
    params = init_params(key, input_size, hidden_size, num_layers, num_classes)

    ref = rnn_forward_ref(x, params)

    # f32 path (matches PyTorch f32 semantics)
    out = jax.block_until_ready(rnn_forward(x, params))
    assert out.shape == (batch, num_classes)
    assert jnp.allclose(out, ref, atol=1e-4, rtol=1e-4), (out, ref)

    # bf16 MXU-operand path (v6e/v7x recommendation): f32 state/accumulation,
    # so only a small drift vs. the f32 reference is expected.
    out_bf16 = jax.block_until_ready(
        rnn_forward(x, params, compute_dtype=jnp.bfloat16))
    assert out_bf16.shape == (batch, num_classes)
    assert jnp.allclose(out_bf16, ref, atol=3e-2, rtol=3e-2), (out_bf16, ref)

    print("KERNEL_OK")
</pallas_src>

<mosaic_0001>
module attributes {stable_mosaic.version = 11 : i64} {
  func.func @kernel(%arg0: memref<8x2x128xf32, #tpu.memory_space<vmem>>, %arg1: memref<32x128xf32, #tpu.memory_space<vmem>>, %arg2: memref<32x128xf32, #tpu.memory_space<vmem>>, %arg3: memref<1x128xf32, #tpu.memory_space<vmem>>, %arg4: memref<32x128xf32, #tpu.memory_space<vmem>>, %arg5: memref<32x4xf32, #tpu.memory_space<vmem>>, %arg6: memref<1x4xf32, #tpu.memory_space<vmem>>, %arg7: memref<2x4xf32, #tpu.memory_space<vmem>>, %arg8: memref<8x2x128xf32, #tpu.memory_space<vmem>>) attributes {dimension_semantics = [], scalar_prefetch = 0 : i64, scratch_operands = 1 : i64, tpu.core_type = #tpu.core_type<tc>} {
    %c0 = arith.constant 0 : index
    %c0_0 = arith.constant 0 : index
    %0 = vector.load %arg1[%c0, %c0_0] : memref<32x128xf32, #tpu.memory_space<vmem>>, vector<32x128xf32>
    %c0_1 = arith.constant 0 : index
    %c0_2 = arith.constant 0 : index
    %1 = vector.load %arg2[%c0_1, %c0_2] : memref<32x128xf32, #tpu.memory_space<vmem>>, vector<32x128xf32>
    %c0_3 = arith.constant 0 : index
    %c0_4 = arith.constant 0 : index
    %2 = vector.load %arg3[%c0_3, %c0_4] : memref<1x128xf32, #tpu.memory_space<vmem>>, vector<1x128xf32>
    %cst = arith.constant 0.000000e+00 : f32
    %3 = vector.broadcast %cst : f32 to vector<2x32xf32>
    %cst_5 = arith.constant 0.000000e+00 : f32
    %4 = vector.broadcast %cst_5 : f32 to vector<2x32xf32>
    %c0_6 = arith.constant 0 : index
    %c0_7 = arith.constant 0 : index
    %c0_8 = arith.constant 0 : index
    %5 = vector.load %arg0[%c0_6, %c0_7, %c0_8] : memref<8x2x128xf32, #tpu.memory_space<vmem>>, vector<1x2x128xf32>
    %6 = vector.shape_cast %5 : vector<1x2x128xf32> to vector<2x128xf32>
    %cst_9 = arith.constant dense<0.000000e+00> : vector<2x128xf32>
    %7 = tpu.matmul %3, %0, %cst_9 {dimension_numbers = #tpu.dot_dimension_numbers<[1], [0], [0], [1], [0, 0, 1, 1], [], []>} : vector<2x32xf32>, vector<32x128xf32>, vector<2x128xf32> -> vector<2x128xf32>
    %8 = arith.addf %6, %7 : vector<2x128xf32>
    %9 = vector.extract_strided_slice %8 {offsets = [0, 0], sizes = [2, 32], strides = [1, 1]} : vector<2x128xf32> to vector<2x32xf32>
    %10 = arith.negf %9 : vector<2x32xf32>
    %11 = math.exp %10 : vector<2x32xf32>
    %cst_10 = arith.constant 1.000000e+00 : f32
    %12 = vector.broadcast %cst_10 : f32 to vector<2x32xf32>
    %13 = arith.addf %12, %11 : vector<2x32xf32>
    %14 = arith.divf %12, %13 : vector<2x32xf32>
    %15 = vector.extract_strided_slice %8 {offsets = [0, 32], sizes = [2, 32], strides = [1, 1]} : vector<2x128xf32> to vector<2x32xf32>
    %16 = arith.negf %15 : vector<2x32xf32>
    %17 = math.exp %16 : vector<2x32xf32>
    %cst_11 = arith.constant 1.000000e+00 : f32
    %18 = vector.broadcast %cst_11 : f32 to vector<2x32xf32>
    %19 = arith.addf %18, %17 : vector<2x32xf32>
    %20 = arith.divf %18, %19 : vector<2x32xf32>
    %21 = vector.extract_strided_slice %8 {offsets = [0, 64], sizes = [2, 32], strides = [1, 1]} : vector<2x128xf32> to vector<2x32xf32>
    %22 = math.tanh %21 : vector<2x32xf32>
    %23 = vector.extract_strided_slice %8 {offsets = [0, 96], sizes = [2, 32], strides = [1, 1]} : vector<2x128xf32> to vector<2x32xf32>
    %24 = arith.negf %23 : vector<2x32xf32>
    %25 = math.exp %24 : vector<2x32xf32>
    %cst_12 = arith.constant 1.000000e+00 : f32
    %26 = vector.broadcast %cst_12 : f32 to vector<2x32xf32>
    %27 = arith.addf %26, %25 : vector<2x32xf32>
    %28 = arith.divf %26, %27 : vector<2x32xf32>
    %29 = arith.mulf %20, %4 : vector<2x32xf32>
    %30 = arith.mulf %14, %22 : vector<2x32xf32>
    %31 = arith.addf %29, %30 : vector<2x32xf32>
    %32 = math.tanh %31 : vector<2x32xf32>
    %33 = arith.mulf %28, %32 : vector<2x32xf32>
    %cst_13 = arith.constant dense<0.000000e+00> : vector<2x128xf32>
    %34 = tpu.matmul %33, %1, %cst_13 {dimension_numbers = #tpu.dot_dimension_numbers<[1], [0], [0], [1], [0, 0, 1, 1], [], []>} : vector<2x32xf32>, vector<32x128xf32>, vector<2x128xf32> -> vector<2x128xf32>
    %35 = vector.broadcast %2 : vector<1x128xf32> to vector<2x128xf32>
    %36 = arith.addf %34, %35 : vector<2x128xf32>
    %c0_14 = arith.constant 0 : index
    %c0_15 = arith.constant 0 : index
    %c0_16 = arith.constant 0 : index
    %37 = vector.load %arg8[%c0_14, %c0_15, %c0_16] : memref<8x2x128xf32, #tpu.memory_space<vmem>>, vector<1x2x128xf32>
    %38 = vector.shape_cast %37 : vector<1x2x128xf32> to vector<2x128xf32>
    %39 = vector.shape_cast %36 : vector<2x128xf32> to vector<1x2x128xf32>
    tpu.vector_store %arg8[%c0_14, %c0_15, %c0_16], %39 {strides = array<i32>} : memref<8x2x128xf32, #tpu.memory_space<vmem>>, vector<1x2x128xf32>,
    %c1 = arith.constant 1 : index
    %c0_17 = arith.constant 0 : index
    %c0_18 = arith.constant 0 : index
    %40 = vector.load %arg0[%c1, %c0_17, %c0_18] : memref<8x2x128xf32, #tpu.memory_space<vmem>>, vector<1x2x128xf32>
    %41 = vector.shape_cast %40 : vector<1x2x128xf32> to vector<2x128xf32>
    %cst_19 = arith.constant dense<0.000000e+00> : vector<2x128xf32>
    %42 = tpu.matmul %33, %0, %cst_19 {dimension_numbers = #tpu.dot_dimension_numbers<[1], [0], [0], [1], [0, 0, 1, 1], [], []>} : vector<2x32xf32>, vector<32x128xf32>, vector<2x128xf32> -> vector<2x128xf32>
    %43 = arith.addf %41, %42 : vector<2x128xf32>
    %44 = vector.extract_strided_slice %43 {offsets = [0, 0], sizes = [2, 32], strides = [1, 1]} : vector<2x128xf32> to vector<2x32xf32>
    %45 = arith.negf %44 : vector<2x32xf32>
    %46 = math.exp %45 : vector<2x32xf32>
    %cst_20 = arith.constant 1.000000e+00 : f32
    %47 = vector.broadcast %cst_20 : f32 to vector<2x32xf32>
    %48 = arith.addf %47, %46 : vector<2x32xf32>
    %49 = arith.divf %47, %48 : vector<2x32xf32>
    %50 = vector.extract_strided_slice %43 {offsets = [0, 32], sizes = [2, 32], strides = [1, 1]} : vector<2x128xf32> to vector<2x32xf32>
    %51 = arith.negf %50 : vector<2x32xf32>
    %52 = math.exp %51 : vector<2x32xf32>
    %cst_21 = arith.constant 1.000000e+00 : f32
    %53 = vector.broadcast %cst_21 : f32 to vector<2x32xf32>
    %54 = arith.addf %53, %52 : vector<2x32xf32>
    %55 = arith.divf %53, %54 : vector<2x32xf32>
    %56 = vector.extract_strided_slice %43 {offsets = [0, 64], sizes = [2, 32], strides = [1, 1]} : vector<2x128xf32> to vector<2x32xf32>
    %57 = math.tanh %56 : vector<2x32xf32>
    %58 = vector.extract_strided_slice %43 {offsets = [0, 96], sizes = [2, 32], strides = [1, 1]} : vector<2x128xf32> to vector<2x32xf32>
    %59 = arith.negf %58 : vector<2x32xf32>
    %60 = math.exp %59 : vector<2x32xf32>
    %cst_22 = arith.constant 1.000000e+00 : f32
    %61 = vector.broadcast %cst_22 : f32 to vector<2x32xf32>
    %62 = arith.addf %61, %60 : vector<2x32xf32>
    %63 = arith.divf %61, %62 : vector<2x32xf32>
    %64 = arith.mulf %55, %31 : vector<2x32xf32>
    %65 = arith.mulf %49, %57 : vector<2x32xf32>
    %66 = arith.addf %64, %65 : vector<2x32xf32>
    %67 = math.tanh %66 : vector<2x32xf32>
    %68 = arith.mulf %63, %67 : vector<2x32xf32>
    %cst_23 = arith.constant dense<0.000000e+00> : vector<2x128xf32>
    %69 = tpu.matmul %68, %1, %cst_23 {dimension_numbers = #tpu.dot_dimension_numbers<[1], [0], [0], [1], [0, 0, 1, 1], [], []>} : vector<2x32xf32>, vector<32x128xf32>, vector<2x128xf32> -> vector<2x128xf32>
    %70 = vector.broadcast %2 : vector<1x128xf32> to vector<2x128xf32>
    %71 = arith.addf %69, %70 : vector<2x128xf32>
    %c1_24 = arith.constant 1 : index
    %c0_25 = arith.constant 0 : index
    %c0_26 = arith.constant 0 : index
    %72 = vector.load %arg8[%c1_24, %c0_25, %c0_26] : memref<8x2x128xf32, #tpu.memory_space<vmem>>, vector<1x2x128xf32>
    %73 = vector.shape_cast %72 : vector<1x2x128xf32> to vector<2x128xf32>
    %74 = vector.shape_cast %71 : vector<2x128xf32> to vector<1x2x128xf32>
    tpu.vector_store %arg8[%c1_24, %c0_25, %c0_26], %74 {strides = array<i32>} : memref<8x2x128xf32, #tpu.memory_space<vmem>>, vector<1x2x128xf32>,
    %c2 = arith.constant 2 : index
    %c0_27 = arith.constant 0 : index
    %c0_28 = arith.constant 0 : index
    %75 = vector.load %arg0[%c2, %c0_27, %c0_28] : memref<8x2x128xf32, #tpu.memory_space<vmem>>, vector<1x2x128xf32>
    %76 = vector.shape_cast %75 : vector<1x2x128xf32> to vector<2x128xf32>
    %cst_29 = arith.constant dense<0.000000e+00> : vector<2x128xf32>
    %77 = tpu.matmul %68, %0, %cst_29 {dimension_numbers = #tpu.dot_dimension_numbers<[1], [0], [0], [1], [0, 0, 1, 1], [], []>} : vector<2x32xf32>, vector<32x128xf32>, vector<2x128xf32> -> vector<2x128xf32>
    %78 = arith.addf %76, %77 : vector<2x128xf32>
    %79 = vector.extract_strided_slice %78 {offsets = [0, 0], sizes = [2, 32], strides = [1, 1]} : vector<2x128xf32> to vector<2x32xf32>
    %80 = arith.negf %79 : vector<2x32xf32>
    %81 = math.exp %80 : vector<2x32xf32>
    %cst_30 = arith.constant 1.000000e+00 : f32
    %82 = vector.broadcast %cst_30 : f32 to vector<2x32xf32>
    %83 = arith.addf %82, %81 : vector<2x32xf32>
    %84 = arith.divf %82, %83 : vector<2x32xf32>
    %85 = vector.extract_strided_slice %78 {offsets = [0, 32], sizes = [2, 32], strides = [1, 1]} : vector<2x128xf32> to vector<2x32xf32>
    %86 = arith.negf %85 : vector<2x32xf32>
    %87 = math.exp %86 : vector<2x32xf32>
    %cst_31 = arith.constant 1.000000e+00 : f32
    %88 = vector.broadcast %cst_31 : f32 to vector<2x32xf32>
    %89 = arith.addf %88, %87 : vector<2x32xf32>
    %90 = arith.divf %88, %89 : vector<2x32xf32>
    %91 = vector.extract_strided_slice %78 {offsets = [0, 64], sizes = [2, 32], strides = [1, 1]} : vector<2x128xf32> to vector<2x32xf32>
    %92 = math.tanh %91 : vector<2x32xf32>
    %93 = vector.extract_strided_slice %78 {offsets = [0, 96], sizes = [2, 32], strides = [1, 1]} : vector<2x128xf32> to vector<2x32xf32>
    %94 = arith.negf %93 : vector<2x32xf32>
    %95 = math.exp %94 : vector<2x32xf32>
    %cst_32 = arith.constant 1.000000e+00 : f32
    %96 = vector.broadcast %cst_32 : f32 to vector<2x32xf32>
    %97 = arith.addf %96, %95 : vector<2x32xf32>
    %98 = arith.divf %96, %97 : vector<2x32xf32>
    %99 = arith.mulf %90, %66 : vector<2x32xf32>
    %100 = arith.mulf %84, %92 : vector<2x32xf32>
    %101 = arith.addf %99, %100 : vector<2x32xf32>
    %102 = math.tanh %101 : vector<2x32xf32>
    %103 = arith.mulf %98, %102 : vector<2x32xf32>
    %cst_33 = arith.constant dense<0.000000e+00> : vector<2x128xf32>
    %104 = tpu.matmul %103, %1, %cst_33 {dimension_numbers = #tpu.dot_dimension_numbers<[1], [0], [0], [1], [0, 0, 1, 1], [], []>} : vector<2x32xf32>, vector<32x128xf32>, vector<2x128xf32> -> vector<2x128xf32>
    %105 = vector.broadcast %2 : vector<1x128xf32> to vector<2x128xf32>
    %106 = arith.addf %104, %105 : vector<2x128xf32>
    %c2_34 = arith.constant 2 : index
    %c0_35 = arith.constant 0 : index
    %c0_36 = arith.constant 0 : index
    %107 = vector.load %arg8[%c2_34, %c0_35, %c0_36] : memref<8x2x128xf32, #tpu.memory_space<vmem>>, vector<1x2x128xf32>
    %108 = vector.shape_cast %107 : vector<1x2x128xf32> to vector<2x128xf32>
    %109 = vector.shape_cast %106 : vector<2x128xf32> to vector<1x2x128xf32>
    tpu.vector_store %arg8[%c2_34, %c0_35, %c0_36], %109 {strides = array<i32>} : memref<8x2x128xf32, #tpu.memory_space<vmem>>, vector<1x2x128xf32>,
    %c3 = arith.constant 3 : index
    %c0_37 = arith.constant 0 : index
    %c0_38 = arith.constant 0 : index
    %110 = vector.load %arg0[%c3, %c0_37, %c0_38] : memref<8x2x128xf32, #tpu.memory_space<vmem>>, vector<1x2x128xf32>
    %111 = vector.shape_cast %110 : vector<1x2x128xf32> to vector<2x128xf32>
    %cst_39 = arith.constant dense<0.000000e+00> : vector<2x128xf32>
    %112 = tpu.matmul %103, %0, %cst_39 {dimension_numbers = #tpu.dot_dimension_numbers<[1], [0], [0], [1], [0, 0, 1, 1], [], []>} : vector<2x32xf32>, vector<32x128xf32>, vector<2x128xf32> -> vector<2x128xf32>
    %113 = arith.addf %111, %112 : vector<2x128xf32>
    %114 = vector.extract_strided_slice %113 {offsets = [0, 0], sizes = [2, 32], strides = [1, 1]} : vector<2x128xf32> to vector<2x32xf32>
    %115 = arith.negf %114 : vector<2x32xf32>
    %116 = math.exp %115 : vector<2x32xf32>
    %cst_40 = arith.constant 1.000000e+00 : f32
    %117 = vector.broadcast %cst_40 : f32 to vector<2x32xf32>
    %118 = arith.addf %117, %116 : vector<2x32xf32>
    %119 = arith.divf %117, %118 : vector<2x32xf32>
    %120 = vector.extract_strided_slice %113 {offsets = [0, 32], sizes = [2, 32], strides = [1, 1]} : vector<2x128xf32> to vector<2x32xf32>
    %121 = arith.negf %120 : vector<2x32xf32>
    %122 = math.exp %121 : vector<2x32xf32>
    %cst_41 = arith.constant 1.000000e+00 : f32
    %123 = vector.broadcast %cst_41 : f32 to vector<2x32xf32>
    %124 = arith.addf %123, %122 : vector<2x32xf32>
    %125 = arith.divf %123, %124 : vector<2x32xf32>
    %126 = vector.extract_strided_slice %113 {offsets = [0, 64], sizes = [2, 32], strides = [1, 1]} : vector<2x128xf32> to vector<2x32xf32>
    %127 = math.tanh %126 : vector<2x32xf32>
    %128 = vector.extract_strided_slice %113 {offsets = [0, 96], sizes = [2, 32], strides = [1, 1]} : vector<2x128xf32> to vector<2x32xf32>
    %129 = arith.negf %128 : vector<2x32xf32>
    %130 = math.exp %129 : vector<2x32xf32>
    %cst_42 = arith.constant 1.000000e+00 : f32
    %131 = vector.broadcast %cst_42 : f32 to vector<2x32xf32>
    %132 = arith.addf %131, %130 : vector<2x32xf32>
    %133 = arith.divf %131, %132 : vector<2x32xf32>
    %134 = arith.mulf %125, %101 : vector<2x32xf32>
    %135 = arith.mulf %119, %127 : vector<2x32xf32>
    %136 = arith.addf %134, %135 : vector<2x32xf32>
    %137 = math.tanh %136 : vector<2x32xf32>
    %138 = arith.mulf %133, %137 : vector<2x32xf32>
    %cst_43 = arith.constant dense<0.000000e+00> : vector<2x128xf32>
    %139 = tpu.matmul %138, %1, %cst_43 {dimension_numbers = #tpu.dot_dimension_numbers<[1], [0], [0], [1], [0, 0, 1, 1], [], []>} : vector<2x32xf32>, vector<32x128xf32>, vector<2x128xf32> -> vector<2x128xf32>
    %140 = vector.broadcast %2 : vector<1x128xf32> to vector<2x128xf32>
    %141 = arith.addf %139, %140 : vector<2x128xf32>
    %c3_44 = arith.constant 3 : index
    %c0_45 = arith.constant 0 : index
    %c0_46 = arith.constant 0 : index
    %142 = vector.load %arg8[%c3_44, %c0_45, %c0_46] : memref<8x2x128xf32, #tpu.memory_space<vmem>>, vector<1x2x128xf32>
    %143 = vector.shape_cast %142 : vector<1x2x128xf32> to vector<2x128xf32>
    %144 = vector.shape_cast %141 : vector<2x128xf32> to vector<1x2x128xf32>
    tpu.vector_store %arg8[%c3_44, %c0_45, %c0_46], %144 {strides = array<i32>} : memref<8x2x128xf32, #tpu.memory_space<vmem>>, vector<1x2x128xf32>,
    %c4 = arith.constant 4 : index
    %c0_47 = arith.constant 0 : index
    %c0_48 = arith.constant 0 : index
    %145 = vector.load %arg0[%c4, %c0_47, %c0_48] : memref<8x2x128xf32, #tpu.memory_space<vmem>>, vector<1x2x128xf32>
    %146 = vector.shape_cast %145 : vector<1x2x128xf32> to vector<2x128xf32>
    %cst_49 = arith.constant dense<0.000000e+00> : vector<2x128xf32>
    %147 = tpu.matmul %138, %0, %cst_49 {dimension_numbers = #tpu.dot_dimension_numbers<[1], [0], [0], [1], [0, 0, 1, 1], [], []>} : vector<2x32xf32>, vector<32x128xf32>, vector<2x128xf32> -> vector<2x128xf32>
    %148 = arith.addf %146, %147 : vector<2x128xf32>
    %149 = vector.extract_strided_slice %148 {offsets = [0, 0], sizes = [2, 32], strides = [1, 1]} : vector<2x128xf32> to vector<2x32xf32>
    %150 = arith.negf %149 : vector<2x32xf32>
    %151 = math.exp %150 : vector<2x32xf32>
    %cst_50 = arith.constant 1.000000e+00 : f32
    %152 = vector.broadcast %cst_50 : f32 to vector<2x32xf32>
    %153 = arith.addf %152, %151 : vector<2x32xf32>
    %154 = arith.divf %152, %153 : vector<2x32xf32>
    %155 = vector.extract_strided_slice %148 {offsets = [0, 32], sizes = [2, 32], strides = [1, 1]} : vector<2x128xf32> to vector<2x32xf32>
    %156 = arith.negf %155 : vector<2x32xf32>
    %157 = math.exp %156 : vector<2x32xf32>
    %cst_51 = arith.constant 1.000000e+00 : f32
    %158 = vector.broadcast %cst_51 : f32 to vector<2x32xf32>
    %159 = arith.addf %158, %157 : vector<2x32xf32>
    %160 = arith.divf %158, %159 : vector<2x32xf32>
    %161 = vector.extract_strided_slice %148 {offsets = [0, 64], sizes = [2, 32], strides = [1, 1]} : vector<2x128xf32> to vector<2x32xf32>
    %162 = math.tanh %161 : vector<2x32xf32>
    %163 = vector.extract_strided_slice %148 {offsets = [0, 96], sizes = [2, 32], strides = [1, 1]} : vector<2x128xf32> to vector<2x32xf32>
    %164 = arith.negf %163 : vector<2x32xf32>
    %165 = math.exp %164 : vector<2x32xf32>
    %cst_52 = arith.constant 1.000000e+00 : f32
    %166 = vector.broadcast %cst_52 : f32 to vector<2x32xf32>
    %167 = arith.addf %166, %165 : vector<2x32xf32>
    %168 = arith.divf %166, %167 : vector<2x32xf32>
    %169 = arith.mulf %160, %136 : vector<2x32xf32>
    %170 = arith.mulf %154, %162 : vector<2x32xf32>
    %171 = arith.addf %169, %170 : vector<2x32xf32>
    %172 = math.tanh %171 : vector<2x32xf32>
    %173 = arith.mulf %168, %172 : vector<2x32xf32>
    %cst_53 = arith.constant dense<0.000000e+00> : vector<2x128xf32>
    %174 = tpu.matmul %173, %1, %cst_53 {dimension_numbers = #tpu.dot_dimension_numbers<[1], [0], [0], [1], [0, 0, 1, 1], [], []>} : vector<2x32xf32>, vector<32x128xf32>, vector<2x128xf32> -> vector<2x128xf32>
    %175 = vector.broadcast %2 : vector<1x128xf32> to vector<2x128xf32>
    %176 = arith.addf %174, %175 : vector<2x128xf32>
    %c4_54 = arith.constant 4 : index
    %c0_55 = arith.constant 0 : index
    %c0_56 = arith.constant 0 : index
    %177 = vector.load %arg8[%c4_54, %c0_55, %c0_56] : memref<8x2x128xf32, #tpu.memory_space<vmem>>, vector<1x2x128xf32>
    %178 = vector.shape_cast %177 : vector<1x2x128xf32> to vector<2x128xf32>
    %179 = vector.shape_cast %176 : vector<2x128xf32> to vector<1x2x128xf32>
    tpu.vector_store %arg8[%c4_54, %c0_55, %c0_56], %179 {strides = array<i32>} : memref<8x2x128xf32, #tpu.memory_space<vmem>>, vector<1x2x128xf32>,
    %c5 = arith.constant 5 : index
    %c0_57 = arith.constant 0 : index
    %c0_58 = arith.constant 0 : index
    %180 = vector.load %arg0[%c5, %c0_57, %c0_58] : memref<8x2x128xf32, #tpu.memory_space<vmem>>, vector<1x2x128xf32>
    %181 = vector.shape_cast %180 : vector<1x2x128xf32> to vector<2x128xf32>
    %cst_59 = arith.constant dense<0.000000e+00> : vector<2x128xf32>
    %182 = tpu.matmul %173, %0, %cst_59 {dimension_numbers = #tpu.dot_dimension_numbers<[1], [0], [0], [1], [0, 0, 1, 1], [], []>} : vector<2x32xf32>, vector<32x128xf32>, vector<2x128xf32> -> vector<2x128xf32>
    %183 = arith.addf %181, %182 : vector<2x128xf32>
    %184 = vector.extract_strided_slice %183 {offsets = [0, 0], sizes = [2, 32], strides = [1, 1]} : vector<2x128xf32> to vector<2x32xf32>
    %185 = arith.negf %184 : vector<2x32xf32>
    %186 = math.exp %185 : vector<2x32xf32>
    %cst_60 = arith.constant 1.000000e+00 : f32
    %187 = vector.broadcast %cst_60 : f32 to vector<2x32xf32>
    %188 = arith.addf %187, %186 : vector<2x32xf32>
    %189 = arith.divf %187, %188 : vector<2x32xf32>
    %190 = vector.extract_strided_slice %183 {offsets = [0, 32], sizes = [2, 32], strides = [1, 1]} : vector<2x128xf32> to vector<2x32xf32>
    %191 = arith.negf %190 : vector<2x32xf32>
    %192 = math.exp %191 : vector<2x32xf32>
    %cst_61 = arith.constant 1.000000e+00 : f32
    %193 = vector.broadcast %cst_61 : f32 to vector<2x32xf32>
    %194 = arith.addf %193, %192 : vector<2x32xf32>
    %195 = arith.divf %193, %194 : vector<2x32xf32>
    %196 = vector.extract_strided_slice %183 {offsets = [0, 64], sizes = [2, 32], strides = [1, 1]} : vector<2x128xf32> to vector<2x32xf32>
    %197 = math.tanh %196 : vector<2x32xf32>
    %198 = vector.extract_strided_slice %183 {offsets = [0, 96], sizes = [2, 32], strides = [1, 1]} : vector<2x128xf32> to vector<2x32xf32>
    %199 = arith.negf %198 : vector<2x32xf32>
    %200 = math.exp %199 : vector<2x32xf32>
    %cst_62 = arith.constant 1.000000e+00 : f32
    %201 = vector.broadcast %cst_62 : f32 to vector<2x32xf32>
    %202 = arith.addf %201, %200 : vector<2x32xf32>
    %203 = arith.divf %201, %202 : vector<2x32xf32>
    %204 = arith.mulf %195, %171 : vector<2x32xf32>
    %205 = arith.mulf %189, %197 : vector<2x32xf32>
    %206 = arith.addf %204, %205 : vector<2x32xf32>
    %207 = math.tanh %206 : vector<2x32xf32>
    %208 = arith.mulf %203, %207 : vector<2x32xf32>
    %cst_63 = arith.constant dense<0.000000e+00> : vector<2x128xf32>
    %209 = tpu.matmul %208, %1, %cst_63 {dimension_numbers = #tpu.dot_dimension_numbers<[1], [0], [0], [1], [0, 0, 1, 1], [], []>} : vector<2x32xf32>, vector<32x128xf32>, vector<2x128xf32> -> vector<2x128xf32>
    %210 = vector.broadcast %2 : vector<1x128xf32> to vector<2x128xf32>
    %211 = arith.addf %209, %210 : vector<2x128xf32>
    %c5_64 = arith.constant 5 : index
    %c0_65 = arith.constant 0 : index
    %c0_66 = arith.constant 0 : index
    %212 = vector.load %arg8[%c5_64, %c0_65, %c0_66] : memref<8x2x128xf32, #tpu.memory_space<vmem>>, vector<1x2x128xf32>
    %213 = vector.shape_cast %212 : vector<1x2x128xf32> to vector<2x128xf32>
    %214 = vector.shape_cast %211 : vector<2x128xf32> to vector<1x2x128xf32>
    tpu.vector_store %arg8[%c5_64, %c0_65, %c0_66], %214 {strides = array<i32>} : memref<8x2x128xf32, #tpu.memory_space<vmem>>, vector<1x2x128xf32>,
    %c6 = arith.constant 6 : index
    %c0_67 = arith.constant 0 : index
    %c0_68 = arith.constant 0 : index
    %215 = vector.load %arg0[%c6, %c0_67, %c0_68] : memref<8x2x128xf32, #tpu.memory_space<vmem>>, vector<1x2x128xf32>
    %216 = vector.shape_cast %215 : vector<1x2x128xf32> to vector<2x128xf32>
    %cst_69 = arith.constant dense<0.000000e+00> : vector<2x128xf32>
    %217 = tpu.matmul %208, %0, %cst_69 {dimension_numbers = #tpu.dot_dimension_numbers<[1], [0], [0], [1], [0, 0, 1, 1], [], []>} : vector<2x32xf32>, vector<32x128xf32>, vector<2x128xf32> -> vector<2x128xf32>
    %218 = arith.addf %216, %217 : vector<2x128xf32>
    %219 = vector.extract_strided_slice %218 {offsets = [0, 0], sizes = [2, 32], strides = [1, 1]} : vector<2x128xf32> to vector<2x32xf32>
    %220 = arith.negf %219 : vector<2x32xf32>
    %221 = math.exp %220 : vector<2x32xf32>
    %cst_70 = arith.constant 1.000000e+00 : f32
    %222 = vector.broadcast %cst_70 : f32 to vector<2x32xf32>
    %223 = arith.addf %222, %221 : vector<2x32xf32>
    %224 = arith.divf %222, %223 : vector<2x32xf32>
    %225 = vector.extract_strided_slice %218 {offsets = [0, 32], sizes = [2, 32], strides = [1, 1]} : vector<2x128xf32> to vector<2x32xf32>
    %226 = arith.negf %225 : vector<2x32xf32>
    %227 = math.exp %226 : vector<2x32xf32>
    %cst_71 = arith.constant 1.000000e+00 : f32
    %228 = vector.broadcast %cst_71 : f32 to vector<2x32xf32>
    %229 = arith.addf %228, %227 : vector<2x32xf32>
    %230 = arith.divf %228, %229 : vector<2x32xf32>
    %231 = vector.extract_strided_slice %218 {offsets = [0, 64], sizes = [2, 32], strides = [1, 1]} : vector<2x128xf32> to vector<2x32xf32>
    %232 = math.tanh %231 : vector<2x32xf32>
    %233 = vector.extract_strided_slice %218 {offsets = [0, 96], sizes = [2, 32], strides = [1, 1]} : vector<2x128xf32> to vector<2x32xf32>
    %234 = arith.negf %233 : vector<2x32xf32>
    %235 = math.exp %234 : vector<2x32xf32>
    %cst_72 = arith.constant 1.000000e+00 : f32
    %236 = vector.broadcast %cst_72 : f32 to vector<2x32xf32>
    %237 = arith.addf %236, %235 : vector<2x32xf32>
    %238 = arith.divf %236, %237 : vector<2x32xf32>
    %239 = arith.mulf %230, %206 : vector<2x32xf32>
    %240 = arith.mulf %224, %232 : vector<2x32xf32>
    %241 = arith.addf %239, %240 : vector<2x32xf32>
    %242 = math.tanh %241 : vector<2x32xf32>
    %243 = arith.mulf %238, %242 : vector<2x32xf32>
    %cst_73 = arith.constant dense<0.000000e+00> : vector<2x128xf32>
    %244 = tpu.matmul %243, %1, %cst_73 {dimension_numbers = #tpu.dot_dimension_numbers<[1], [0], [0], [1], [0, 0, 1, 1], [], []>} : vector<2x32xf32>, vector<32x128xf32>, vector<2x128xf32> -> vector<2x128xf32>
    %245 = vector.broadcast %2 : vector<1x128xf32> to vector<2x128xf32>
    %246 = arith.addf %244, %245 : vector<2x128xf32>
    %c6_74 = arith.constant 6 : index
    %c0_75 = arith.constant 0 : index
    %c0_76 = arith.constant 0 : index
    %247 = vector.load %arg8[%c6_74, %c0_75, %c0_76] : memref<8x2x128xf32, #tpu.memory_space<vmem>>, vector<1x2x128xf32>
    %248 = vector.shape_cast %247 : vector<1x2x128xf32> to vector<2x128xf32>
    %249 = vector.shape_cast %246 : vector<2x128xf32> to vector<1x2x128xf32>
    tpu.vector_store %arg8[%c6_74, %c0_75, %c0_76], %249 {strides = array<i32>} : memref<8x2x128xf32, #tpu.memory_space<vmem>>, vector<1x2x128xf32>,
    %c7 = arith.constant 7 : index
    %c0_77 = arith.constant 0 : index
    %c0_78 = arith.constant 0 : index
    %250 = vector.load %arg0[%c7, %c0_77, %c0_78] : memref<8x2x128xf32, #tpu.memory_space<vmem>>, vector<1x2x128xf32>
    %251 = vector.shape_cast %250 : vector<1x2x128xf32> to vector<2x128xf32>
    %cst_79 = arith.constant dense<0.000000e+00> : vector<2x128xf32>
    %252 = tpu.matmul %243, %0, %cst_79 {dimension_numbers = #tpu.dot_dimension_numbers<[1], [0], [0], [1], [0, 0, 1, 1], [], []>} : vector<2x32xf32>, vector<32x128xf32>, vector<2x128xf32> -> vector<2x128xf32>
    %253 = arith.addf %251, %252 : vector<2x128xf32>
    %254 = vector.extract_strided_slice %253 {offsets = [0, 0], sizes = [2, 32], strides = [1, 1]} : vector<2x128xf32> to vector<2x32xf32>
    %255 = arith.negf %254 : vector<2x32xf32>
    %256 = math.exp %255 : vector<2x32xf32>
    %cst_80 = arith.constant 1.000000e+00 : f32
    %257 = vector.broadcast %cst_80 : f32 to vector<2x32xf32>
    %258 = arith.addf %257, %256 : vector<2x32xf32>
    %259 = arith.divf %257, %258 : vector<2x32xf32>
    %260 = vector.extract_strided_slice %253 {offsets = [0, 32], sizes = [2, 32], strides = [1, 1]} : vector<2x128xf32> to vector<2x32xf32>
    %261 = arith.negf %260 : vector<2x32xf32>
    %262 = math.exp %261 : vector<2x32xf32>
    %cst_81 = arith.constant 1.000000e+00 : f32
    %263 = vector.broadcast %cst_81 : f32 to vector<2x32xf32>
    %264 = arith.addf %263, %262 : vector<2x32xf32>
    %265 = arith.divf %263, %264 : vector<2x32xf32>
    %266 = vector.extract_strided_slice %253 {offsets = [0, 64], sizes = [2, 32], strides = [1, 1]} : vector<2x128xf32> to vector<2x32xf32>
    %267 = math.tanh %266 : vector<2x32xf32>
    %268 = vector.extract_strided_slice %253 {offsets = [0, 96], sizes = [2, 32], strides = [1, 1]} : vector<2x128xf32> to vector<2x32xf32>
    %269 = arith.negf %268 : vector<2x32xf32>
    %270 = math.exp %269 : vector<2x32xf32>
    %cst_82 = arith.constant 1.000000e+00 : f32
    %271 = vector.broadcast %cst_82 : f32 to vector<2x32xf32>
    %272 = arith.addf %271, %270 : vector<2x32xf32>
    %273 = arith.divf %271, %272 : vector<2x32xf32>
    %274 = arith.mulf %265, %241 : vector<2x32xf32>
    %275 = arith.mulf %259, %267 : vector<2x32xf32>
    %276 = arith.addf %274, %275 : vector<2x32xf32>
    %277 = math.tanh %276 : vector<2x32xf32>
    %278 = arith.mulf %273, %277 : vector<2x32xf32>
    %cst_83 = arith.constant dense<0.000000e+00> : vector<2x128xf32>
    %279 = tpu.matmul %278, %1, %cst_83 {dimension_numbers = #tpu.dot_dimension_numbers<[1], [0], [0], [1], [0, 0, 1, 1], [], []>} : vector<2x32xf32>, vector<32x128xf32>, vector<2x128xf32> -> vector<2x128xf32>
    %280 = vector.broadcast %2 : vector<1x128xf32> to vector<2x128xf32>
    %281 = arith.addf %279, %280 : vector<2x128xf32>
    %c7_84 = arith.constant 7 : index
    %c0_85 = arith.constant 0 : index
    %c0_86 = arith.constant 0 : index
    %282 = vector.load %arg8[%c7_84, %c0_85, %c0_86] : memref<8x2x128xf32, #tpu.memory_space<vmem>>, vector<1x2x128xf32>
    %283 = vector.shape_cast %282 : vector<1x2x128xf32> to vector<2x128xf32>
    %284 = vector.shape_cast %281 : vector<2x128xf32> to vector<1x2x128xf32>
    tpu.vector_store %arg8[%c7_84, %c0_85, %c0_86], %284 {strides = array<i32>} : memref<8x2x128xf32, #tpu.memory_space<vmem>>, vector<1x2x128xf32>,
    %c0_87 = arith.constant 0 : index
    %c0_88 = arith.constant 0 : index
    %285 = vector.load %arg4[%c0_87, %c0_88] : memref<32x128xf32, #tpu.memory_space<vmem>>, vector<32x128xf32>
    %cst_89 = arith.constant 0.000000e+00 : f32
    %286 = vector.broadcast %cst_89 : f32 to vector<2x32xf32>
    %cst_90 = arith.constant 0.000000e+00 : f32
    %287 = vector.broadcast %cst_90 : f32 to vector<2x32xf32>
    %c0_91 = arith.constant 0 : index
    %c0_92 = arith.constant 0 : index
    %c0_93 = arith.constant 0 : index
    %288 = vector.load %arg8[%c0_91, %c0_92, %c0_93] : memref<8x2x128xf32, #tpu.memory_space<vmem>>, vector<1x2x128xf32>
    %289 = vector.shape_cast %288 : vector<1x2x128xf32> to vector<2x128xf32>
    %cst_94 = arith.constant dense<0.000000e+00> : vector<2x128xf32>
    %290 = tpu.matmul %286, %285, %cst_94 {dimension_numbers = #tpu.dot_dimension_numbers<[1], [0], [0], [1], [0, 0, 1, 1], [], []>} : vector<2x32xf32>, vector<32x128xf32>, vector<2x128xf32> -> vector<2x128xf32>
    %291 = arith.addf %289, %290 : vector<2x128xf32>
    %292 = vector.extract_strided_slice %291 {offsets = [0, 0], sizes = [2, 32], strides = [1, 1]} : vector<2x128xf32> to vector<2x32xf32>
    %293 = arith.negf %292 : vector<2x32xf32>
    %294 = math.exp %293 : vector<2x32xf32>
    %cst_95 = arith.constant 1.000000e+00 : f32
    %295 = vector.broadcast %cst_95 : f32 to vector<2x32xf32>
    %296 = arith.addf %295, %294 : vector<2x32xf32>
    %297 = arith.divf %295, %296 : vector<2x32xf32>
    %298 = vector.extract_strided_slice %291 {offsets = [0, 32], sizes = [2, 32], strides = [1, 1]} : vector<2x128xf32> to vector<2x32xf32>
    %299 = arith.negf %298 : vector<2x32xf32>
    %300 = math.exp %299 : vector<2x32xf32>
    %cst_96 = arith.constant 1.000000e+00 : f32
    %301 = vector.broadcast %cst_96 : f32 to vector<2x32xf32>
    %302 = arith.addf %301, %300 : vector<2x32xf32>
    %303 = arith.divf %301, %302 : vector<2x32xf32>
    %304 = vector.extract_strided_slice %291 {offsets = [0, 64], sizes = [2, 32], strides = [1, 1]} : vector<2x128xf32> to vector<2x32xf32>
    %305 = math.tanh %304 : vector<2x32xf32>
    %306 = vector.extract_strided_slice %291 {offsets = [0, 96], sizes = [2, 32], strides = [1, 1]} : vector<2x128xf32> to vector<2x32xf32>
    %307 = arith.negf %306 : vector<2x32xf32>
    %308 = math.exp %307 : vector<2x32xf32>
    %cst_97 = arith.constant 1.000000e+00 : f32
    %309 = vector.broadcast %cst_97 : f32 to vector<2x32xf32>
    %310 = arith.addf %309, %308 : vector<2x32xf32>
    %311 = arith.divf %309, %310 : vector<2x32xf32>
    %312 = arith.mulf %303, %287 : vector<2x32xf32>
    %313 = arith.mulf %297, %305 : vector<2x32xf32>
    %314 = arith.addf %312, %313 : vector<2x32xf32>
    %315 = math.tanh %314 : vector<2x32xf32>
    %316 = arith.mulf %311, %315 : vector<2x32xf32>
    %c1_98 = arith.constant 1 : index
    %c0_99 = arith.constant 0 : index
    %c0_100 = arith.constant 0 : index
    %317 = vector.load %arg8[%c1_98, %c0_99, %c0_100] : memref<8x2x128xf32, #tpu.memory_space<vmem>>, vector<1x2x128xf32>
    %318 = vector.shape_cast %317 : vector<1x2x128xf32> to vector<2x128xf32>
    %cst_101 = arith.constant dense<0.000000e+00> : vector<2x128xf32>
    %319 = tpu.matmul %316, %285, %cst_101 {dimension_numbers = #tpu.dot_dimension_numbers<[1], [0], [0], [1], [0, 0, 1, 1], [], []>} : vector<2x32xf32>, vector<32x128xf32>, vector<2x128xf32> -> vector<2x128xf32>
    %320 = arith.addf %318, %319 : vector<2x128xf32>
    %321 = vector.extract_strided_slice %320 {offsets = [0, 0], sizes = [2, 32], strides = [1, 1]} : vector<2x128xf32> to vector<2x32xf32>
    %322 = arith.negf %321 : vector<2x32xf32>
    %323 = math.exp %322 : vector<2x32xf32>
    %cst_102 = arith.constant 1.000000e+00 : f32
    %324 = vector.broadcast %cst_102 : f32 to vector<2x32xf32>
    %325 = arith.addf %324, %323 : vector<2x32xf32>
    %326 = arith.divf %324, %325 : vector<2x32xf32>
    %327 = vector.extract_strided_slice %320 {offsets = [0, 32], sizes = [2, 32], strides = [1, 1]} : vector<2x128xf32> to vector<2x32xf32>
    %328 = arith.negf %327 : vector<2x32xf32>
    %329 = math.exp %328 : vector<2x32xf32>
    %cst_103 = arith.constant 1.000000e+00 : f32
    %330 = vector.broadcast %cst_103 : f32 to vector<2x32xf32>
    %331 = arith.addf %330, %329 : vector<2x32xf32>
    %332 = arith.divf %330, %331 : vector<2x32xf32>
    %333 = vector.extract_strided_slice %320 {offsets = [0, 64], sizes = [2, 32], strides = [1, 1]} : vector<2x128xf32> to vector<2x32xf32>
    %334 = math.tanh %333 : vector<2x32xf32>
    %335 = vector.extract_strided_slice %320 {offsets = [0, 96], sizes = [2, 32], strides = [1, 1]} : vector<2x128xf32> to vector<2x32xf32>
    %336 = arith.negf %335 : vector<2x32xf32>
    %337 = math.exp %336 : vector<2x32xf32>
    %cst_104 = arith.constant 1.000000e+00 : f32
    %338 = vector.broadcast %cst_104 : f32 to vector<2x32xf32>
    %339 = arith.addf %338, %337 : vector<2x32xf32>
    %340 = arith.divf %338, %339 : vector<2x32xf32>
    %341 = arith.mulf %332, %314 : vector<2x32xf32>
    %342 = arith.mulf %326, %334 : vector<2x32xf32>
    %343 = arith.addf %341, %342 : vector<2x32xf32>
    %344 = math.tanh %343 : vector<2x32xf32>
    %345 = arith.mulf %340, %344 : vector<2x32xf32>
    %c2_105 = arith.constant 2 : index
    %c0_106 = arith.constant 0 : index
    %c0_107 = arith.constant 0 : index
    %346 = vector.load %arg8[%c2_105, %c0_106, %c0_107] : memref<8x2x128xf32, #tpu.memory_space<vmem>>, vector<1x2x128xf32>
    %347 = vector.shape_cast %346 : vector<1x2x128xf32> to vector<2x128xf32>
    %cst_108 = arith.constant dense<0.000000e+00> : vector<2x128xf32>
    %348 = tpu.matmul %345, %285, %cst_108 {dimension_numbers = #tpu.dot_dimension_numbers<[1], [0], [0], [1], [0, 0, 1, 1], [], []>} : vector<2x32xf32>, vector<32x128xf32>, vector<2x128xf32> -> vector<2x128xf32>
    %349 = arith.addf %347, %348 : vector<2x128xf32>
    %350 = vector.extract_strided_slice %349 {offsets = [0, 0], sizes = [2, 32], strides = [1, 1]} : vector<2x128xf32> to vector<2x32xf32>
    %351 = arith.negf %350 : vector<2x32xf32>
    %352 = math.exp %351 : vector<2x32xf32>
    %cst_109 = arith.constant 1.000000e+00 : f32
    %353 = vector.broadcast %cst_109 : f32 to vector<2x32xf32>
    %354 = arith.addf %353, %352 : vector<2x32xf32>
    %355 = arith.divf %353, %354 : vector<2x32xf32>
    %356 = vector.extract_strided_slice %349 {offsets = [0, 32], sizes = [2, 32], strides = [1, 1]} : vector<2x128xf32> to vector<2x32xf32>
    %357 = arith.negf %356 : vector<2x32xf32>
    %358 = math.exp %357 : vector<2x32xf32>
    %cst_110 = arith.constant 1.000000e+00 : f32
    %359 = vector.broadcast %cst_110 : f32 to vector<2x32xf32>
    %360 = arith.addf %359, %358 : vector<2x32xf32>
    %361 = arith.divf %359, %360 : vector<2x32xf32>
    %362 = vector.extract_strided_slice %349 {offsets = [0, 64], sizes = [2, 32], strides = [1, 1]} : vector<2x128xf32> to vector<2x32xf32>
    %363 = math.tanh %362 : vector<2x32xf32>
    %364 = vector.extract_strided_slice %349 {offsets = [0, 96], sizes = [2, 32], strides = [1, 1]} : vector<2x128xf32> to vector<2x32xf32>
    %365 = arith.negf %364 : vector<2x32xf32>
    %366 = math.exp %365 : vector<2x32xf32>
    %cst_111 = arith.constant 1.000000e+00 : f32
    %367 = vector.broadcast %cst_111 : f32 to vector<2x32xf32>
    %368 = arith.addf %367, %366 : vector<2x32xf32>
    %369 = arith.divf %367, %368 : vector<2x32xf32>
    %370 = arith.mulf %361, %343 : vector<2x32xf32>
    %371 = arith.mulf %355, %363 : vector<2x32xf32>
    %372 = arith.addf %370, %371 : vector<2x32xf32>
    %373 = math.tanh %372 : vector<2x32xf32>
    %374 = arith.mulf %369, %373 : vector<2x32xf32>
    %c3_112 = arith.constant 3 : index
    %c0_113 = arith.constant 0 : index
    %c0_114 = arith.constant 0 : index
    %375 = vector.load %arg8[%c3_112, %c0_113, %c0_114] : memref<8x2x128xf32, #tpu.memory_space<vmem>>, vector<1x2x128xf32>
    %376 = vector.shape_cast %375 : vector<1x2x128xf32> to vector<2x128xf32>
    %cst_115 = arith.constant dense<0.000000e+00> : vector<2x128xf32>
    %377 = tpu.matmul %374, %285, %cst_115 {dimension_numbers = #tpu.dot_dimension_numbers<[1], [0], [0], [1], [0, 0, 1, 1], [], []>} : vector<2x32xf32>, vector<32x128xf32>, vector<2x128xf32> -> vector<2x128xf32>
    %378 = arith.addf %376, %377 : vector<2x128xf32>
    %379 = vector.extract_strided_slice %378 {offsets = [0, 0], sizes = [2, 32], strides = [1, 1]} : vector<2x128xf32> to vector<2x32xf32>
    %380 = arith.negf %379 : vector<2x32xf32>
    %381 = math.exp %380 : vector<2x32xf32>
    %cst_116 = arith.constant 1.000000e+00 : f32
    %382 = vector.broadcast %cst_116 : f32 to vector<2x32xf32>
    %383 = arith.addf %382, %381 : vector<2x32xf32>
    %384 = arith.divf %382, %383 : vector<2x32xf32>
    %385 = vector.extract_strided_slice %378 {offsets = [0, 32], sizes = [2, 32], strides = [1, 1]} : vector<2x128xf32> to vector<2x32xf32>
    %386 = arith.negf %385 : vector<2x32xf32>
    %387 = math.exp %386 : vector<2x32xf32>
    %cst_117 = arith.constant 1.000000e+00 : f32
    %388 = vector.broadcast %cst_117 : f32 to vector<2x32xf32>
    %389 = arith.addf %388, %387 : vector<2x32xf32>
    %390 = arith.divf %388, %389 : vector<2x32xf32>
    %391 = vector.extract_strided_slice %378 {offsets = [0, 64], sizes = [2, 32], strides = [1, 1]} : vector<2x128xf32> to vector<2x32xf32>
    %392 = math.tanh %391 : vector<2x32xf32>
    %393 = vector.extract_strided_slice %378 {offsets = [0, 96], sizes = [2, 32], strides = [1, 1]} : vector<2x128xf32> to vector<2x32xf32>
    %394 = arith.negf %393 : vector<2x32xf32>
    %395 = math.exp %394 : vector<2x32xf32>
    %cst_118 = arith.constant 1.000000e+00 : f32
    %396 = vector.broadcast %cst_118 : f32 to vector<2x32xf32>
    %397 = arith.addf %396, %395 : vector<2x32xf32>
    %398 = arith.divf %396, %397 : vector<2x32xf32>
    %399 = arith.mulf %390, %372 : vector<2x32xf32>
    %400 = arith.mulf %384, %392 : vector<2x32xf32>
    %401 = arith.addf %399, %400 : vector<2x32xf32>
    %402 = math.tanh %401 : vector<2x32xf32>
    %403 = arith.mulf %398, %402 : vector<2x32xf32>
    %c4_119 = arith.constant 4 : index
    %c0_120 = arith.constant 0 : index
    %c0_121 = arith.constant 0 : index
    %404 = vector.load %arg8[%c4_119, %c0_120, %c0_121] : memref<8x2x128xf32, #tpu.memory_space<vmem>>, vector<1x2x128xf32>
    %405 = vector.shape_cast %404 : vector<1x2x128xf32> to vector<2x128xf32>
    %cst_122 = arith.constant dense<0.000000e+00> : vector<2x128xf32>
    %406 = tpu.matmul %403, %285, %cst_122 {dimension_numbers = #tpu.dot_dimension_numbers<[1], [0], [0], [1], [0, 0, 1, 1], [], []>} : vector<2x32xf32>, vector<32x128xf32>, vector<2x128xf32> -> vector<2x128xf32>
    %407 = arith.addf %405, %406 : vector<2x128xf32>
    %408 = vector.extract_strided_slice %407 {offsets = [0, 0], sizes = [2, 32], strides = [1, 1]} : vector<2x128xf32> to vector<2x32xf32>
    %409 = arith.negf %408 : vector<2x32xf32>
    %410 = math.exp %409 : vector<2x32xf32>
    %cst_123 = arith.constant 1.000000e+00 : f32
    %411 = vector.broadcast %cst_123 : f32 to vector<2x32xf32>
    %412 = arith.addf %411, %410 : vector<2x32xf32>
    %413 = arith.divf %411, %412 : vector<2x32xf32>
    %414 = vector.extract_strided_slice %407 {offsets = [0, 32], sizes = [2, 32], strides = [1, 1]} : vector<2x128xf32> to vector<2x32xf32>
    %415 = arith.negf %414 : vector<2x32xf32>
    %416 = math.exp %415 : vector<2x32xf32>
    %cst_124 = arith.constant 1.000000e+00 : f32
    %417 = vector.broadcast %cst_124 : f32 to vector<2x32xf32>
    %418 = arith.addf %417, %416 : vector<2x32xf32>
    %419 = arith.divf %417, %418 : vector<2x32xf32>
    %420 = vector.extract_strided_slice %407 {offsets = [0, 64], sizes = [2, 32], strides = [1, 1]} : vector<2x128xf32> to vector<2x32xf32>
    %421 = math.tanh %420 : vector<2x32xf32>
    %422 = vector.extract_strided_slice %407 {offsets = [0, 96], sizes = [2, 32], strides = [1, 1]} : vector<2x128xf32> to vector<2x32xf32>
    %423 = arith.negf %422 : vector<2x32xf32>
    %424 = math.exp %423 : vector<2x32xf32>
    %cst_125 = arith.constant 1.000000e+00 : f32
    %425 = vector.broadcast %cst_125 : f32 to vector<2x32xf32>
    %426 = arith.addf %425, %424 : vector<2x32xf32>
    %427 = arith.divf %425, %426 : vector<2x32xf32>
    %428 = arith.mulf %419, %401 : vector<2x32xf32>
    %429 = arith.mulf %413, %421 : vector<2x32xf32>
    %430 = arith.addf %428, %429 : vector<2x32xf32>
    %431 = math.tanh %430 : vector<2x32xf32>
    %432 = arith.mulf %427, %431 : vector<2x32xf32>
    %c5_126 = arith.constant 5 : index
    %c0_127 = arith.constant 0 : index
    %c0_128 = arith.constant 0 : index
    %433 = vector.load %arg8[%c5_126, %c0_127, %c0_128] : memref<8x2x128xf32, #tpu.memory_space<vmem>>, vector<1x2x128xf32>
    %434 = vector.shape_cast %433 : vector<1x2x128xf32> to vector<2x128xf32>
    %cst_129 = arith.constant dense<0.000000e+00> : vector<2x128xf32>
    %435 = tpu.matmul %432, %285, %cst_129 {dimension_numbers = #tpu.dot_dimension_numbers<[1], [0], [0], [1], [0, 0, 1, 1], [], []>} : vector<2x32xf32>, vector<32x128xf32>, vector<2x128xf32> -> vector<2x128xf32>
    %436 = arith.addf %434, %435 : vector<2x128xf32>
    %437 = vector.extract_strided_slice %436 {offsets = [0, 0], sizes = [2, 32], strides = [1, 1]} : vector<2x128xf32> to vector<2x32xf32>
    %438 = arith.negf %437 : vector<2x32xf32>
    %439 = math.exp %438 : vector<2x32xf32>
    %cst_130 = arith.constant 1.000000e+00 : f32
    %440 = vector.broadcast %cst_130 : f32 to vector<2x32xf32>
    %441 = arith.addf %440, %439 : vector<2x32xf32>
    %442 = arith.divf %440, %441 : vector<2x32xf32>
    %443 = vector.extract_strided_slice %436 {offsets = [0, 32], sizes = [2, 32], strides = [1, 1]} : vector<2x128xf32> to vector<2x32xf32>
    %444 = arith.negf %443 : vector<2x32xf32>
    %445 = math.exp %444 : vector<2x32xf32>
    %cst_131 = arith.constant 1.000000e+00 : f32
    %446 = vector.broadcast %cst_131 : f32 to vector<2x32xf32>
    %447 = arith.addf %446, %445 : vector<2x32xf32>
    %448 = arith.divf %446, %447 : vector<2x32xf32>
    %449 = vector.extract_strided_slice %436 {offsets = [0, 64], sizes = [2, 32], strides = [1, 1]} : vector<2x128xf32> to vector<2x32xf32>
    %450 = math.tanh %449 : vector<2x32xf32>
    %451 = vector.extract_strided_slice %436 {offsets = [0, 96], sizes = [2, 32], strides = [1, 1]} : vector<2x128xf32> to vector<2x32xf32>
    %452 = arith.negf %451 : vector<2x32xf32>
    %453 = math.exp %452 : vector<2x32xf32>
    %cst_132 = arith.constant 1.000000e+00 : f32
    %454 = vector.broadcast %cst_132 : f32 to vector<2x32xf32>
    %455 = arith.addf %454, %453 : vector<2x32xf32>
    %456 = arith.divf %454, %455 : vector<2x32xf32>
    %457 = arith.mulf %448, %430 : vector<2x32xf32>
    %458 = arith.mulf %442, %450 : vector<2x32xf32>
    %459 = arith.addf %457, %458 : vector<2x32xf32>
    %460 = math.tanh %459 : vector<2x32xf32>
    %461 = arith.mulf %456, %460 : vector<2x32xf32>
    %c6_133 = arith.constant 6 : index
    %c0_134 = arith.constant 0 : index
    %c0_135 = arith.constant 0 : index
    %462 = vector.load %arg8[%c6_133, %c0_134, %c0_135] : memref<8x2x128xf32, #tpu.memory_space<vmem>>, vector<1x2x128xf32>
    %463 = vector.shape_cast %462 : vector<1x2x128xf32> to vector<2x128xf32>
    %cst_136 = arith.constant dense<0.000000e+00> : vector<2x128xf32>
    %464 = tpu.matmul %461, %285, %cst_136 {dimension_numbers = #tpu.dot_dimension_numbers<[1], [0], [0], [1], [0, 0, 1, 1], [], []>} : vector<2x32xf32>, vector<32x128xf32>, vector<2x128xf32> -> vector<2x128xf32>
    %465 = arith.addf %463, %464 : vector<2x128xf32>
    %466 = vector.extract_strided_slice %465 {offsets = [0, 0], sizes = [2, 32], strides = [1, 1]} : vector<2x128xf32> to vector<2x32xf32>
    %467 = arith.negf %466 : vector<2x32xf32>
    %468 = math.exp %467 : vector<2x32xf32>
    %cst_137 = arith.constant 1.000000e+00 : f32
    %469 = vector.broadcast %cst_137 : f32 to vector<2x32xf32>
    %470 = arith.addf %469, %468 : vector<2x32xf32>
    %471 = arith.divf %469, %470 : vector<2x32xf32>
    %472 = vector.extract_strided_slice %465 {offsets = [0, 32], sizes = [2, 32], strides = [1, 1]} : vector<2x128xf32> to vector<2x32xf32>
    %473 = arith.negf %472 : vector<2x32xf32>
    %474 = math.exp %473 : vector<2x32xf32>
    %cst_138 = arith.constant 1.000000e+00 : f32
    %475 = vector.broadcast %cst_138 : f32 to vector<2x32xf32>
    %476 = arith.addf %475, %474 : vector<2x32xf32>
    %477 = arith.divf %475, %476 : vector<2x32xf32>
    %478 = vector.extract_strided_slice %465 {offsets = [0, 64], sizes = [2, 32], strides = [1, 1]} : vector<2x128xf32> to vector<2x32xf32>
    %479 = math.tanh %478 : vector<2x32xf32>
    %480 = vector.extract_strided_slice %465 {offsets = [0, 96], sizes = [2, 32], strides = [1, 1]} : vector<2x128xf32> to vector<2x32xf32>
    %481 = arith.negf %480 : vector<2x32xf32>
    %482 = math.exp %481 : vector<2x32xf32>
    %cst_139 = arith.constant 1.000000e+00 : f32
    %483 = vector.broadcast %cst_139 : f32 to vector<2x32xf32>
    %484 = arith.addf %483, %482 : vector<2x32xf32>
    %485 = arith.divf %483, %484 : vector<2x32xf32>
    %486 = arith.mulf %477, %459 : vector<2x32xf32>
    %487 = arith.mulf %471, %479 : vector<2x32xf32>
    %488 = arith.addf %486, %487 : vector<2x32xf32>
    %489 = math.tanh %488 : vector<2x32xf32>
    %490 = arith.mulf %485, %489 : vector<2x32xf32>
    %c7_140 = arith.constant 7 : index
    %c0_141 = arith.constant 0 : index
    %c0_142 = arith.constant 0 : index
    %491 = vector.load %arg8[%c7_140, %c0_141, %c0_142] : memref<8x2x128xf32, #tpu.memory_space<vmem>>, vector<1x2x128xf32>
    %492 = vector.shape_cast %491 : vector<1x2x128xf32> to vector<2x128xf32>
    %cst_143 = arith.constant dense<0.000000e+00> : vector<2x128xf32>
    %493 = tpu.matmul %490, %285, %cst_143 {dimension_numbers = #tpu.dot_dimension_numbers<[1], [0], [0], [1], [0, 0, 1, 1], [], []>} : vector<2x32xf32>, vector<32x128xf32>, vector<2x128xf32> -> vector<2x128xf32>
    %494 = arith.addf %492, %493 : vector<2x128xf32>
    %495 = vector.extract_strided_slice %494 {offsets = [0, 0], sizes = [2, 32], strides = [1, 1]} : vector<2x128xf32> to vector<2x32xf32>
    %496 = arith.negf %495 : vector<2x32xf32>
    %497 = math.exp %496 : vector<2x32xf32>
    %cst_144 = arith.constant 1.000000e+00 : f32
    %498 = vector.broadcast %cst_144 : f32 to vector<2x32xf32>
    %499 = arith.addf %498, %497 : vector<2x32xf32>
    %500 = arith.divf %498, %499 : vector<2x32xf32>
    %501 = vector.extract_strided_slice %494 {offsets = [0, 32], sizes = [2, 32], strides = [1, 1]} : vector<2x128xf32> to vector<2x32xf32>
    %502 = arith.negf %501 : vector<2x32xf32>
    %503 = math.exp %502 : vector<2x32xf32>
    %cst_145 = arith.constant 1.000000e+00 : f32
    %504 = vector.broadcast %cst_145 : f32 to vector<2x32xf32>
    %505 = arith.addf %504, %503 : vector<2x32xf32>
    %506 = arith.divf %504, %505 : vector<2x32xf32>
    %507 = vector.extract_strided_slice %494 {offsets = [0, 64], sizes = [2, 32], strides = [1, 1]} : vector<2x128xf32> to vector<2x32xf32>
    %508 = math.tanh %507 : vector<2x32xf32>
    %509 = vector.extract_strided_slice %494 {offsets = [0, 96], sizes = [2, 32], strides = [1, 1]} : vector<2x128xf32> to vector<2x32xf32>
    %510 = arith.negf %509 : vector<2x32xf32>
    %511 = math.exp %510 : vector<2x32xf32>
    %cst_146 = arith.constant 1.000000e+00 : f32
    %512 = vector.broadcast %cst_146 : f32 to vector<2x32xf32>
    %513 = arith.addf %512, %511 : vector<2x32xf32>
    %514 = arith.divf %512, %513 : vector<2x32xf32>
    %515 = arith.mulf %506, %488 : vector<2x32xf32>
    %516 = arith.mulf %500, %508 : vector<2x32xf32>
    %517 = arith.addf %515, %516 : vector<2x32xf32>
    %518 = math.tanh %517 : vector<2x32xf32>
    %519 = arith.mulf %514, %518 : vector<2x32xf32>
    %c0_147 = arith.constant 0 : index
    %c0_148 = arith.constant 0 : index
    %520 = vector.load %arg5[%c0_147, %c0_148] : memref<32x4xf32, #tpu.memory_space<vmem>>, vector<32x4xf32>
    %cst_149 = arith.constant dense<0.000000e+00> : vector<2x4xf32>
    %521 = tpu.matmul %519, %520, %cst_149 {dimension_numbers = #tpu.dot_dimension_numbers<[1], [0], [0], [1], [0, 0, 1, 1], [], []>} : vector<2x32xf32>, vector<32x4xf32>, vector<2x4xf32> -> vector<2x4xf32>
    %c0_150 = arith.constant 0 : index
    %c0_151 = arith.constant 0 : index
    %522 = vector.load %arg6[%c0_150, %c0_151] : memref<1x4xf32, #tpu.memory_space<vmem>>, vector<1x4xf32>
    %523 = vector.broadcast %522 : vector<1x4xf32> to vector<2x4xf32>
    %524 = arith.addf %521, %523 : vector<2x4xf32>
    %525 = arith.negf %524 : vector<2x4xf32>
    %526 = math.exp %525 : vector<2x4xf32>
    %cst_152 = arith.constant 1.000000e+00 : f32
    %527 = vector.broadcast %cst_152 : f32 to vector<2x4xf32>
    %528 = arith.addf %527, %526 : vector<2x4xf32>
    %529 = arith.divf %527, %528 : vector<2x4xf32>
    %c0_153 = arith.constant 0 : index
    %c0_154 = arith.constant 0 : index
    %530 = vector.load %arg7[%c0_153, %c0_154] : memref<2x4xf32, #tpu.memory_space<vmem>>, vector<2x4xf32>
    tpu.vector_store %arg7[%c0_153, %c0_154], %529 {strides = array<i32>} : memref<2x4xf32, #tpu.memory_space<vmem>>, vector<2x4xf32>,
    return
  }
}

</mosaic_0001>

<llo_original>
// kernel: rnn_forward.1
$region0: #{rnn_forward.1}
  #allocation0 [shape = 'u32[]', space=smem, size = 0x4, offset = 0x4, fixed_abs, tag = 'smem constant byte address 0x4 - core index']
  #allocation1 [shape = 'u32[144,128]{1,0:T(1,128)}', space=vmem, size = 0x12000, scoped, tag = 'internal scratch']
  #allocation2 [shape = 'f32[8,2,128]{2,1,0:T(2,128)}', space=vmem, size = 0x2000, scoped, tag = 'scratch operand']
  %s0 = inlined_call_operand.vmem [shape: f32[8,2,128], index: 0, kind: input, shape index: {}]
  %s1 = inlined_call_operand.vmem [shape: f32[32,128], index: 1, kind: input, shape index: {}]
  %s2 = inlined_call_operand.vmem [shape: f32[32,128], index: 2, kind: input, shape index: {}]
  %s3 = inlined_call_operand.vmem [shape: f32[1,128], index: 3, kind: input, shape index: {}]
  %s4 = inlined_call_operand.vmem [shape: f32[32,128], index: 4, kind: input, shape index: {}]
  %s5 = inlined_call_operand.vmem [shape: f32[32,4], index: 5, kind: input, shape index: {}]
  %s6 = inlined_call_operand.vmem [shape: f32[1,4], index: 6, kind: input, shape index: {}]
  %s7 = inlined_call_operand.hbm [shape: f32[2,4], index: 7, kind: output, shape index: {}]
  %s8 = sld [smem:[#allocation0]]
  $region38: #{rnn_forward.1} parent=0
    _
  %s10 = ssub.s32 1, %s8
  %s11 = scalar_select 0, %s10, %s8
  $region1: #{rnn_forward.1} parent=0
    #allocation3 [shape = 'u8[1024]{0}', space=vmem, size = 0x400, scoped, tag = 'output window, operand 0, single buffered']
    #allocation4 [shape = 's32[1]{0}', space=sflag, size = 0x4, scoped, tag = 'scoped memory for rnn_forward.1']
    %12 = vsyncpa [#allocation4], 0
    // Predicated region
    $region2: #{rnn_forward.1} parent=1 // pred_check
      _
    $region3: #{rnn_forward.1} parent=1 // pred_check_branch
      %14 = sbr.rel (0) target = $region5
    $region4: #{rnn_forward.1} parent=1 // pred_region
      _
    $region5: #{rnn_forward.1} parent=1 // pred_fallthru
      _
    // Predicated region
    $region6: #{rnn_forward.1} parent=1 // pred_check
      _
    $region7: #{rnn_forward.1} parent=1 // pred_check_branch
      %16 = sbr.rel (0) target = $region9
    $region8: #{rnn_forward.1} parent=1 // pred_region
      _
    $region9: #{rnn_forward.1} parent=1 // pred_fallthru
      _
    // Predicated region
    $region10: #{rnn_forward.1} parent=1 // pred_check
      _
    $region11: #{rnn_forward.1} parent=1 // pred_check_branch
      %18 = sbr.rel (0) target = $region13
    $region12: #{rnn_forward.1} parent=1 // pred_region
      _
    $region13: #{rnn_forward.1} parent=1 // pred_fallthru
      _
    // Predicated region
    $region14: #{rnn_forward.1} parent=1 // pred_check
      _
    $region15: #{rnn_forward.1} parent=1 // pred_check_branch
      %20 = sbr.rel (0) target = $region17
    $region16: #{rnn_forward.1} parent=1 // pred_region
      _
    $region17: #{rnn_forward.1} parent=1 // pred_fallthru
      _
    // Predicated region
    $region18: #{rnn_forward.1} parent=1 // pred_check
      _
    $region19: #{rnn_forward.1} parent=1 // pred_check_branch
      %22 = sbr.rel (0) target = $region21
    $region20: #{rnn_forward.1} parent=1 // pred_region
      _
    $region21: #{rnn_forward.1} parent=1 // pred_fallthru
      _
    // Predicated region
    $region22: #{rnn_forward.1} parent=1 // pred_check
      _
    $region23: #{rnn_forward.1} parent=1 // pred_check_branch
      %24 = sbr.rel (0) target = $region25
    $region24: #{rnn_forward.1} parent=1 // pred_region
      _
    $region25: #{rnn_forward.1} parent=1 // pred_fallthru
      _
    // Predicated region
    $region26: #{rnn_forward.1} parent=1 // pred_check
      _
    $region27: #{rnn_forward.1} parent=1 // pred_check_branch
      %26 = sbr.rel (0) target = $region29
    $region28: #{rnn_forward.1} parent=1 // pred_region
      _
    $region29: #{rnn_forward.1} parent=1 // pred_fallthru
      _
    %v27 = vld [vmem:[%s1] sm:$0xff]
    %v28 = vld [vmem:[%s1 + $0x8] sm:$0xff]
    %v29 = vld [vmem:[%s1 + $0x10] sm:$0xff]
    %v30 = vld [vmem:[%s1 + $0x18] sm:$0xff]
    %v31 = vld [vmem:[%s2] sm:$0xff]
    %v32 = vld [vmem:[%s2 + $0x8] sm:$0xff]
    %v33 = vld [vmem:[%s2 + $0x10] sm:$0xff]
    %v34 = vld [vmem:[%s2 + $0x18] sm:$0xff]
    %v35 = vld [vmem:[%s3] sm:$0x1]
    %v36 = vld [vmem:[%s0] sm:$0x3]
    %vm37 = vcmask 261120
    %v39 = vsel %vm37, 0.0, 0
    %41 = vmatprep.subr.mxu0 0.0
    %42 = vmatpush1.msra.mxu0 %v27
    %43 = vmatprep.subr.mxu0 0.0
    %44 = vmatpush1.msra.mxu0 %v28
    %45 = vmatprep.subr.mxu0 0.0
    %46 = vmatpush1.msra.mxu0 %v29
    %47 = vmatprep.subr.mxu0 0.0
    %48 = vmatpush1.msra.mxu0 %v30
    %49 = vmatprep.subr.mxu0 0.0
    %50 = vmatpush1.msra.mxu0 0.0
    %51 = vmatprep.subr.mxu0 0.0
    %52 = vmatpush1.msra.mxu0 0.0
    %53 = vmatprep.subr.mxu0 0.0
    %54 = vmatpush1.msra.mxu0 0.0
    %55 = vmatprep.subr.mxu0 0.0
    %56 = vmatpush1.msra.mxu0 0.0
    %57 = vmatprep.subr.mxu0 0.0
    %58 = vmatpush1.msra.mxu0 0.0
    %59 = vmatprep.subr.mxu0 0.0
    %60 = vmatpush1.msra.mxu0 0.0
    %61 = vmatprep.subr.mxu0 0.0
    %62 = vmatpush1.msra.mxu0 0.0
    %63 = vmatprep.subr.mxu0 0.0
    %64 = vmatpush1.msra.mxu0 0.0
    %65 = vmatprep.subr.mxu0 0.0
    %66 = vmatpush1.msra.mxu0 0.0
    %67 = vmatprep.subr.mxu0 0.0
    %68 = vmatpush1.msra.mxu0 0.0
    %69 = vmatprep.subr.mxu0 0.0
    %70 = vmatpush1.msra.mxu0 0.0
    %71 = vmatprep.subr.mxu0 0.0
    %72 = vmatpush1.msra.mxu0 0.0
    %73 = vmatprep.subr.mxu0 0.0
    %74 = vmatpush1.msra.mxu0 0.0
    %75 = vmatprep.subr.mxu0 0.0
    %76 = vmatpush1.msra.mxu0 0.0
    %77 = vmatprep.subr.mxu0 0.0
    %78 = vmatpush1.msra.mxu0 0.0
    %79 = vmatprep.subr.mxu0 0.0
    %80 = vmatpush1.msra.mxu0 0.0
    %81 = vmatprep.subr.mxu0 0.0
    %82 = vmatpush1.msra.mxu0 0.0
    %83 = vmatprep.subr.mxu0 0.0
    %84 = vmatpush1.msra.mxu0 0.0
    %85 = vmatprep.subr.mxu0 0.0
    %86 = vmatpush1.msra.mxu0 0.0
    %87 = vmatprep.subr.mxu0 0.0
    %88 = vmatpush1.msra.mxu0 0.0
    %89 = vmatprep.subr.mxu0 0.0
    %90 = vmatpush1.msra.mxu0 0.0
    %91 = vmatprep.subr.mxu0 0.0
    %92 = vmatpush1.msra.mxu0 0.0
    %93 = vmatprep.subr.mxu0 0.0
    %94 = vmatpush1.msra.mxu0 0.0
    %95 = vmatprep.subr.mxu0 0.0
    %96 = vmatpush1.msra.mxu0 0.0
    %97 = vmatprep.subr.mxu0 0.0
    %98 = vmatpush1.msra.mxu0 0.0
    %99 = vmatprep.subr.mxu0 0.0
    %100 = vmatpush1.msra.mxu0 0.0
    %101 = vmatprep.subr.mxu0 0.0
    %102 = vmatpush1.msra.mxu0 0.0
    %103 = vmatprep.subr.mxu0 0.0
    %104 = vmatpush1.msra.mxu0 0.0
    %105 = vmatprep.mubr.f32.mxu0 0.0
    %106 = vmatmul.mubr.f32.gmra.mrb[0].mxu0 %v39
    %v107 = vpop.f32.mrb[0].mxu0
    %v108 = vadd.f32 0.0, %v107
    %v109 = vpop.f32.mrb[0].mxu0
    %110 = vdwg.mxu0
    %v111 = vadd.f32 %v36, %v108
    %v112 = vxor.u32 %v111, 2147483648
    %v113 = vmul.f32 %v112, 1.442695
    %v114 = vpow.pop %v113
    %v115 = vadd.f32 %v114, 1.0
    %v116 = vrcp.pop %v115
    %v117 = vmul.f32 1.0, %v116
    %v118 = vtanh.pop %v111
    %v119 = vmul.f32 %v117, 0.0
    %121 = vrot.lane.b32.xlu0 %v118, 64
    %v122 = vpop.permute.xlu0 %121
    %v124 = vmul.f32 %v117, %v122
    %126 = vrot.lane.b32.xlu0 %v124, 32
    %v127 = vpop.permute.xlu0 %126
    %v129 = vadd.f32 %v119, %v127
    %v130 = vtanh.pop %v129
    %132 = vrot.lane.b32.xlu0 %v130, 64
    %v133 = vpop.permute.xlu0 %132
    %v135 = vmul.f32 %v117, %v133
    %v137 = vlaneseq
    %v138 = vshrl.u32 %v137, 7
    %v139 = vsub.s32 0, %v138
    %v140 = vrot.slane %v35, %v139
    %143 = vrot.lane.b32.xlu0 %v135, 32
    %v144 = vpop.permute.xlu0 %143
    %v145 = vsel %vm37, %v144, 0
    %147 = vmatprep.subr.mxu0 0.0
    %148 = vmatpush1.msra.mxu0 %v31
    %149 = vmatprep.subr.mxu0 0.0
    %150 = vmatpush1.msra.mxu0 %v32
    %151 = vmatprep.subr.mxu0 0.0
    %152 = vmatpush1.msra.mxu0 %v33
    %153 = vmatprep.subr.mxu0 0.0
    %154 = vmatpush1.msra.mxu0 %v34
    %155 = vmatprep.subr.mxu0 0.0
    %156 = vmatpush1.msra.mxu0 0.0
    %157 = vmatprep.subr.mxu0 0.0
    %158 = vmatpush1.msra.mxu0 0.0
    %159 = vmatprep.subr.mxu0 0.0
    %160 = vmatpush1.msra.mxu0 0.0
    %161 = vmatprep.subr.mxu0 0.0
    %162 = vmatpush1.msra.mxu0 0.0
    %163 = vmatprep.subr.mxu0 0.0
    %164 = vmatpush1.msra.mxu0 0.0
    %165 = vmatprep.subr.mxu0 0.0
    %166 = vmatpush1.msra.mxu0 0.0
    %167 = vmatprep.subr.mxu0 0.0
    %168 = vmatpush1.msra.mxu0 0.0
    %169 = vmatprep.subr.mxu0 0.0
    %170 = vmatpush1.msra.mxu0 0.0
    %171 = vmatprep.subr.mxu0 0.0
    %172 = vmatpush1.msra.mxu0 0.0
    %173 = vmatprep.subr.mxu0 0.0
    %174 = vmatpush1.msra.mxu0 0.0
    %175 = vmatprep.subr.mxu0 0.0
    %176 = vmatpush1.msra.mxu0 0.0
    %177 = vmatprep.subr.mxu0 0.0
    %178 = vmatpush1.msra.mxu0 0.0
    %179 = vmatprep.subr.mxu0 0.0
    %180 = vmatpush1.msra.mxu0 0.0
    %181 = vmatprep.subr.mxu0 0.0
    %182 = vmatpush1.msra.mxu0 0.0
    %183 = vmatprep.subr.mxu0 0.0
    %184 = vmatpush1.msra.mxu0 0.0
    %185 = vmatprep.subr.mxu0 0.0
    %186 = vmatpush1.msra.mxu0 0.0
    %187 = vmatprep.subr.mxu0 0.0
    %188 = vmatpush1.msra.mxu0 0.0
    %189 = vmatprep.subr.mxu0 0.0
    %190 = vmatpush1.msra.mxu0 0.0
    %191 = vmatprep.subr.mxu0 0.0
    %192 = vmatpush1.msra.mxu0 0.0
    %193 = vmatprep.subr.mxu0 0.0
    %194 = vmatpush1.msra.mxu0 0.0
    %195 = vmatprep.subr.mxu0 0.0
    %196 = vmatpush1.msra.mxu0 0.0
    %197 = vmatprep.subr.mxu0 0.0
    %198 = vmatpush1.msra.mxu0 0.0
    %199 = vmatprep.subr.mxu0 0.0
    %200 = vmatpush1.msra.mxu0 0.0
    %201 = vmatprep.subr.mxu0 0.0
    %202 = vmatpush1.msra.mxu0 0.0
    %203 = vmatprep.subr.mxu0 0.0
    %204 = vmatpush1.msra.mxu0 0.0
    %205 = vmatprep.subr.mxu0 0.0
    %206 = vmatpush1.msra.mxu0 0.0
    %207 = vmatprep.subr.mxu0 0.0
    %208 = vmatpush1.msra.mxu0 0.0
    %209 = vmatprep.subr.mxu0 0.0
    %210 = vmatpush1.msra.mxu0 0.0
    %211 = vmatprep.mubr.f32.mxu0 0.0
    %212 = vmatmul.mubr.f32.gmra.mrb[0].mxu0 %v145
    %v213 = vpop.f32.mrb[0].mxu0
    %v214 = vadd.f32 %v140, %v213
    %v215 = vpop.f32.mrb[0].mxu0
    %216 = vdwg.mxu0
    %217 = vst [vmem:[#allocation2] sm:$0x3] %v214
    %s218 = scalar_lea.vmem %s0, 2
    %v219 = vld [vmem:[%s218] sm:$0x3]
    %220 = vmatprep.subr.mxu0 0.0
    %221 = vmatpush1.msra.mxu0 %v27
    %222 = vmatprep.subr.mxu0 0.0
    %223 = vmatpush1.msra.mxu0 %v28
    %224 = vmatprep.subr.mxu0 0.0
    %225 = vmatpush1.msra.mxu0 %v29
    %226 = vmatprep.subr.mxu0 0.0
    %227 = vmatpush1.msra.mxu0 %v30
    %228 = vmatprep.subr.mxu0 0.0
    %229 = vmatpush1.msra.mxu0 0.0
    %230 = vmatprep.subr.mxu0 0.0
    %231 = vmatpush1.msra.mxu0 0.0
    %232 = vmatprep.subr.mxu0 0.0
    %233 = vmatpush1.msra.mxu0 0.0
    %234 = vmatprep.subr.mxu0 0.0
    %235 = vmatpush1.msra.mxu0 0.0
    %236 = vmatprep.subr.mxu0 0.0
    %237 = vmatpush1.msra.mxu0 0.0
    %238 = vmatprep.subr.mxu0 0.0
    %239 = vmatpush1.msra.mxu0 0.0
    %240 = vmatprep.subr.mxu0 0.0
    %241 = vmatpush1.msra.mxu0 0.0
    %242 = vmatprep.subr.mxu0 0.0
    %243 = vmatpush1.msra.mxu0 0.0
    %244 = vmatprep.subr.mxu0 0.0
    %245 = vmatpush1.msra.mxu0 0.0
    %246 = vmatprep.subr.mxu0 0.0
    %247 = vmatpush1.msra.mxu0 0.0
    %248 = vmatprep.subr.mxu0 0.0
    %249 = vmatpush1.msra.mxu0 0.0
    %250 = vmatprep.subr.mxu0 0.0
    %251 = vmatpush1.msra.mxu0 0.0
    %252 = vmatprep.subr.mxu0 0.0
    %253 = vmatpush1.msra.mxu0 0.0
    %254 = vmatprep.subr.mxu0 0.0
    %255 = vmatpush1.msra.mxu0 0.0
    %256 = vmatprep.subr.mxu0 0.0
    %257 = vmatpush1.msra.mxu0 0.0
    %258 = vmatprep.subr.mxu0 0.0
    %259 = vmatpush1.msra.mxu0 0.0
    %260 = vmatprep.subr.mxu0 0.0
    %261 = vmatpush1.msra.mxu0 0.0
    %262 = vmatprep.subr.mxu0 0.0
    %263 = vmatpush1.msra.mxu0 0.0
    %264 = vmatprep.subr.mxu0 0.0
    %265 = vmatpush1.msra.mxu0 0.0
    %266 = vmatprep.subr.mxu0 0.0
    %267 = vmatpush1.msra.mxu0 0.0
    %268 = vmatprep.subr.mxu0 0.0
    %269 = vmatpush1.msra.mxu0 0.0
    %270 = vmatprep.subr.mxu0 0.0
    %271 = vmatpush1.msra.mxu0 0.0
    %272 = vmatprep.subr.mxu0 0.0
    %273 = vmatpush1.msra.mxu0 0.0
    %274 = vmatprep.subr.mxu0 0.0
    %275 = vmatpush1.msra.mxu0 0.0
    %276 = vmatprep.subr.mxu0 0.0
    %277 = vmatpush1.msra.mxu0 0.0
    %278 = vmatprep.subr.mxu0 0.0
    %279 = vmatpush1.msra.mxu0 0.0
    %280 = vmatprep.subr.mxu0 0.0
    %281 = vmatpush1.msra.mxu0 0.0
    %282 = vmatprep.subr.mxu0 0.0
    %283 = vmatpush1.msra.mxu0 0.0
    %284 = vmatprep.mubr.f32.mxu0 0.0
    %285 = vmatmul.mubr.f32.gmra.mrb[0].mxu0 %v145
    %v286 = vpop.f32.mrb[0].mxu0
    %v287 = vadd.f32 0.0, %v286
    %v288 = vpop.f32.mrb[0].mxu0
    %289 = vdwg.mxu0
    %v290 = vadd.f32 %v219, %v287
    %v291 = vxor.u32 %v290, 2147483648
    %v292 = vmul.f32 %v291, 1.442695
    %v293 = vpow.pop %v292
    %v294 = vadd.f32 %v293, 1.0
    %v295 = vrcp.pop %v294
    %v296 = vmul.f32 1.0, %v295
    %v297 = vtanh.pop %v290
    %v298 = vmul.f32 %v296, %v129
    %300 = vrot.lane.b32.xlu0 %v297, 64
    %v301 = vpop.permute.xlu0 %300
    %v303 = vmul.f32 %v296, %v301
    %305 = vrot.lane.b32.xlu0 %v303, 32
    %v306 = vpop.permute.xlu0 %305
    %v308 = vadd.f32 %v298, %v306
    %v309 = vtanh.pop %v308
    %311 = vrot.lane.b32.xlu0 %v309, 64
    %v312 = vpop.permute.xlu0 %311
    %v314 = vmul.f32 %v296, %v312
    %316 = vrot.lane.b32.xlu0 %v314, 32
    %v317 = vpop.permute.xlu0 %316
    %v318 = vsel %vm37, %v317, 0
    %320 = vmatprep.subr.mxu0 0.0
    %321 = vmatpush1.msra.mxu0 %v31
    %322 = vmatprep.subr.mxu0 0.0
    %323 = vmatpush1.msra.mxu0 %v32
    %324 = vmatprep.subr.mxu0 0.0
    %325 = vmatpush1.msra.mxu0 %v33
    %326 = vmatprep.subr.mxu0 0.0
    %327 = vmatpush1.msra.mxu0 %v34
    %328 = vmatprep.subr.mxu0 0.0
    %329 = vmatpush1.msra.mxu0 0.0
    %330 = vmatprep.subr.mxu0 0.0
    %331 = vmatpush1.msra.mxu0 0.0
    %332 = vmatprep.subr.mxu0 0.0
    %333 = vmatpush1.msra.mxu0 0.0
    %334 = vmatprep.subr.mxu0 0.0
    %335 = vmatpush1.msra.mxu0 0.0
    %336 = vmatprep.subr.mxu0 0.0
    %337 = vmatpush1.msra.mxu0 0.0
    %338 = vmatprep.subr.mxu0 0.0
    %339 = vmatpush1.msra.mxu0 0.0
    %340 = vmatprep.subr.mxu0 0.0
    %341 = vmatpush1.msra.mxu0 0.0
    %342 = vmatprep.subr.mxu0 0.0
    %343 = vmatpush1.msra.mxu0 0.0
    %344 = vmatprep.subr.mxu0 0.0
    %345 = vmatpush1.msra.mxu0 0.0
    %346 = vmatprep.subr.mxu0 0.0
    %347 = vmatpush1.msra.mxu0 0.0
    %348 = vmatprep.subr.mxu0 0.0
    %349 = vmatpush1.msra.mxu0 0.0
    %350 = vmatprep.subr.mxu0 0.0
    %351 = vmatpush1.msra.mxu0 0.0
    %352 = vmatprep.subr.mxu0 0.0
    %353 = vmatpush1.msra.mxu0 0.0
    %354 = vmatprep.subr.mxu0 0.0
    %355 = vmatpush1.msra.mxu0 0.0
    %356 = vmatprep.subr.mxu0 0.0
    %357 = vmatpush1.msra.mxu0 0.0
    %358 = vmatprep.subr.mxu0 0.0
    %359 = vmatpush1.msra.mxu0 0.0
    %360 = vmatprep.subr.mxu0 0.0
    %361 = vmatpush1.msra.mxu0 0.0
    %362 = vmatprep.subr.mxu0 0.0
    %363 = vmatpush1.msra.mxu0 0.0
    %364 = vmatprep.subr.mxu0 0.0
    %365 = vmatpush1.msra.mxu0 0.0
    %366 = vmatprep.subr.mxu0 0.0
    %367 = vmatpush1.msra.mxu0 0.0
    %368 = vmatprep.subr.mxu0 0.0
    %369 = vmatpush1.msra.mxu0 0.0
    %370 = vmatprep.subr.mxu0 0.0
    %371 = vmatpush1.msra.mxu0 0.0
    %372 = vmatprep.subr.mxu0 0.0
    %373 = vmatpush1.msra.mxu0 0.0
    %374 = vmatprep.subr.mxu0 0.0
    %375 = vmatpush1.msra.mxu0 0.0
    %376 = vmatprep.subr.mxu0 0.0
    %377 = vmatpush1.msra.mxu0 0.0
    %378 = vmatprep.subr.mxu0 0.0
    %379 = vmatpush1.msra.mxu0 0.0
    %380 = vmatprep.subr.mxu0 0.0
    %381 = vmatpush1.msra.mxu0 0.0
    %382 = vmatprep.subr.mxu0 0.0
    %383 = vmatpush1.msra.mxu0 0.0
    %384 = vmatprep.mubr.f32.mxu0 0.0
    %385 = vmatmul.mubr.f32.gmra.mrb[0].mxu0 %v318
    %v386 = vpop.f32.mrb[0].mxu0
    %v387 = vadd.f32 %v140, %v386
    %v388 = vpop.f32.mrb[0].mxu0
    %389 = vdwg.mxu0
    %s390 = scalar_lea.vmem [#allocation2], 2
    %391 = vst [vmem:[%s390] sm:$0x3] %v387
    %s392 = scalar_lea.vmem %s0, 4
    %v393 = vld [vmem:[%s392] sm:$0x3]
    %394 = vmatprep.subr.mxu0 0.0
    %395 = vmatpush1.msra.mxu0 %v27
    %396 = vmatprep.subr.mxu0 0.0
    %397 = vmatpush1.msra.mxu0 %v28
    %398 = vmatprep.subr.mxu0 0.0
    %399 = vmatpush1.msra.mxu0 %v29
    %400 = vmatprep.subr.mxu0 0.0
    %401 = vmatpush1.msra.mxu0 %v30
    %402 = vmatprep.subr.mxu0 0.0
    %403 = vmatpush1.msra.mxu0 0.0
    %404 = vmatprep.subr.mxu0 0.0
    %405 = vmatpush1.msra.mxu0 0.0
    %406 = vmatprep.subr.mxu0 0.0
    %407 = vmatpush1.msra.mxu0 0.0
    %408 = vmatprep.subr.mxu0 0.0
    %409 = vmatpush1.msra.mxu0 0.0
    %410 = vmatprep.subr.mxu0 0.0
    %411 = vmatpush1.msra.mxu0 0.0
    %412 = vmatprep.subr.mxu0 0.0
    %413 = vmatpush1.msra.mxu0 0.0
    %414 = vmatprep.subr.mxu0 0.0
    %415 = vmatpush1.msra.mxu0 0.0
    %416 = vmatprep.subr.mxu0 0.0
    %417 = vmatpush1.msra.mxu0 0.0
    %418 = vmatprep.subr.mxu0 0.0
    %419 = vmatpush1.msra.mxu0 0.0
    %420 = vmatprep.subr.mxu0 0.0
    %421 = vmatpush1.msra.mxu0 0.0
    %422 = vmatprep.subr.mxu0 0.0
    %423 = vmatpush1.msra.mxu0 0.0
    %424 = vmatprep.subr.mxu0 0.0
    %425 = vmatpush1.msra.mxu0 0.0
    %426 = vmatprep.subr.mxu0 0.0
    %427 = vmatpush1.msra.mxu0 0.0
    %428 = vmatprep.subr.mxu0 0.0
    %429 = vmatpush1.msra.mxu0 0.0
    %430 = vmatprep.subr.mxu0 0.0
    %431 = vmatpush1.msra.mxu0 0.0
    %432 = vmatprep.subr.mxu0 0.0
    %433 = vmatpush1.msra.mxu0 0.0
    %434 = vmatprep.subr.mxu0 0.0
    %435 = vmatpush1.msra.mxu0 0.0
    %436 = vmatprep.subr.mxu0 0.0
    %437 = vmatpush1.msra.mxu0 0.0
    %438 = vmatprep.subr.mxu0 0.0
    %439 = vmatpush1.msra.mxu0 0.0
    %440 = vmatprep.subr.mxu0 0.0
    %441 = vmatpush1.msra.mxu0 0.0
    %442 = vmatprep.subr.mxu0 0.0
    %443 = vmatpush1.msra.mxu0 0.0
    %444 = vmatprep.subr.mxu0 0.0
    %445 = vmatpush1.msra.mxu0 0.0
    %446 = vmatprep.subr.mxu0 0.0
    %447 = vmatpush1.msra.mxu0 0.0
    %448 = vmatprep.subr.mxu0 0.0
    %449 = vmatpush1.msra.mxu0 0.0
    %450 = vmatprep.subr.mxu0 0.0
    %451 = vmatpush1.msra.mxu0 0.0
    %452 = vmatprep.subr.mxu0 0.0
    %453 = vmatpush1.msra.mxu0 0.0
    %454 = vmatprep.subr.mxu0 0.0
    %455 = vmatpush1.msra.mxu0 0.0
    %456 = vmatprep.subr.mxu0 0.0
    %457 = vmatpush1.msra.mxu0 0.0
    %458 = vmatprep.mubr.f32.mxu0 0.0
    %459 = vmatmul.mubr.f32.gmra.mrb[0].mxu0 %v318
    %v460 = vpop.f32.mrb[0].mxu0
    %v461 = vadd.f32 0.0, %v460
    %v462 = vpop.f32.mrb[0].mxu0
    %463 = vdwg.mxu0
    %v464 = vadd.f32 %v393, %v461
    %v465 = vxor.u32 %v464, 2147483648
    %v466 = vmul.f32 %v465, 1.442695
    %v467 = vpow.pop %v466
    %v468 = vadd.f32 %v467, 1.0
    %v469 = vrcp.pop %v468
    %v470 = vmul.f32 1.0, %v469
    %v471 = vtanh.pop %v464
    %v472 = vmul.f32 %v470, %v308
    %474 = vrot.lane.b32.xlu0 %v471, 64
    %v475 = vpop.permute.xlu0 %474
    %v477 = vmul.f32 %v470, %v475
    %479 = vrot.lane.b32.xlu0 %v477, 32
    %v480 = vpop.permute.xlu0 %479
    %v482 = vadd.f32 %v472, %v480
    %v483 = vtanh.pop %v482
    %485 = vrot.lane.b32.xlu0 %v483, 64
    %v486 = vpop.permute.xlu0 %485
    %v488 = vmul.f32 %v470, %v486
    %490 = vrot.lane.b32.xlu0 %v488, 32
    %v491 = vpop.permute.xlu0 %490
    %v492 = vsel %vm37, %v491, 0
    %494 = vmatprep.subr.mxu0 0.0
    %495 = vmatpush1.msra.mxu0 %v31
    %496 = vmatprep.subr.mxu0 0.0
    %497 = vmatpush1.msra.mxu0 %v32
    %498 = vmatprep.subr.mxu0 0.0
    %499 = vmatpush1.msra.mxu0 %v33
    %500 = vmatprep.subr.mxu0 0.0
    %501 = vmatpush1.msra.mxu0 %v34
    %502 = vmatprep.subr.mxu0 0.0
    %503 = vmatpush1.msra.mxu0 0.0
    %504 = vmatprep.subr.mxu0 0.0
    %505 = vmatpush1.msra.mxu0 0.0
    %506 = vmatprep.subr.mxu0 0.0
    %507 = vmatpush1.msra.mxu0 0.0
    %508 = vmatprep.subr.mxu0 0.0
    %509 = vmatpush1.msra.mxu0 0.0
    %510 = vmatprep.subr.mxu0 0.0
    %511 = vmatpush1.msra.mxu0 0.0
    %512 = vmatprep.subr.mxu0 0.0
    %513 = vmatpush1.msra.mxu0 0.0
    %514 = vmatprep.subr.mxu0 0.0
    %515 = vmatpush1.msra.mxu0 0.0
    %516 = vmatprep.subr.mxu0 0.0
    %517 = vmatpush1.msra.mxu0 0.0
    %518 = vmatprep.subr.mxu0 0.0
    %519 = vmatpush1.msra.mxu0 0.0
    %520 = vmatprep.subr.mxu0 0.0
    %521 = vmatpush1.msra.mxu0 0.0
    %522 = vmatprep.subr.mxu0 0.0
    %523 = vmatpush1.msra.mxu0 0.0
    %524 = vmatprep.subr.mxu0 0.0
    %525 = vmatpush1.msra.mxu0 0.0
    %526 = vmatprep.subr.mxu0 0.0
    %527 = vmatpush1.msra.mxu0 0.0
    %528 = vmatprep.subr.mxu0 0.0
    %529 = vmatpush1.msra.mxu0 0.0
    %530 = vmatprep.subr.mxu0 0.0
    %531 = vmatpush1.msra.mxu0 0.0
    %532 = vmatprep.subr.mxu0 0.0
    %533 = vmatpush1.msra.mxu0 0.0
    %534 = vmatprep.subr.mxu0 0.0
    %535 = vmatpush1.msra.mxu0 0.0
    %536 = vmatprep.subr.mxu0 0.0
    %537 = vmatpush1.msra.mxu0 0.0
    %538 = vmatprep.subr.mxu0 0.0
    %539 = vmatpush1.msra.mxu0 0.0
    %540 = vmatprep.subr.mxu0 0.0
    %541 = vmatpush1.msra.mxu0 0.0
    %542 = vmatprep.subr.mxu0 0.0
    %543 = vmatpush1.msra.mxu0 0.0
    %544 = vmatprep.subr.mxu0 0.0
    %545 = vmatpush1.msra.mxu0 0.0
    %546 = vmatprep.subr.mxu0 0.0
    %547 = vmatpush1.msra.mxu0 0.0
    %548 = vmatprep.subr.mxu0 0.0
    %549 = vmatpush1.msra.mxu0 0.0
    %550 = vmatprep.subr.mxu0 0.0
    %551 = vmatpush1.msra.mxu0 0.0
    %552 = vmatprep.subr.mxu0 0.0
    %553 = vmatpush1.msra.mxu0 0.0
    %554 = vmatprep.subr.mxu0 0.0
    %555 = vmatpush1.msra.mxu0 0.0
    %556 = vmatprep.subr.mxu0 0.0
    %557 = vmatpush1.msra.mxu0 0.0
    %558 = vmatprep.mubr.f32.mxu0 0.0
    %559 = vmatmul.mubr.f32.gmra.mrb[0].mxu0 %v492
    %v560 = vpop.f32.mrb[0].mxu0
    %v561 = vadd.f32 %v140, %v560
    %v562 = vpop.f32.mrb[0].mxu0
    %563 = vdwg.mxu0
    %s564 = scalar_lea.vmem [#allocation2], 4
    %565 = vst [vmem:[%s564] sm:$0x3] %v561
    %s566 = scalar_lea.vmem %s0, 6
    %v567 = vld [vmem:[%s566] sm:$0x3]
    %568 = vmatprep.subr.mxu0 0.0
    %569 = vmatpush1.msra.mxu0 %v27
    %570 = vmatprep.subr.mxu0 0.0
    %571 = vmatpush1.msra.mxu0 %v28
    %572 = vmatprep.subr.mxu0 0.0
    %573 = vmatpush1.msra.mxu0 %v29
    %574 = vmatprep.subr.mxu0 0.0
    %575 = vmatpush1.msra.mxu0 %v30
    %576 = vmatprep.subr.mxu0 0.0
    %577 = vmatpush1.msra.mxu0 0.0
    %578 = vmatprep.subr.mxu0 0.0
    %579 = vmatpush1.msra.mxu0 0.0
    %580 = vmatprep.subr.mxu0 0.0
    %581 = vmatpush1.msra.mxu0 0.0
    %582 = vmatprep.subr.mxu0 0.0
    %583 = vmatpush1.msra.mxu0 0.0
    %584 = vmatprep.subr.mxu0 0.0
    %585 = vmatpush1.msra.mxu0 0.0
    %586 = vmatprep.subr.mxu0 0.0
    %587 = vmatpush1.msra.mxu0 0.0
    %588 = vmatprep.subr.mxu0 0.0
    %589 = vmatpush1.msra.mxu0 0.0
    %590 = vmatprep.subr.mxu0 0.0
    %591 = vmatpush1.msra.mxu0 0.0
    %592 = vmatprep.subr.mxu0 0.0
    %593 = vmatpush1.msra.mxu0 0.0
    %594 = vmatprep.subr.mxu0 0.0
    %595 = vmatpush1.msra.mxu0 0.0
    %596 = vmatprep.subr.mxu0 0.0
    %597 = vmatpush1.msra.mxu0 0.0
    %598 = vmatprep.subr.mxu0 0.0
    %599 = vmatpush1.msra.mxu0 0.0
    %600 = vmatprep.subr.mxu0 0.0
    %601 = vmatpush1.msra.mxu0 0.0
    %602 = vmatprep.subr.mxu0 0.0
    %603 = vmatpush1.msra.mxu0 0.0
    %604 = vmatprep.subr.mxu0 0.0
    %605 = vmatpush1.msra.mxu0 0.0
    %606 = vmatprep.subr.mxu0 0.0
    %607 = vmatpush1.msra.mxu0 0.0
    %608 = vmatprep.subr.mxu0 0.0
    %609 = vmatpush1.msra.mxu0 0.0
    %610 = vmatprep.subr.mxu0 0.0
    %611 = vmatpush1.msra.mxu0 0.0
    %612 = vmatprep.subr.mxu0 0.0
    %613 = vmatpush1.msra.mxu0 0.0
    %614 = vmatprep.subr.mxu0 0.0
    %615 = vmatpush1.msra.mxu0 0.0
    %616 = vmatprep.subr.mxu0 0.0
    %617 = vmatpush1.msra.mxu0 0.0
    %618 = vmatprep.subr.mxu0 0.0
    %619 = vmatpush1.msra.mxu0 0.0
    %620 = vmatprep.subr.mxu0 0.0
    %621 = vmatpush1.msra.mxu0 0.0
    %622 = vmatprep.subr.mxu0 0.0
    %623 = vmatpush1.msra.mxu0 0.0
    %624 = vmatprep.subr.mxu0 0.0
    %625 = vmatpush1.msra.mxu0 0.0
    %626 = vmatprep.subr.mxu0 0.0
    %627 = vmatpush1.msra.mxu0 0.0
    %628 = vmatprep.subr.mxu0 0.0
    %629 = vmatpush1.msra.mxu0 0.0
    %630 = vmatprep.subr.mxu0 0.0
    %631 = vmatpush1.msra.mxu0 0.0
    %632 = vmatprep.mubr.f32.mxu0 0.0
    %633 = vmatmul.mubr.f32.gmra.mrb[0].mxu0 %v492
    %v634 = vpop.f32.mrb[0].mxu0
    %v635 = vadd.f32 0.0, %v634
    %v636 = vpop.f32.mrb[0].mxu0
    %637 = vdwg.mxu0
    %v638 = vadd.f32 %v567, %v635
    %v639 = vxor.u32 %v638, 2147483648
    %v640 = vmul.f32 %v639, 1.442695
    %v641 = vpow.pop %v640
    %v642 = vadd.f32 %v641, 1.0
    %v643 = vrcp.pop %v642
    %v644 = vmul.f32 1.0, %v643
    %v645 = vtanh.pop %v638
    %v646 = vmul.f32 %v644, %v482
    %648 = vrot.lane.b32.xlu0 %v645, 64
    %v649 = vpop.permute.xlu0 %648
    %v651 = vmul.f32 %v644, %v649
    %653 = vrot.lane.b32.xlu0 %v651, 32
    %v654 = vpop.permute.xlu0 %653
    %v656 = vadd.f32 %v646, %v654
    %v657 = vtanh.pop %v656
    %659 = vrot.lane.b32.xlu0 %v657, 64
    %v660 = vpop.permute.xlu0 %659
    %v662 = vmul.f32 %v644, %v660
    %664 = vrot.lane.b32.xlu0 %v662, 32
    %v665 = vpop.permute.xlu0 %664
    %v666 = vsel %vm37, %v665, 0
    %668 = vmatprep.subr.mxu0 0.0
    %669 = vmatpush1.msra.mxu0 %v31
    %670 = vmatprep.subr.mxu0 0.0
    %671 = vmatpush1.msra.mxu0 %v32
    %672 = vmatprep.subr.mxu0 0.0
    %673 = vmatpush1.msra.mxu0 %v33
    %674 = vmatprep.subr.mxu0 0.0
    %675 = vmatpush1.msra.mxu0 %v34
    %676 = vmatprep.subr.mxu0 0.0
    %677 = vmatpush1.msra.mxu0 0.0
    %678 = vmatprep.subr.mxu0 0.0
    %679 = vmatpush1.msra.mxu0 0.0
    %680 = vmatprep.subr.mxu0 0.0
    %681 = vmatpush1.msra.mxu0 0.0
    %682 = vmatprep.subr.mxu0 0.0
    %683 = vmatpush1.msra.mxu0 0.0
    %684 = vmatprep.subr.mxu0 0.0
    %685 = vmatpush1.msra.mxu0 0.0
    %686 = vmatprep.subr.mxu0 0.0
    %687 = vmatpush1.msra.mxu0 0.0
    %688 = vmatprep.subr.mxu0 0.0
    %689 = vmatpush1.msra.mxu0 0.0
    %690 = vmatprep.subr.mxu0 0.0
    %691 = vmatpush1.msra.mxu0 0.0
    %692 = vmatprep.subr.mxu0 0.0
    %693 = vmatpush1.msra.mxu0 0.0
    %694 = vmatprep.subr.mxu0 0.0
    %695 = vmatpush1.msra.mxu0 0.0
    %696 = vmatprep.subr.mxu0 0.0
    %697 = vmatpush1.msra.mxu0 0.0
    %698 = vmatprep.subr.mxu0 0.0
    %699 = vmatpush1.msra.mxu0 0.0
    %700 = vmatprep.subr.mxu0 0.0
    %701 = vmatpush1.msra.mxu0 0.0
    %702 = vmatprep.subr.mxu0 0.0
    %703 = vmatpush1.msra.mxu0 0.0
    %704 = vmatprep.subr.mxu0 0.0
    %705 = vmatpush1.msra.mxu0 0.0
    %706 = vmatprep.subr.mxu0 0.0
    %707 = vmatpush1.msra.mxu0 0.0
    %708 = vmatprep.subr.mxu0 0.0
    %709 = vmatpush1.msra.mxu0 0.0
    %710 = vmatprep.subr.mxu0 0.0
    %711 = vmatpush1.msra.mxu0 0.0
    %712 = vmatprep.subr.mxu0 0.0
    %713 = vmatpush1.msra.mxu0 0.0
    %714 = vmatprep.subr.mxu0 0.0
    %715 = vmatpush1.msra.mxu0 0.0
    %716 = vmatprep.subr.mxu0 0.0
    %717 = vmatpush1.msra.mxu0 0.0
    %718 = vmatprep.subr.mxu0 0.0
    %719 = vmatpush1.msra.mxu0 0.0
    %720 = vmatprep.subr.mxu0 0.0
    %721 = vmatpush1.msra.mxu0 0.0
    %722 = vmatprep.subr.mxu0 0.0
    %723 = vmatpush1.msra.mxu0 0.0
    %724 = vmatprep.subr.mxu0 0.0
    %725 = vmatpush1.msra.mxu0 0.0
    %726 = vmatprep.subr.mxu0 0.0
    %727 = vmatpush1.msra.mxu0 0.0
    %728 = vmatprep.subr.mxu0 0.0
    %729 = vmatpush1.msra.mxu0 0.0
    %730 = vmatprep.subr.mxu0 0.0
    %731 = vmatpush1.msra.mxu0 0.0
    %732 = vmatprep.mubr.f32.mxu0 0.0
    %733 = vmatmul.mubr.f32.gmra.mrb[0].mxu0 %v666
    %v734 = vpop.f32.mrb[0].mxu0
    %v735 = vadd.f32 %v140, %v734
    %v736 = vpop.f32.mrb[0].mxu0
    %737 = vdwg.mxu0
    %s738 = scalar_lea.vmem [#allocation2], 6
    %739 = vst [vmem:[%s738] sm:$0x3] %v735
    %s740 = scalar_lea.vmem %s0, 8
    %v741 = vld [vmem:[%s740] sm:$0x3]
    %742 = vmatprep.subr.mxu0 0.0
    %743 = vmatpush1.msra.mxu0 %v27
    %744 = vmatprep.subr.mxu0 0.0
    %745 = vmatpush1.msra.mxu0 %v28
    %746 = vmatprep.subr.mxu0 0.0
    %747 = vmatpush1.msra.mxu0 %v29
    %748 = vmatprep.subr.mxu0 0.0
    %749 = vmatpush1.msra.mxu0 %v30
    %750 = vmatprep.subr.mxu0 0.0
    %751 = vmatpush1.msra.mxu0 0.0
    %752 = vmatprep.subr.mxu0 0.0
    %753 = vmatpush1.msra.mxu0 0.0
    %754 = vmatprep.subr.mxu0 0.0
    %755 = vmatpush1.msra.mxu0 0.0
    %756 = vmatprep.subr.mxu0 0.0
    %757 = vmatpush1.msra.mxu0 0.0
    %758 = vmatprep.subr.mxu0 0.0
    %759 = vmatpush1.msra.mxu0 0.0
    %760 = vmatprep.subr.mxu0 0.0
    %761 = vmatpush1.msra.mxu0 0.0
    %762 = vmatprep.subr.mxu0 0.0
    %763 = vmatpush1.msra.mxu0 0.0
    %764 = vmatprep.subr.mxu0 0.0
    %765 = vmatpush1.msra.mxu0 0.0
    %766 = vmatprep.subr.mxu0 0.0
    %767 = vmatpush1.msra.mxu0 0.0
    %768 = vmatprep.subr.mxu0 0.0
    %769 = vmatpush1.msra.mxu0 0.0
    %770 = vmatprep.subr.mxu0 0.0
    %771 = vmatpush1.msra.mxu0 0.0
    %772 = vmatprep.subr.mxu0 0.0
    %773 = vmatpush1.msra.mxu0 0.0
    %774 = vmatprep.subr.mxu0 0.0
    %775 = vmatpush1.msra.mxu0 0.0
    %776 = vmatprep.subr.mxu0 0.0
    %777 = vmatpush1.msra.mxu0 0.0
    %778 = vmatprep.subr.mxu0 0.0
    %779 = vmatpush1.msra.mxu0 0.0
    %780 = vmatprep.subr.mxu0 0.0
    %781 = vmatpush1.msra.mxu0 0.0
    %782 = vmatprep.subr.mxu0 0.0
    %783 = vmatpush1.msra.mxu0 0.0
    %784 = vmatprep.subr.mxu0 0.0
    %785 = vmatpush1.msra.mxu0 0.0
    %786 = vmatprep.subr.mxu0 0.0
    %787 = vmatpush1.msra.mxu0 0.0
    %788 = vmatprep.subr.mxu0 0.0
    %789 = vmatpush1.msra.mxu0 0.0
    %790 = vmatprep.subr.mxu0 0.0
    %791 = vmatpush1.msra.mxu0 0.0
    %792 = vmatprep.subr.mxu0 0.0
    %793 = vmatpush1.msra.mxu0 0.0
    %794 = vmatprep.subr.mxu0 0.0
    %795 = vmatpush1.msra.mxu0 0.0
    %796 = vmatprep.subr.mxu0 0.0
    %797 = vmatpush1.msra.mxu0 0.0
    %798 = vmatprep.subr.mxu0 0.0
    %799 = vmatpush1.msra.mxu0 0.0
    %800 = vmatprep.subr.mxu0 0.0
    %801 = vmatpush1.msra.mxu0 0.0
    %802 = vmatprep.subr.mxu0 0.0
    %803 = vmatpush1.msra.mxu0 0.0
    %804 = vmatprep.subr.mxu0 0.0
    %805 = vmatpush1.msra.mxu0 0.0
    %806 = vmatprep.mubr.f32.mxu0 0.0
    %807 = vmatmul.mubr.f32.gmra.mrb[0].mxu0 %v666
    %v808 = vpop.f32.mrb[0].mxu0
    %v809 = vadd.f32 0.0, %v808
    %v810 = vpop.f32.mrb[0].mxu0
    %811 = vdwg.mxu0
    %v812 = vadd.f32 %v741, %v809
    %v813 = vxor.u32 %v812, 2147483648
    %v814 = vmul.f32 %v813, 1.442695
    %v815 = vpow.pop %v814
    %v816 = vadd.f32 %v815, 1.0
    %v817 = vrcp.pop %v816
    %v818 = vmul.f32 1.0, %v817
    %v819 = vtanh.pop %v812
    %v820 = vmul.f32 %v818, %v656
    %822 = vrot.lane.b32.xlu0 %v819, 64
    %v823 = vpop.permute.xlu0 %822
    %v825 = vmul.f32 %v818, %v823
    %827 = vrot.lane.b32.xlu0 %v825, 32
    %v828 = vpop.permute.xlu0 %827
    %v830 = vadd.f32 %v820, %v828
    %v831 = vtanh.pop %v830
    %833 = vrot.lane.b32.xlu0 %v831, 64
    %v834 = vpop.permute.xlu0 %833
    %v836 = vmul.f32 %v818, %v834
    %838 = vrot.lane.b32.xlu0 %v836, 32
    %v839 = vpop.permute.xlu0 %838
    %v840 = vsel %vm37, %v839, 0
    %842 = vmatprep.subr.mxu0 0.0
    %843 = vmatpush1.msra.mxu0 %v31
    %844 = vmatprep.subr.mxu0 0.0
    %845 = vmatpush1.msra.mxu0 %v32
    %846 = vmatprep.subr.mxu0 0.0
    %847 = vmatpush1.msra.mxu0 %v33
    %848 = vmatprep.subr.mxu0 0.0
    %849 = vmatpush1.msra.mxu0 %v34
    %850 = vmatprep.subr.mxu0 0.0
    %851 = vmatpush1.msra.mxu0 0.0
    %852 = vmatprep.subr.mxu0 0.0
    %853 = vmatpush1.msra.mxu0 0.0
    %854 = vmatprep.subr.mxu0 0.0
    %855 = vmatpush1.msra.mxu0 0.0
    %856 = vmatprep.subr.mxu0 0.0
    %857 = vmatpush1.msra.mxu0 0.0
    %858 = vmatprep.subr.mxu0 0.0
    %859 = vmatpush1.msra.mxu0 0.0
    %860 = vmatprep.subr.mxu0 0.0
    %861 = vmatpush1.msra.mxu0 0.0
    %862 = vmatprep.subr.mxu0 0.0
    %863 = vmatpush1.msra.mxu0 0.0
    %864 = vmatprep.subr.mxu0 0.0
    %865 = vmatpush1.msra.mxu0 0.0
    %866 = vmatprep.subr.mxu0 0.0
    %867 = vmatpush1.msra.mxu0 0.0
    %868 = vmatprep.subr.mxu0 0.0
    %869 = vmatpush1.msra.mxu0 0.0
    %870 = vmatprep.subr.mxu0 0.0
    %871 = vmatpush1.msra.mxu0 0.0
    %872 = vmatprep.subr.mxu0 0.0
    %873 = vmatpush1.msra.mxu0 0.0
    %874 = vmatprep.subr.mxu0 0.0
    %875 = vmatpush1.msra.mxu0 0.0
    %876 = vmatprep.subr.mxu0 0.0
    %877 = vmatpush1.msra.mxu0 0.0
    %878 = vmatprep.subr.mxu0 0.0
    %879 = vmatpush1.msra.mxu0 0.0
    %880 = vmatprep.subr.mxu0 0.0
    %881 = vmatpush1.msra.mxu0 0.0
    %882 = vmatprep.subr.mxu0 0.0
    %883 = vmatpush1.msra.mxu0 0.0
    %884 = vmatprep.subr.mxu0 0.0
    %885 = vmatpush1.msra.mxu0 0.0
    %886 = vmatprep.subr.mxu0 0.0
    %887 = vmatpush1.msra.mxu0 0.0
    %888 = vmatprep.subr.mxu0 0.0
    %889 = vmatpush1.msra.mxu0 0.0
    %890 = vmatprep.subr.mxu0 0.0
    %891 = vmatpush1.msra.mxu0 0.0
    %892 = vmatprep.subr.mxu0 0.0
    %893 = vmatpush1.msra.mxu0 0.0
    %894 = vmatprep.subr.mxu0 0.0
    %895 = vmatpush1.msra.mxu0 0.0
    %896 = vmatprep.subr.mxu0 0.0
    %897 = vmatpush1.msra.mxu0 0.0
    %898 = vmatprep.subr.mxu0 0.0
    %899 = vmatpush1.msra.mxu0 0.0
    %900 = vmatprep.subr.mxu0 0.0
    %901 = vmatpush1.msra.mxu0 0.0
    %902 = vmatprep.subr.mxu0 0.0
    %903 = vmatpush1.msra.mxu0 0.0
    %904 = vmatprep.subr.mxu0 0.0
    %905 = vmatpush1.msra.mxu0 0.0
    %906 = vmatprep.mubr.f32.mxu0 0.0
    %907 = vmatmul.mubr.f32.gmra.mrb[0].mxu0 %v840
    %v908 = vpop.f32.mrb[0].mxu0
    %v909 = vadd.f32 %v140, %v908
    %v910 = vpop.f32.mrb[0].mxu0
    %911 = vdwg.mxu0
    %s912 = scalar_lea.vmem [#allocation2], 8
    %913 = vst [vmem:[%s912] sm:$0x3] %v909
    %s914 = scalar_lea.vmem %s0, 10
    %v915 = vld [vmem:[%s914] sm:$0x3]
    %916 = vmatprep.subr.mxu0 0.0
    %917 = vmatpush1.msra.mxu0 %v27
    %918 = vmatprep.subr.mxu0 0.0
    %919 = vmatpush1.msra.mxu0 %v28
    %920 = vmatprep.subr.mxu0 0.0
    %921 = vmatpush1.msra.mxu0 %v29
    %922 = vmatprep.subr.mxu0 0.0
    %923 = vmatpush1.msra.mxu0 %v30
    %924 = vmatprep.subr.mxu0 0.0
    %925 = vmatpush1.msra.mxu0 0.0
    %926 = vmatprep.subr.mxu0 0.0
    %927 = vmatpush1.msra.mxu0 0.0
    %928 = vmatprep.subr.mxu0 0.0
    %929 = vmatpush1.msra.mxu0 0.0
    %930 = vmatprep.subr.mxu0 0.0
    %931 = vmatpush1.msra.mxu0 0.0
    %932 = vmatprep.subr.mxu0 0.0
    %933 = vmatpush1.msra.mxu0 0.0
    %934 = vmatprep.subr.mxu0 0.0
    %935 = vmatpush1.msra.mxu0 0.0
    %936 = vmatprep.subr.mxu0 0.0
    %937 = vmatpush1.msra.mxu0 0.0
    %938 = vmatprep.subr.mxu0 0.0
    %939 = vmatpush1.msra.mxu0 0.0
    %940 = vmatprep.subr.mxu0 0.0
    %941 = vmatpush1.msra.mxu0 0.0
    %942 = vmatprep.subr.mxu0 0.0
    %943 = vmatpush1.msra.mxu0 0.0
    %944 = vmatprep.subr.mxu0 0.0
    %945 = vmatpush1.msra.mxu0 0.0
    %946 = vmatprep.subr.mxu0 0.0
    %947 = vmatpush1.msra.mxu0 0.0
    %948 = vmatprep.subr.mxu0 0.0
    %949 = vmatpush1.msra.mxu0 0.0
    %950 = vmatprep.subr.mxu0 0.0
    %951 = vmatpush1.msra.mxu0 0.0
    %952 = vmatprep.subr.mxu0 0.0
    %953 = vmatpush1.msra.mxu0 0.0
    %954 = vmatprep.subr.mxu0 0.0
    %955 = vmatpush1.msra.mxu0 0.0
    %956 = vmatprep.subr.mxu0 0.0
    %957 = vmatpush1.msra.mxu0 0.0
    %958 = vmatprep.subr.mxu0 0.0
    %959 = vmatpush1.msra.mxu0 0.0
    %960 = vmatprep.subr.mxu0 0.0
    %961 = vmatpush1.msra.mxu0 0.0
    %962 = vmatprep.subr.mxu0 0.0
    %963 = vmatpush1.msra.mxu0 0.0
    %964 = vmatprep.subr.mxu0 0.0
    %965 = vmatpush1.msra.mxu0 0.0
    %966 = vmatprep.subr.mxu0 0.0
    %967 = vmatpush1.msra.mxu0 0.0
    %968 = vmatprep.subr.mxu0 0.0
    %969 = vmatpush1.msra.mxu0 0.0
    %970 = vmatprep.subr.mxu0 0.0
    %971 = vmatpush1.msra.mxu0 0.0
    %972 = vmatprep.subr.mxu0 0.0
    %973 = vmatpush1.msra.mxu0 0.0
    %974 = vmatprep.subr.mxu0 0.0
    %975 = vmatpush1.msra.mxu0 0.0
    %976 = vmatprep.subr.mxu0 0.0
    %977 = vmatpush1.msra.mxu0 0.0
    %978 = vmatprep.subr.mxu0 0.0
    %979 = vmatpush1.msra.mxu0 0.0
    %980 = vmatprep.mubr.f32.mxu0 0.0
    %981 = vmatmul.mubr.f32.gmra.mrb[0].mxu0 %v840
    %v982 = vpop.f32.mrb[0].mxu0
    %v983 = vadd.f32 0.0, %v982
    %v984 = vpop.f32.mrb[0].mxu0
    %985 = vdwg.mxu0
    %v986 = vadd.f32 %v915, %v983
    %v987 = vxor.u32 %v986, 2147483648
    %v988 = vmul.f32 %v987, 1.442695
    %v989 = vpow.pop %v988
    %v990 = vadd.f32 %v989, 1.0
    %v991 = vrcp.pop %v990
    %v992 = vmul.f32 1.0, %v991
    %v993 = vtanh.pop %v986
    %v994 = vmul.f32 %v992, %v830
    %996 = vrot.lane.b32.xlu0 %v993, 64
    %v997 = vpop.permute.xlu0 %996
    %v999 = vmul.f32 %v992, %v997
    %1001 = vrot.lane.b32.xlu0 %v999, 32
    %v1002 = vpop.permute.xlu0 %1001
    %v1004 = vadd.f32 %v994, %v1002
    %v1005 = vtanh.pop %v1004
    %1007 = vrot.lane.b32.xlu0 %v1005, 64
    %v1008 = vpop.permute.xlu0 %1007
    %v1010 = vmul.f32 %v992, %v1008
    %1012 = vrot.lane.b32.xlu0 %v1010, 32
    %v1013 = vpop.permute.xlu0 %1012
    %v1014 = vsel %vm37, %v1013, 0
    %1016 = vmatprep.subr.mxu0 0.0
    %1017 = vmatpush1.msra.mxu0 %v31
    %1018 = vmatprep.subr.mxu0 0.0
    %1019 = vmatpush1.msra.mxu0 %v32
    %1020 = vmatprep.subr.mxu0 0.0
    %1021 = vmatpush1.msra.mxu0 %v33
    %1022 = vmatprep.subr.mxu0 0.0
    %1023 = vmatpush1.msra.mxu0 %v34
    %1024 = vmatprep.subr.mxu0 0.0
    %1025 = vmatpush1.msra.mxu0 0.0
    %1026 = vmatprep.subr.mxu0 0.0
    %1027 = vmatpush1.msra.mxu0 0.0
    %1028 = vmatprep.subr.mxu0 0.0
    %1029 = vmatpush1.msra.mxu0 0.0
    %1030 = vmatprep.subr.mxu0 0.0
    %1031 = vmatpush1.msra.mxu0 0.0
    %1032 = vmatprep.subr.mxu0 0.0
    %1033 = vmatpush1.msra.mxu0 0.0
    %1034 = vmatprep.subr.mxu0 0.0
    %1035 = vmatpush1.msra.mxu0 0.0
    %1036 = vmatprep.subr.mxu0 0.0
    %1037 = vmatpush1.msra.mxu0 0.0
    %1038 = vmatprep.subr.mxu0 0.0
    %1039 = vmatpush1.msra.mxu0 0.0
    %1040 = vmatprep.subr.mxu0 0.0
    %1041 = vmatpush1.msra.mxu0 0.0
    %1042 = vmatprep.subr.mxu0 0.0
    %1043 = vmatpush1.msra.mxu0 0.0
    %1044 = vmatprep.subr.mxu0 0.0
    %1045 = vmatpush1.msra.mxu0 0.0
    %1046 = vmatprep.subr.mxu0 0.0
    %1047 = vmatpush1.msra.mxu0 0.0
    %1048 = vmatprep.subr.mxu0 0.0
    %1049 = vmatpush1.msra.mxu0 0.0
    %1050 = vmatprep.subr.mxu0 0.0
    %1051 = vmatpush1.msra.mxu0 0.0
    %1052 = vmatprep.subr.mxu0 0.0
    %1053 = vmatpush1.msra.mxu0 0.0
    %1054 = vmatprep.subr.mxu0 0.0
    %1055 = vmatpush1.msra.mxu0 0.0
    %1056 = vmatprep.subr.mxu0 0.0
    %1057 = vmatpush1.msra.mxu0 0.0
    %1058 = vmatprep.subr.mxu0 0.0
    %1059 = vmatpush1.msra.mxu0 0.0
    %1060 = vmatprep.subr.mxu0 0.0
    %1061 = vmatpush1.msra.mxu0 0.0
    %1062 = vmatprep.subr.mxu0 0.0
    %1063 = vmatpush1.msra.mxu0 0.0
    %1064 = vmatprep.subr.mxu0 0.0
    %1065 = vmatpush1.msra.mxu0 0.0
    %1066 = vmatprep.subr.mxu0 0.0
    %1067 = vmatpush1.msra.mxu0 0.0
    %1068 = vmatprep.subr.mxu0 0.0
    %1069 = vmatpush1.msra.mxu0 0.0
    %1070 = vmatprep.subr.mxu0 0.0
    %1071 = vmatpush1.msra.mxu0 0.0
    %1072 = vmatprep.subr.mxu0 0.0
    %1073 = vmatpush1.msra.mxu0 0.0
    %1074 = vmatprep.subr.mxu0 0.0
    %1075 = vmatpush1.msra.mxu0 0.0
    %1076 = vmatprep.subr.mxu0 0.0
    %1077 = vmatpush1.msra.mxu0 0.0
    %1078 = vmatprep.subr.mxu0 0.0
    %1079 = vmatpush1.msra.mxu0 0.0
    %1080 = vmatprep.mubr.f32.mxu0 0.0
    %1081 = vmatmul.mubr.f32.gmra.mrb[0].mxu0 %v1014
    %v1082 = vpop.f32.mrb[0].mxu0
    %v1083 = vadd.f32 %v140, %v1082
    %v1084 = vpop.f32.mrb[0].mxu0
    %1085 = vdwg.mxu0
    %s1086 = scalar_lea.vmem [#allocation2], 10
    %1087 = vst [vmem:[%s1086] sm:$0x3] %v1083
    %s1088 = scalar_lea.vmem %s0, 12
    %v1089 = vld [vmem:[%s1088] sm:$0x3]
    %1090 = vmatprep.subr.mxu0 0.0
    %1091 = vmatpush1.msra.mxu0 %v27
    %1092 = vmatprep.subr.mxu0 0.0
    %1093 = vmatpush1.msra.mxu0 %v28
    %1094 = vmatprep.subr.mxu0 0.0
    %1095 = vmatpush1.msra.mxu0 %v29
    %1096 = vmatprep.subr.mxu0 0.0
    %1097 = vmatpush1.msra.mxu0 %v30
    %1098 = vmatprep.subr.mxu0 0.0
    %1099 = vmatpush1.msra.mxu0 0.0
    %1100 = vmatprep.subr.mxu0 0.0
    %1101 = vmatpush1.msra.mxu0 0.0
    %1102 = vmatprep.subr.mxu0 0.0
    %1103 = vmatpush1.msra.mxu0 0.0
    %1104 = vmatprep.subr.mxu0 0.0
    %1105 = vmatpush1.msra.mxu0 0.0
    %1106 = vmatprep.subr.mxu0 0.0
    %1107 = vmatpush1.msra.mxu0 0.0
    %1108 = vmatprep.subr.mxu0 0.0
    %1109 = vmatpush1.msra.mxu0 0.0
    %1110 = vmatprep.subr.mxu0 0.0
    %1111 = vmatpush1.msra.mxu0 0.0
    %1112 = vmatprep.subr.mxu0 0.0
    %1113 = vmatpush1.msra.mxu0 0.0
    %1114 = vmatprep.subr.mxu0 0.0
    %1115 = vmatpush1.msra.mxu0 0.0
    %1116 = vmatprep.subr.mxu0 0.0
    %1117 = vmatpush1.msra.mxu0 0.0
    %1118 = vmatprep.subr.mxu0 0.0
    %1119 = vmatpush1.msra.mxu0 0.0
    %1120 = vmatprep.subr.mxu0 0.0
    %1121 = vmatpush1.msra.mxu0 0.0
    %1122 = vmatprep.subr.mxu0 0.0
    %1123 = vmatpush1.msra.mxu0 0.0
    %1124 = vmatprep.subr.mxu0 0.0
    %1125 = vmatpush1.msra.mxu0 0.0
    %1126 = vmatprep.subr.mxu0 0.0
    %1127 = vmatpush1.msra.mxu0 0.0
    %1128 = vmatprep.subr.mxu0 0.0
    %1129 = vmatpush1.msra.mxu0 0.0
    %1130 = vmatprep.subr.mxu0 0.0
    %1131 = vmatpush1.msra.mxu0 0.0
    %1132 = vmatprep.subr.mxu0 0.0
    %1133 = vmatpush1.msra.mxu0 0.0
    %1134 = vmatprep.subr.mxu0 0.0
    %1135 = vmatpush1.msra.mxu0 0.0
    %1136 = vmatprep.subr.mxu0 0.0
    %1137 = vmatpush1.msra.mxu0 0.0
    %1138 = vmatprep.subr.mxu0 0.0
    %1139 = vmatpush1.msra.mxu0 0.0
    %1140 = vmatprep.subr.mxu0 0.0
    %1141 = vmatpush1.msra.mxu0 0.0
    %1142 = vmatprep.subr.mxu0 0.0
    %1143 = vmatpush1.msra.mxu0 0.0
    %1144 = vmatprep.subr.mxu0 0.0
    %1145 = vmatpush1.msra.mxu0 0.0
    %1146 = vmatprep.subr.mxu0 0.0
    %1147 = vmatpush1.msra.mxu0 0.0
    %1148 = vmatprep.subr.mxu0 0.0
    %1149 = vmatpush1.msra.mxu0 0.0
    %1150 = vmatprep.subr.mxu0 0.0
    %1151 = vmatpush1.msra.mxu0 0.0
    %1152 = vmatprep.subr.mxu0 0.0
    %1153 = vmatpush1.msra.mxu0 0.0
    %1154 = vmatprep.mubr.f32.mxu0 0.0
    %1155 = vmatmul.mubr.f32.gmra.mrb[0].mxu0 %v1014
    %v1156 = vpop.f32.mrb[0].mxu0
    %v1157 = vadd.f32 0.0, %v1156
    %v1158 = vpop.f32.mrb[0].mxu0
    %1159 = vdwg.mxu0
    %v1160 = vadd.f32 %v1089, %v1157
    %v1161 = vxor.u32 %v1160, 2147483648
    %v1162 = vmul.f32 %v1161, 1.442695
    %v1163 = vpow.pop %v1162
    %v1164 = vadd.f32 %v1163, 1.0
    %v1165 = vrcp.pop %v1164
    %v1166 = vmul.f32 1.0, %v1165
    %v1167 = vtanh.pop %v1160
    %v1168 = vmul.f32 %v1166, %v1004
    %1170 = vrot.lane.b32.xlu0 %v1167, 64
    %v1171 = vpop.permute.xlu0 %1170
    %v1173 = vmul.f32 %v1166, %v1171
    %1175 = vrot.lane.b32.xlu0 %v1173, 32
    %v1176 = vpop.permute.xlu0 %1175
    %v1178 = vadd.f32 %v1168, %v1176
    %v1179 = vtanh.pop %v1178
    %1181 = vrot.lane.b32.xlu0 %v1179, 64
    %v1182 = vpop.permute.xlu0 %1181
    %v1184 = vmul.f32 %v1166, %v1182
    %1186 = vrot.lane.b32.xlu0 %v1184, 32
    %v1187 = vpop.permute.xlu0 %1186
    %v1188 = vsel %vm37, %v1187, 0
    %1190 = vmatprep.subr.mxu0 0.0
    %1191 = vmatpush1.msra.mxu0 %v31
    %1192 = vmatprep.subr.mxu0 0.0
    %1193 = vmatpush1.msra.mxu0 %v32
    %1194 = vmatprep.subr.mxu0 0.0
    %1195 = vmatpush1.msra.mxu0 %v33
    %1196 = vmatprep.subr.mxu0 0.0
    %1197 = vmatpush1.msra.mxu0 %v34
    %1198 = vmatprep.subr.mxu0 0.0
    %1199 = vmatpush1.msra.mxu0 0.0
    %1200 = vmatprep.subr.mxu0 0.0
    %1201 = vmatpush1.msra.mxu0 0.0
    %1202 = vmatprep.subr.mxu0 0.0
    %1203 = vmatpush1.msra.mxu0 0.0
    %1204 = vmatprep.subr.mxu0 0.0
    %1205 = vmatpush1.msra.mxu0 0.0
    %1206 = vmatprep.subr.mxu0 0.0
    %1207 = vmatpush1.msra.mxu0 0.0
    %1208 = vmatprep.subr.mxu0 0.0
    %1209 = vmatpush1.msra.mxu0 0.0
    %1210 = vmatprep.subr.mxu0 0.0
    %1211 = vmatpush1.msra.mxu0 0.0
    %1212 = vmatprep.subr.mxu0 0.0
    %1213 = vmatpush1.msra.mxu0 0.0
    %1214 = vmatprep.subr.mxu0 0.0
    %1215 = vmatpush1.msra.mxu0 0.0
    %1216 = vmatprep.subr.mxu0 0.0
    %1217 = vmatpush1.msra.mxu0 0.0
    %1218 = vmatprep.subr.mxu0 0.0
    %1219 = vmatpush1.msra.mxu0 0.0
    %1220 = vmatprep.subr.mxu0 0.0
    %1221 = vmatpush1.msra.mxu0 0.0
    %1222 = vmatprep.subr.mxu0 0.0
    %1223 = vmatpush1.msra.mxu0 0.0
    %1224 = vmatprep.subr.mxu0 0.0
    %1225 = vmatpush1.msra.mxu0 0.0
    %1226 = vmatprep.subr.mxu0 0.0
    %1227 = vmatpush1.msra.mxu0 0.0
    %1228 = vmatprep.subr.mxu0 0.0
    %1229 = vmatpush1.msra.mxu0 0.0
    %1230 = vmatprep.subr.mxu0 0.0
    %1231 = vmatpush1.msra.mxu0 0.0
    %1232 = vmatprep.subr.mxu0 0.0
    %1233 = vmatpush1.msra.mxu0 0.0
    %1234 = vmatprep.subr.mxu0 0.0
    %1235 = vmatpush1.msra.mxu0 0.0
    %1236 = vmatprep.subr.mxu0 0.0
    %1237 = vmatpush1.msra.mxu0 0.0
    %1238 = vmatprep.subr.mxu0 0.0
    %1239 = vmatpush1.msra.mxu0 0.0
    %1240 = vmatprep.subr.mxu0 0.0
    %1241 = vmatpush1.msra.mxu0 0.0
    %1242 = vmatprep.subr.mxu0 0.0
    %1243 = vmatpush1.msra.mxu0 0.0
    %1244 = vmatprep.subr.mxu0 0.0
    %1245 = vmatpush1.msra.mxu0 0.0
    %1246 = vmatprep.subr.mxu0 0.0
    %1247 = vmatpush1.msra.mxu0 0.0
    %1248 = vmatprep.subr.mxu0 0.0
    %1249 = vmatpush1.msra.mxu0 0.0
    %1250 = vmatprep.subr.mxu0 0.0
    %1251 = vmatpush1.msra.mxu0 0.0
    %1252 = vmatprep.subr.mxu0 0.0
    %1253 = vmatpush1.msra.mxu0 0.0
    %1254 = vmatprep.mubr.f32.mxu0 0.0
    %1255 = vmatmul.mubr.f32.gmra.mrb[0].mxu0 %v1188
    %v1256 = vpop.f32.mrb[0].mxu0
    %v1257 = vadd.f32 %v140, %v1256
    %v1258 = vpop.f32.mrb[0].mxu0
    %1259 = vdwg.mxu0
    %s1260 = scalar_lea.vmem [#allocation2], 12
    %1261 = vst [vmem:[%s1260] sm:$0x3] %v1257
    %s1262 = scalar_lea.vmem %s0, 14
    %v1263 = vld [vmem:[%s1262] sm:$0x3]
    %1264 = vmatprep.subr.mxu0 0.0
    %1265 = vmatpush1.msra.mxu0 %v27
    %1266 = vmatprep.subr.mxu0 0.0
    %1267 = vmatpush1.msra.mxu0 %v28
    %1268 = vmatprep.subr.mxu0 0.0
    %1269 = vmatpush1.msra.mxu0 %v29
    %1270 = vmatprep.subr.mxu0 0.0
    %1271 = vmatpush1.msra.mxu0 %v30
    %1272 = vmatprep.subr.mxu0 0.0
    %1273 = vmatpush1.msra.mxu0 0.0
    %1274 = vmatprep.subr.mxu0 0.0
    %1275 = vmatpush1.msra.mxu0 0.0
    %1276 = vmatprep.subr.mxu0 0.0
    %1277 = vmatpush1.msra.mxu0 0.0
    %1278 = vmatprep.subr.mxu0 0.0
    %1279 = vmatpush1.msra.mxu0 0.0
    %1280 = vmatprep.subr.mxu0 0.0
    %1281 = vmatpush1.msra.mxu0 0.0
    %1282 = vmatprep.subr.mxu0 0.0
    %1283 = vmatpush1.msra.mxu0 0.0
    %1284 = vmatprep.subr.mxu0 0.0
    %1285 = vmatpush1.msra.mxu0 0.0
    %1286 = vmatprep.subr.mxu0 0.0
    %1287 = vmatpush1.msra.mxu0 0.0
    %1288 = vmatprep.subr.mxu0 0.0
    %1289 = vmatpush1.msra.mxu0 0.0
    %1290 = vmatprep.subr.mxu0 0.0
    %1291 = vmatpush1.msra.mxu0 0.0
    %1292 = vmatprep.subr.mxu0 0.0
    %1293 = vmatpush1.msra.mxu0 0.0
    %1294 = vmatprep.subr.mxu0 0.0
    %1295 = vmatpush1.msra.mxu0 0.0
    %1296 = vmatprep.subr.mxu0 0.0
    %1297 = vmatpush1.msra.mxu0 0.0
    %1298 = vmatprep.subr.mxu0 0.0
    %1299 = vmatpush1.msra.mxu0 0.0
    %1300 = vmatprep.subr.mxu0 0.0
    %1301 = vmatpush1.msra.mxu0 0.0
    %1302 = vmatprep.subr.mxu0 0.0
    %1303 = vmatpush1.msra.mxu0 0.0
    %1304 = vmatprep.subr.mxu0 0.0
    %1305 = vmatpush1.msra.mxu0 0.0
    %1306 = vmatprep.subr.mxu0 0.0
    %1307 = vmatpush1.msra.mxu0 0.0
    %1308 = vmatprep.subr.mxu0 0.0
    %1309 = vmatpush1.msra.mxu0 0.0
    %1310 = vmatprep.subr.mxu0 0.0
    %1311 = vmatpush1.msra.mxu0 0.0
    %1312 = vmatprep.subr.mxu0 0.0
    %1313 = vmatpush1.msra.mxu0 0.0
    %1314 = vmatprep.subr.mxu0 0.0
    %1315 = vmatpush1.msra.mxu0 0.0
    %1316 = vmatprep.subr.mxu0 0.0
    %1317 = vmatpush1.msra.mxu0 0.0
    %1318 = vmatprep.subr.mxu0 0.0
    %1319 = vmatpush1.msra.mxu0 0.0
    %1320 = vmatprep.subr.mxu0 0.0
    %1321 = vmatpush1.msra.mxu0 0.0
    %1322 = vmatprep.subr.mxu0 0.0
    %1323 = vmatpush1.msra.mxu0 0.0
    %1324 = vmatprep.subr.mxu0 0.0
    %1325 = vmatpush1.msra.mxu0 0.0
    %1326 = vmatprep.subr.mxu0 0.0
    %1327 = vmatpush1.msra.mxu0 0.0
    %1328 = vmatprep.mubr.f32.mxu0 0.0
    %1329 = vmatmul.mubr.f32.gmra.mrb[0].mxu0 %v1188
    %v1330 = vpop.f32.mrb[0].mxu0
    %v1331 = vadd.f32 0.0, %v1330
    %v1332 = vpop.f32.mrb[0].mxu0
    %1333 = vdwg.mxu0
    %v1334 = vadd.f32 %v1263, %v1331
    %v1335 = vxor.u32 %v1334, 2147483648
    %v1336 = vmul.f32 %v1335, 1.442695
    %v1337 = vpow.pop %v1336
    %v1338 = vadd.f32 %v1337, 1.0
    %v1339 = vrcp.pop %v1338
    %v1340 = vmul.f32 1.0, %v1339
    %v1341 = vtanh.pop %v1334
    %v1342 = vmul.f32 %v1340, %v1178
    %1344 = vrot.lane.b32.xlu0 %v1341, 64
    %v1345 = vpop.permute.xlu0 %1344
    %v1347 = vmul.f32 %v1340, %v1345
    %1349 = vrot.lane.b32.xlu0 %v1347, 32
    %v1350 = vpop.permute.xlu0 %1349
    %v1352 = vadd.f32 %v1342, %v1350
    %v1353 = vtanh.pop %v1352
    %1355 = vrot.lane.b32.xlu0 %v1353, 64
    %v1356 = vpop.permute.xlu0 %1355
    %v1358 = vmul.f32 %v1340, %v1356
    %1360 = vrot.lane.b32.xlu0 %v1358, 32
    %v1361 = vpop.permute.xlu0 %1360
    %v1362 = vsel %vm37, %v1361, 0
    %1364 = vmatprep.subr.mxu0 0.0
    %1365 = vmatpush1.msra.mxu0 %v31
    %1366 = vmatprep.subr.mxu0 0.0
    %1367 = vmatpush1.msra.mxu0 %v32
    %1368 = vmatprep.subr.mxu0 0.0
    %1369 = vmatpush1.msra.mxu0 %v33
    %1370 = vmatprep.subr.mxu0 0.0
    %1371 = vmatpush1.msra.mxu0 %v34
    %1372 = vmatprep.subr.mxu0 0.0
    %1373 = vmatpush1.msra.mxu0 0.0
    %1374 = vmatprep.subr.mxu0 0.0
    %1375 = vmatpush1.msra.mxu0 0.0
    %1376 = vmatprep.subr.mxu0 0.0
    %1377 = vmatpush1.msra.mxu0 0.0
    %1378 = vmatprep.subr.mxu0 0.0
    %1379 = vmatpush1.msra.mxu0 0.0
    %1380 = vmatprep.subr.mxu0 0.0
    %1381 = vmatpush1.msra.mxu0 0.0
    %1382 = vmatprep.subr.mxu0 0.0
    %1383 = vmatpush1.msra.mxu0 0.0
    %1384 = vmatprep.subr.mxu0 0.0
    %1385 = vmatpush1.msra.mxu0 0.0
    %1386 = vmatprep.subr.mxu0 0.0
    %1387 = vmatpush1.msra.mxu0 0.0
    %1388 = vmatprep.subr.mxu0 0.0
    %1389 = vmatpush1.msra.mxu0 0.0
    %1390 = vmatprep.subr.mxu0 0.0
    %1391 = vmatpush1.msra.mxu0 0.0
    %1392 = vmatprep.subr.mxu0 0.0
    %1393 = vmatpush1.msra.mxu0 0.0
    %1394 = vmatprep.subr.mxu0 0.0
    %1395 = vmatpush1.msra.mxu0 0.0
    %1396 = vmatprep.subr.mxu0 0.0
    %1397 = vmatpush1.msra.mxu0 0.0
    %1398 = vmatprep.subr.mxu0 0.0
    %1399 = vmatpush1.msra.mxu0 0.0
    %1400 = vmatprep.subr.mxu0 0.0
    %1401 = vmatpush1.msra.mxu0 0.0
    %1402 = vmatprep.subr.mxu0 0.0
    %1403 = vmatpush1.msra.mxu0 0.0
    %1404 = vmatprep.subr.mxu0 0.0
    %1405 = vmatpush1.msra.mxu0 0.0
    %1406 = vmatprep.subr.mxu0 0.0
    %1407 = vmatpush1.msra.mxu0 0.0
    %1408 = vmatprep.subr.mxu0 0.0
    %1409 = vmatpush1.msra.mxu0 0.0
    %1410 = vmatprep.subr.mxu0 0.0
    %1411 = vmatpush1.msra.mxu0 0.0
    %1412 = vmatprep.subr.mxu0 0.0
    %1413 = vmatpush1.msra.mxu0 0.0
    %1414 = vmatprep.subr.mxu0 0.0
    %1415 = vmatpush1.msra.mxu0 0.0
    %1416 = vmatprep.subr.mxu0 0.0
    %1417 = vmatpush1.msra.mxu0 0.0
    %1418 = vmatprep.subr.mxu0 0.0
    %1419 = vmatpush1.msra.mxu0 0.0
    %1420 = vmatprep.subr.mxu0 0.0
    %1421 = vmatpush1.msra.mxu0 0.0
    %1422 = vmatprep.subr.mxu0 0.0
    %1423 = vmatpush1.msra.mxu0 0.0
    %1424 = vmatprep.subr.mxu0 0.0
    %1425 = vmatpush1.msra.mxu0 0.0
    %1426 = vmatprep.subr.mxu0 0.0
    %1427 = vmatpush1.msra.mxu0 0.0
    %1428 = vmatprep.mubr.f32.mxu0 0.0
    %1429 = vmatmul.mubr.f32.gmra.mrb[0].mxu0 %v1362
    %v1430 = vpop.f32.mrb[0].mxu0
    %v1431 = vadd.f32 %v140, %v1430
    %v1432 = vpop.f32.mrb[0].mxu0
    %1433 = vdwg.mxu0
    %s1434 = scalar_lea.vmem [#allocation2], 14
    %1435 = vst [vmem:[%s1434] sm:$0x3] %v1431
    %v1436 = vld [vmem:[%s4] sm:$0xff]
    %v1437 = vld [vmem:[%s4 + $0x8] sm:$0xff]
    %v1438 = vld [vmem:[%s4 + $0x10] sm:$0xff]
    %v1439 = vld [vmem:[%s4 + $0x18] sm:$0xff]
    %v1440 = vld [vmem:[#allocation2] sm:$0x3]
    %1441 = vmatprep.subr.mxu0 0.0
    %1442 = vmatpush1.msra.mxu0 %v1436
    %1443 = vmatprep.subr.mxu0 0.0
    %1444 = vmatpush1.msra.mxu0 %v1437
    %1445 = vmatprep.subr.mxu0 0.0
    %1446 = vmatpush1.msra.mxu0 %v1438
    %1447 = vmatprep.subr.mxu0 0.0
    %1448 = vmatpush1.msra.mxu0 %v1439
    %1449 = vmatprep.subr.mxu0 0.0
    %1450 = vmatpush1.msra.mxu0 0.0
    %1451 = vmatprep.subr.mxu0 0.0
    %1452 = vmatpush1.msra.mxu0 0.0
    %1453 = vmatprep.subr.mxu0 0.0
    %1454 = vmatpush1.msra.mxu0 0.0
    %1455 = vmatprep.subr.mxu0 0.0
    %1456 = vmatpush1.msra.mxu0 0.0
    %1457 = vmatprep.subr.mxu0 0.0
    %1458 = vmatpush1.msra.mxu0 0.0
    %1459 = vmatprep.subr.mxu0 0.0
    %1460 = vmatpush1.msra.mxu0 0.0
    %1461 = vmatprep.subr.mxu0 0.0
    %1462 = vmatpush1.msra.mxu0 0.0
    %1463 = vmatprep.subr.mxu0 0.0
    %1464 = vmatpush1.msra.mxu0 0.0
    %1465 = vmatprep.subr.mxu0 0.0
    %1466 = vmatpush1.msra.mxu0 0.0
    %1467 = vmatprep.subr.mxu0 0.0
    %1468 = vmatpush1.msra.mxu0 0.0
    %1469 = vmatprep.subr.mxu0 0.0
    %1470 = vmatpush1.msra.mxu0 0.0
    %1471 = vmatprep.subr.mxu0 0.0
    %1472 = vmatpush1.msra.mxu0 0.0
    %1473 = vmatprep.subr.mxu0 0.0
    %1474 = vmatpush1.msra.mxu0 0.0
    %1475 = vmatprep.subr.mxu0 0.0
    %1476 = vmatpush1.msra.mxu0 0.0
    %1477 = vmatprep.subr.mxu0 0.0
    %1478 = vmatpush1.msra.mxu0 0.0
    %1479 = vmatprep.subr.mxu0 0.0
    %1480 = vmatpush1.msra.mxu0 0.0
    %1481 = vmatprep.subr.mxu0 0.0
    %1482 = vmatpush1.msra.mxu0 0.0
    %1483 = vmatprep.subr.mxu0 0.0
    %1484 = vmatpush1.msra.mxu0 0.0
    %1485 = vmatprep.subr.mxu0 0.0
    %1486 = vmatpush1.msra.mxu0 0.0
    %1487 = vmatprep.subr.mxu0 0.0
    %1488 = vmatpush1.msra.mxu0 0.0
    %1489 = vmatprep.subr.mxu0 0.0
    %1490 = vmatpush1.msra.mxu0 0.0
    %1491 = vmatprep.subr.mxu0 0.0
    %1492 = vmatpush1.msra.mxu0 0.0
    %1493 = vmatprep.subr.mxu0 0.0
    %1494 = vmatpush1.msra.mxu0 0.0
    %1495 = vmatprep.subr.mxu0 0.0
    %1496 = vmatpush1.msra.mxu0 0.0
    %1497 = vmatprep.subr.mxu0 0.0
    %1498 = vmatpush1.msra.mxu0 0.0
    %1499 = vmatprep.subr.mxu0 0.0
    %1500 = vmatpush1.msra.mxu0 0.0
    %1501 = vmatprep.subr.mxu0 0.0
    %1502 = vmatpush1.msra.mxu0 0.0
    %1503 = vmatprep.subr.mxu0 0.0
    %1504 = vmatpush1.msra.mxu0 0.0
    %1505 = vmatprep.mubr.f32.mxu0 0.0
    %1506 = vmatmul.mubr.f32.gmra.mrb[0].mxu0 %v39
    %v1507 = vpop.f32.mrb[0].mxu0
    %v1508 = vadd.f32 0.0, %v1507
    %v1509 = vpop.f32.mrb[0].mxu0
    %1510 = vdwg.mxu0
    %v1511 = vadd.f32 %v1440, %v1508
    %v1512 = vxor.u32 %v1511, 2147483648
    %v1513 = vmul.f32 %v1512, 1.442695
    %v1514 = vpow.pop %v1513
    %v1515 = vadd.f32 %v1514, 1.0
    %v1516 = vrcp.pop %v1515
    %v1517 = vmul.f32 1.0, %v1516
    %v1518 = vtanh.pop %v1511
    %v1519 = vmul.f32 %v1517, 0.0
    %1521 = vrot.lane.b32.xlu0 %v1518, 64
    %v1522 = vpop.permute.xlu0 %1521
    %v1524 = vmul.f32 %v1517, %v1522
    %1526 = vrot.lane.b32.xlu0 %v1524, 32
    %v1527 = vpop.permute.xlu0 %1526
    %v1529 = vadd.f32 %v1519, %v1527
    %v1530 = vtanh.pop %v1529
    %1532 = vrot.lane.b32.xlu0 %v1530, 64
    %v1533 = vpop.permute.xlu0 %1532
    %v1535 = vmul.f32 %v1517, %v1533
    %v1536 = vld [vmem:[%s390] sm:$0x3]
    %1538 = vrot.lane.b32.xlu0 %v1535, 32
    %v1539 = vpop.permute.xlu0 %1538
    %v1540 = vsel %vm37, %v1539, 0
    %1542 = vmatprep.subr.mxu0 0.0
    %1543 = vmatpush1.msra.mxu0 %v1436
    %1544 = vmatprep.subr.mxu0 0.0
    %1545 = vmatpush1.msra.mxu0 %v1437
    %1546 = vmatprep.subr.mxu0 0.0
    %1547 = vmatpush1.msra.mxu0 %v1438
    %1548 = vmatprep.subr.mxu0 0.0
    %1549 = vmatpush1.msra.mxu0 %v1439
    %1550 = vmatprep.subr.mxu0 0.0
    %1551 = vmatpush1.msra.mxu0 0.0
    %1552 = vmatprep.subr.mxu0 0.0
    %1553 = vmatpush1.msra.mxu0 0.0
    %1554 = vmatprep.subr.mxu0 0.0
    %1555 = vmatpush1.msra.mxu0 0.0
    %1556 = vmatprep.subr.mxu0 0.0
    %1557 = vmatpush1.msra.mxu0 0.0
    %1558 = vmatprep.subr.mxu0 0.0
    %1559 = vmatpush1.msra.mxu0 0.0
    %1560 = vmatprep.subr.mxu0 0.0
    %1561 = vmatpush1.msra.mxu0 0.0
    %1562 = vmatprep.subr.mxu0 0.0
    %1563 = vmatpush1.msra.mxu0 0.0
    %1564 = vmatprep.subr.mxu0 0.0
    %1565 = vmatpush1.msra.mxu0 0.0
    %1566 = vmatprep.subr.mxu0 0.0
    %1567 = vmatpush1.msra.mxu0 0.0
    %1568 = vmatprep.subr.mxu0 0.0
    %1569 = vmatpush1.msra.mxu0 0.0
    %1570 = vmatprep.subr.mxu0 0.0
    %1571 = vmatpush1.msra.mxu0 0.0
    %1572 = vmatprep.subr.mxu0 0.0
    %1573 = vmatpush1.msra.mxu0 0.0
    %1574 = vmatprep.subr.mxu0 0.0
    %1575 = vmatpush1.msra.mxu0 0.0
    %1576 = vmatprep.subr.mxu0 0.0
    %1577 = vmatpush1.msra.mxu0 0.0
    %1578 = vmatprep.subr.mxu0 0.0
    %1579 = vmatpush1.msra.mxu0 0.0
    %1580 = vmatprep.subr.mxu0 0.0
    %1581 = vmatpush1.msra.mxu0 0.0
    %1582 = vmatprep.subr.mxu0 0.0
    %1583 = vmatpush1.msra.mxu0 0.0
    %1584 = vmatprep.subr.mxu0 0.0
    %1585 = vmatpush1.msra.mxu0 0.0
    %1586 = vmatprep.subr.mxu0 0.0
    %1587 = vmatpush1.msra.mxu0 0.0
    %1588 = vmatprep.subr.mxu0 0.0
    %1589 = vmatpush1.msra.mxu0 0.0
    %1590 = vmatprep.subr.mxu0 0.0
    %1591 = vmatpush1.msra.mxu0 0.0
    %1592 = vmatprep.subr.mxu0 0.0
    %1593 = vmatpush1.msra.mxu0 0.0
    %1594 = vmatprep.subr.mxu0 0.0
    %1595 = vmatpush1.msra.mxu0 0.0
    %1596 = vmatprep.subr.mxu0 0.0
    %1597 = vmatpush1.msra.mxu0 0.0
    %1598 = vmatprep.subr.mxu0 0.0
    %1599 = vmatpush1.msra.mxu0 0.0
    %1600 = vmatprep.subr.mxu0 0.0
    %1601 = vmatpush1.msra.mxu0 0.0
    %1602 = vmatprep.subr.mxu0 0.0
    %1603 = vmatpush1.msra.mxu0 0.0
    %1604 = vmatprep.subr.mxu0 0.0
    %1605 = vmatpush1.msra.mxu0 0.0
    %1606 = vmatprep.mubr.f32.mxu0 0.0
    %1607 = vmatmul.mubr.f32.gmra.mrb[0].mxu0 %v1540
    %v1608 = vpop.f32.mrb[0].mxu0
    %v1609 = vadd.f32 0.0, %v1608
    %v1610 = vpop.f32.mrb[0].mxu0
    %1611 = vdwg.mxu0
    %v1612 = vadd.f32 %v1536, %v1609
    %v1613 = vxor.u32 %v1612, 2147483648
    %v1614 = vmul.f32 %v1613, 1.442695
    %v1615 = vpow.pop %v1614
    %v1616 = vadd.f32 %v1615, 1.0
    %v1617 = vrcp.pop %v1616
    %v1618 = vmul.f32 1.0, %v1617
    %v1619 = vtanh.pop %v1612
    %v1620 = vmul.f32 %v1618, %v1529
    %1622 = vrot.lane.b32.xlu0 %v1619, 64
    %v1623 = vpop.permute.xlu0 %1622
    %v1625 = vmul.f32 %v1618, %v1623
    %1627 = vrot.lane.b32.xlu0 %v1625, 32
    %v1628 = vpop.permute.xlu0 %1627
    %v1630 = vadd.f32 %v1620, %v1628
    %v1631 = vtanh.pop %v1630
    %1633 = vrot.lane.b32.xlu0 %v1631, 64
    %v1634 = vpop.permute.xlu0 %1633
    %v1636 = vmul.f32 %v1618, %v1634
    %v1637 = vld [vmem:[%s564] sm:$0x3]
    %1639 = vrot.lane.b32.xlu0 %v1636, 32
    %v1640 = vpop.permute.xlu0 %1639
    %v1641 = vsel %vm37, %v1640, 0
    %1643 = vmatprep.subr.mxu0 0.0
    %1644 = vmatpush1.msra.mxu0 %v1436
    %1645 = vmatprep.subr.mxu0 0.0
    %1646 = vmatpush1.msra.mxu0 %v1437
    %1647 = vmatprep.subr.mxu0 0.0
    %1648 = vmatpush1.msra.mxu0 %v1438
    %1649 = vmatprep.subr.mxu0 0.0
    %1650 = vmatpush1.msra.mxu0 %v1439
    %1651 = vmatprep.subr.mxu0 0.0
    %1652 = vmatpush1.msra.mxu0 0.0
    %1653 = vmatprep.subr.mxu0 0.0
    %1654 = vmatpush1.msra.mxu0 0.0
    %1655 = vmatprep.subr.mxu0 0.0
    %1656 = vmatpush1.msra.mxu0 0.0
    %1657 = vmatprep.subr.mxu0 0.0
    %1658 = vmatpush1.msra.mxu0 0.0
    %1659 = vmatprep.subr.mxu0 0.0
    %1660 = vmatpush1.msra.mxu0 0.0
    %1661 = vmatprep.subr.mxu0 0.0
    %1662 = vmatpush1.msra.mxu0 0.0
    %1663 = vmatprep.subr.mxu0 0.0
    %1664 = vmatpush1.msra.mxu0 0.0
    %1665 = vmatprep.subr.mxu0 0.0
    %1666 = vmatpush1.msra.mxu0 0.0
    %1667 = vmatprep.subr.mxu0 0.0
    %1668 = vmatpush1.msra.mxu0 0.0
    %1669 = vmatprep.subr.mxu0 0.0
    %1670 = vmatpush1.msra.mxu0 0.0
    %1671 = vmatprep.subr.mxu0 0.0
    %1672 = vmatpush1.msra.mxu0 0.0
    %1673 = vmatprep.subr.mxu0 0.0
    %1674 = vmatpush1.msra.mxu0 0.0
    %1675 = vmatprep.subr.mxu0 0.0
    %1676 = vmatpush1.msra.mxu0 0.0
    %1677 = vmatprep.subr.mxu0 0.0
    %1678 = vmatpush1.msra.mxu0 0.0
    %1679 = vmatprep.subr.mxu0 0.0
    %1680 = vmatpush1.msra.mxu0 0.0
    %1681 = vmatprep.subr.mxu0 0.0
    %1682 = vmatpush1.msra.mxu0 0.0
    %1683 = vmatprep.subr.mxu0 0.0
    %1684 = vmatpush1.msra.mxu0 0.0
    %1685 = vmatprep.subr.mxu0 0.0
    %1686 = vmatpush1.msra.mxu0 0.0
    %1687 = vmatprep.subr.mxu0 0.0
    %1688 = vmatpush1.msra.mxu0 0.0
    %1689 = vmatprep.subr.mxu0 0.0
    %1690 = vmatpush1.msra.mxu0 0.0
    %1691 = vmatprep.subr.mxu0 0.0
    %1692 = vmatpush1.msra.mxu0 0.0
    %1693 = vmatprep.subr.mxu0 0.0
    %1694 = vmatpush1.msra.mxu0 0.0
    %1695 = vmatprep.subr.mxu0 0.0
    %1696 = vmatpush1.msra.mxu0 0.0
    %1697 = vmatprep.subr.mxu0 0.0
    %1698 = vmatpush1.msra.mxu0 0.0
    %1699 = vmatprep.subr.mxu0 0.0
    %1700 = vmatpush1.msra.mxu0 0.0
    %1701 = vmatprep.subr.mxu0 0.0
    %1702 = vmatpush1.msra.mxu0 0.0
    %1703 = vmatprep.subr.mxu0 0.0
    %1704 = vmatpush1.msra.mxu0 0.0
    %1705 = vmatprep.subr.mxu0 0.0
    %1706 = vmatpush1.msra.mxu0 0.0
    %1707 = vmatprep.mubr.f32.mxu0 0.0
    %1708 = vmatmul.mubr.f32.gmra.mrb[0].mxu0 %v1641
    %v1709 = vpop.f32.mrb[0].mxu0
    %v1710 = vadd.f32 0.0, %v1709
    %v1711 = vpop.f32.mrb[0].mxu0
    %1712 = vdwg.mxu0
    %v1713 = vadd.f32 %v1637, %v1710
    %v1714 = vxor.u32 %v1713, 2147483648
    %v1715 = vmul.f32 %v1714, 1.442695
    %v1716 = vpow.pop %v1715
    %v1717 = vadd.f32 %v1716, 1.0
    %v1718 = vrcp.pop %v1717
    %v1719 = vmul.f32 1.0, %v1718
    %v1720 = vtanh.pop %v1713
    %v1721 = vmul.f32 %v1719, %v1630
    %1723 = vrot.lane.b32.xlu0 %v1720, 64
    %v1724 = vpop.permute.xlu0 %1723
    %v1726 = vmul.f32 %v1719, %v1724
    %1728 = vrot.lane.b32.xlu0 %v1726, 32
    %v1729 = vpop.permute.xlu0 %1728
    %v1731 = vadd.f32 %v1721, %v1729
    %v1732 = vtanh.pop %v1731
    %1734 = vrot.lane.b32.xlu0 %v1732, 64
    %v1735 = vpop.permute.xlu0 %1734
    %v1737 = vmul.f32 %v1719, %v1735
    %v1738 = vld [vmem:[%s738] sm:$0x3]
    %1740 = vrot.lane.b32.xlu0 %v1737, 32
    %v1741 = vpop.permute.xlu0 %1740
    %v1742 = vsel %vm37, %v1741, 0
    %1744 = vmatprep.subr.mxu0 0.0
    %1745 = vmatpush1.msra.mxu0 %v1436
    %1746 = vmatprep.subr.mxu0 0.0
    %1747 = vmatpush1.msra.mxu0 %v1437
    %1748 = vmatprep.subr.mxu0 0.0
    %1749 = vmatpush1.msra.mxu0 %v1438
    %1750 = vmatprep.subr.mxu0 0.0
    %1751 = vmatpush1.msra.mxu0 %v1439
    %1752 = vmatprep.subr.mxu0 0.0
    %1753 = vmatpush1.msra.mxu0 0.0
    %1754 = vmatprep.subr.mxu0 0.0
    %1755 = vmatpush1.msra.mxu0 0.0
    %1756 = vmatprep.subr.mxu0 0.0
    %1757 = vmatpush1.msra.mxu0 0.0
    %1758 = vmatprep.subr.mxu0 0.0
    %1759 = vmatpush1.msra.mxu0 0.0
    %1760 = vmatprep.subr.mxu0 0.0
    %1761 = vmatpush1.msra.mxu0 0.0
    %1762 = vmatprep.subr.mxu0 0.0
    %1763 = vmatpush1.msra.mxu0 0.0
    %1764 = vmatprep.subr.mxu0 0.0
    %1765 = vmatpush1.msra.mxu0 0.0
    %1766 = vmatprep.subr.mxu0 0.0
    %1767 = vmatpush1.msra.mxu0 0.0
    %1768 = vmatprep.subr.mxu0 0.0
    %1769 = vmatpush1.msra.mxu0 0.0
    %1770 = vmatprep.subr.mxu0 0.0
    %1771 = vmatpush1.msra.mxu0 0.0
    %1772 = vmatprep.subr.mxu0 0.0
    %1773 = vmatpush1.msra.mxu0 0.0
    %1774 = vmatprep.subr.mxu0 0.0
    %1775 = vmatpush1.msra.mxu0 0.0
    %1776 = vmatprep.subr.mxu0 0.0
    %1777 = vmatpush1.msra.mxu0 0.0
    %1778 = vmatprep.subr.mxu0 0.0
    %1779 = vmatpush1.msra.mxu0 0.0
    %1780 = vmatprep.subr.mxu0 0.0
    %1781 = vmatpush1.msra.mxu0 0.0
    %1782 = vmatprep.subr.mxu0 0.0
    %1783 = vmatpush1.msra.mxu0 0.0
    %1784 = vmatprep.subr.mxu0 0.0
    %1785 = vmatpush1.msra.mxu0 0.0
    %1786 = vmatprep.subr.mxu0 0.0
    %1787 = vmatpush1.msra.mxu0 0.0
    %1788 = vmatprep.subr.mxu0 0.0
    %1789 = vmatpush1.msra.mxu0 0.0
    %1790 = vmatprep.subr.mxu0 0.0
    %1791 = vmatpush1.msra.mxu0 0.0
    %1792 = vmatprep.subr.mxu0 0.0
    %1793 = vmatpush1.msra.mxu0 0.0
    %1794 = vmatprep.subr.mxu0 0.0
    %1795 = vmatpush1.msra.mxu0 0.0
    %1796 = vmatprep.subr.mxu0 0.0
    %1797 = vmatpush1.msra.mxu0 0.0
    %1798 = vmatprep.subr.mxu0 0.0
    %1799 = vmatpush1.msra.mxu0 0.0
    %1800 = vmatprep.subr.mxu0 0.0
    %1801 = vmatpush1.msra.mxu0 0.0
    %1802 = vmatprep.subr.mxu0 0.0
    %1803 = vmatpush1.msra.mxu0 0.0
    %1804 = vmatprep.subr.mxu0 0.0
    %1805 = vmatpush1.msra.mxu0 0.0
    %1806 = vmatprep.subr.mxu0 0.0
    %1807 = vmatpush1.msra.mxu0 0.0
    %1808 = vmatprep.mubr.f32.mxu0 0.0
    %1809 = vmatmul.mubr.f32.gmra.mrb[0].mxu0 %v1742
    %v1810 = vpop.f32.mrb[0].mxu0
    %v1811 = vadd.f32 0.0, %v1810
    %v1812 = vpop.f32.mrb[0].mxu0
    %1813 = vdwg.mxu0
    %v1814 = vadd.f32 %v1738, %v1811
    %v1815 = vxor.u32 %v1814, 2147483648
    %v1816 = vmul.f32 %v1815, 1.442695
    %v1817 = vpow.pop %v1816
    %v1818 = vadd.f32 %v1817, 1.0
    %v1819 = vrcp.pop %v1818
    %v1820 = vmul.f32 1.0, %v1819
    %v1821 = vtanh.pop %v1814
    %v1822 = vmul.f32 %v1820, %v1731
    %1824 = vrot.lane.b32.xlu0 %v1821, 64
    %v1825 = vpop.permute.xlu0 %1824
    %v1827 = vmul.f32 %v1820, %v1825
    %1829 = vrot.lane.b32.xlu0 %v1827, 32
    %v1830 = vpop.permute.xlu0 %1829
    %v1832 = vadd.f32 %v1822, %v1830
    %v1833 = vtanh.pop %v1832
    %1835 = vrot.lane.b32.xlu0 %v1833, 64
    %v1836 = vpop.permute.xlu0 %1835
    %v1838 = vmul.f32 %v1820, %v1836
    %v1839 = vld [vmem:[%s912] sm:$0x3]
    %1841 = vrot.lane.b32.xlu0 %v1838, 32
    %v1842 = vpop.permute.xlu0 %1841
    %v1843 = vsel %vm37, %v1842, 0
    %1845 = vmatprep.subr.mxu0 0.0
    %1846 = vmatpush1.msra.mxu0 %v1436
    %1847 = vmatprep.subr.mxu0 0.0
    %1848 = vmatpush1.msra.mxu0 %v1437
    %1849 = vmatprep.subr.mxu0 0.0
    %1850 = vmatpush1.msra.mxu0 %v1438
    %1851 = vmatprep.subr.mxu0 0.0
    %1852 = vmatpush1.msra.mxu0 %v1439
    %1853 = vmatprep.subr.mxu0 0.0
    %1854 = vmatpush1.msra.mxu0 0.0
    %1855 = vmatprep.subr.mxu0 0.0
    %1856 = vmatpush1.msra.mxu0 0.0
    %1857 = vmatprep.subr.mxu0 0.0
    %1858 = vmatpush1.msra.mxu0 0.0
    %1859 = vmatprep.subr.mxu0 0.0
    %1860 = vmatpush1.msra.mxu0 0.0
    %1861 = vmatprep.subr.mxu0 0.0
    %1862 = vmatpush1.msra.mxu0 0.0
    %1863 = vmatprep.subr.mxu0 0.0
    %1864 = vmatpush1.msra.mxu0 0.0
    %1865 = vmatprep.subr.mxu0 0.0
    %1866 = vmatpush1.msra.mxu0 0.0
    %1867 = vmatprep.subr.mxu0 0.0
    %1868 = vmatpush1.msra.mxu0 0.0
    %1869 = vmatprep.subr.mxu0 0.0
    %1870 = vmatpush1.msra.mxu0 0.0
    %1871 = vmatprep.subr.mxu0 0.0
    %1872 = vmatpush1.msra.mxu0 0.0
    %1873 = vmatprep.subr.mxu0 0.0
    %1874 = vmatpush1.msra.mxu0 0.0
    %1875 = vmatprep.subr.mxu0 0.0
    %1876 = vmatpush1.msra.mxu0 0.0
    %1877 = vmatprep.subr.mxu0 0.0
    %1878 = vmatpush1.msra.mxu0 0.0
    %1879 = vmatprep.subr.mxu0 0.0
    %1880 = vmatpush1.msra.mxu0 0.0
    %1881 = vmatprep.subr.mxu0 0.0
    %1882 = vmatpush1.msra.mxu0 0.0
    %1883 = vmatprep.subr.mxu0 0.0
    %1884 = vmatpush1.msra.mxu0 0.0
    %1885 = vmatprep.subr.mxu0 0.0
    %1886 = vmatpush1.msra.mxu0 0.0
    %1887 = vmatprep.subr.mxu0 0.0
    %1888 = vmatpush1.msra.mxu0 0.0
    %1889 = vmatprep.subr.mxu0 0.0
    %1890 = vmatpush1.msra.mxu0 0.0
    %1891 = vmatprep.subr.mxu0 0.0
    %1892 = vmatpush1.msra.mxu0 0.0
    %1893 = vmatprep.subr.mxu0 0.0
    %1894 = vmatpush1.msra.mxu0 0.0
    %1895 = vmatprep.subr.mxu0 0.0
    %1896 = vmatpush1.msra.mxu0 0.0
    %1897 = vmatprep.subr.mxu0 0.0
    %1898 = vmatpush1.msra.mxu0 0.0
    %1899 = vmatprep.subr.mxu0 0.0
    %1900 = vmatpush1.msra.mxu0 0.0
    %1901 = vmatprep.subr.mxu0 0.0
    %1902 = vmatpush1.msra.mxu0 0.0
    %1903 = vmatprep.subr.mxu0 0.0
    %1904 = vmatpush1.msra.mxu0 0.0
    %1905 = vmatprep.subr.mxu0 0.0
    %1906 = vmatpush1.msra.mxu0 0.0
    %1907 = vmatprep.subr.mxu0 0.0
    %1908 = vmatpush1.msra.mxu0 0.0
    %1909 = vmatprep.mubr.f32.mxu0 0.0
    %1910 = vmatmul.mubr.f32.gmra.mrb[0].mxu0 %v1843
    %v1911 = vpop.f32.mrb[0].mxu0
    %v1912 = vadd.f32 0.0, %v1911
    %v1913 = vpop.f32.mrb[0].mxu0
    %1914 = vdwg.mxu0
    %v1915 = vadd.f32 %v1839, %v1912
    %v1916 = vxor.u32 %v1915, 2147483648
    %v1917 = vmul.f32 %v1916, 1.442695
    %v1918 = vpow.pop %v1917
    %v1919 = vadd.f32 %v1918, 1.0
    %v1920 = vrcp.pop %v1919
    %v1921 = vmul.f32 1.0, %v1920
    %v1922 = vtanh.pop %v1915
    %v1923 = vmul.f32 %v1921, %v1832
    %1925 = vrot.lane.b32.xlu0 %v1922, 64
    %v1926 = vpop.permute.xlu0 %1925
    %v1928 = vmul.f32 %v1921, %v1926
    %1930 = vrot.lane.b32.xlu0 %v1928, 32
    %v1931 = vpop.permute.xlu0 %1930
    %v1933 = vadd.f32 %v1923, %v1931
    %v1934 = vtanh.pop %v1933
    %1936 = vrot.lane.b32.xlu0 %v1934, 64
    %v1937 = vpop.permute.xlu0 %1936
    %v1939 = vmul.f32 %v1921, %v1937
    %v1940 = vld [vmem:[%s1086] sm:$0x3]
    %1942 = vrot.lane.b32.xlu0 %v1939, 32
    %v1943 = vpop.permute.xlu0 %1942
    %v1944 = vsel %vm37, %v1943, 0
    %1946 = vmatprep.subr.mxu0 0.0
    %1947 = vmatpush1.msra.mxu0 %v1436
    %1948 = vmatprep.subr.mxu0 0.0
    %1949 = vmatpush1.msra.mxu0 %v1437
    %1950 = vmatprep.subr.mxu0 0.0
    %1951 = vmatpush1.msra.mxu0 %v1438
    %1952 = vmatprep.subr.mxu0 0.0
    %1953 = vmatpush1.msra.mxu0 %v1439
    %1954 = vmatprep.subr.mxu0 0.0
    %1955 = vmatpush1.msra.mxu0 0.0
    %1956 = vmatprep.subr.mxu0 0.0
    %1957 = vmatpush1.msra.mxu0 0.0
    %1958 = vmatprep.subr.mxu0 0.0
    %1959 = vmatpush1.msra.mxu0 0.0
    %1960 = vmatprep.subr.mxu0 0.0
    %1961 = vmatpush1.msra.mxu0 0.0
    %1962 = vmatprep.subr.mxu0 0.0
    %1963 = vmatpush1.msra.mxu0 0.0
    %1964 = vmatprep.subr.mxu0 0.0
    %1965 = vmatpush1.msra.mxu0 0.0
    %1966 = vmatprep.subr.mxu0 0.0
    %1967 = vmatpush1.msra.mxu0 0.0
    %1968 = vmatprep.subr.mxu0 0.0
    %1969 = vmatpush1.msra.mxu0 0.0
    %1970 = vmatprep.subr.mxu0 0.0
    %1971 = vmatpush1.msra.mxu0 0.0
    %1972 = vmatprep.subr.mxu0 0.0
    %1973 = vmatpush1.msra.mxu0 0.0
    %1974 = vmatprep.subr.mxu0 0.0
    %1975 = vmatpush1.msra.mxu0 0.0
    %1976 = vmatprep.subr.mxu0 0.0
    %1977 = vmatpush1.msra.mxu0 0.0
    %1978 = vmatprep.subr.mxu0 0.0
    %1979 = vmatpush1.msra.mxu0 0.0
    %1980 = vmatprep.subr.mxu0 0.0
    %1981 = vmatpush1.msra.mxu0 0.0
    %1982 = vmatprep.subr.mxu0 0.0
    %1983 = vmatpush1.msra.mxu0 0.0
    %1984 = vmatprep.subr.mxu0 0.0
    %1985 = vmatpush1.msra.mxu0 0.0
    %1986 = vmatprep.subr.mxu0 0.0
    %1987 = vmatpush1.msra.mxu0 0.0
    %1988 = vmatprep.subr.mxu0 0.0
    %1989 = vmatpush1.msra.mxu0 0.0
    %1990 = vmatprep.subr.mxu0 0.0
    %1991 = vmatpush1.msra.mxu0 0.0
    %1992 = vmatprep.subr.mxu0 0.0
    %1993 = vmatpush1.msra.mxu0 0.0
    %1994 = vmatprep.subr.mxu0 0.0
    %1995 = vmatpush1.msra.mxu0 0.0
    %1996 = vmatprep.subr.mxu0 0.0
    %1997 = vmatpush1.msra.mxu0 0.0
    %1998 = vmatprep.subr.mxu0 0.0
    %1999 = vmatpush1.msra.mxu0 0.0
    %2000 = vmatprep.subr.mxu0 0.0
    %2001 = vmatpush1.msra.mxu0 0.0
    %2002 = vmatprep.subr.mxu0 0.0
    %2003 = vmatpush1.msra.mxu0 0.0
    %2004 = vmatprep.subr.mxu0 0.0
    %2005 = vmatpush1.msra.mxu0 0.0
    %2006 = vmatprep.subr.mxu0 0.0
    %2007 = vmatpush1.msra.mxu0 0.0
    %2008 = vmatprep.subr.mxu0 0.0
    %2009 = vmatpush1.msra.mxu0 0.0
    %2010 = vmatprep.mubr.f32.mxu0 0.0
    %2011 = vmatmul.mubr.f32.gmra.mrb[0].mxu0 %v1944
    %v2012 = vpop.f32.mrb[0].mxu0
    %v2013 = vadd.f32 0.0, %v2012
    %v2014 = vpop.f32.mrb[0].mxu0
    %2015 = vdwg.mxu0
    %v2016 = vadd.f32 %v1940, %v2013
    %v2017 = vxor.u32 %v2016, 2147483648
    %v2018 = vmul.f32 %v2017, 1.442695
    %v2019 = vpow.pop %v2018
    %v2020 = vadd.f32 %v2019, 1.0
    %v2021 = vrcp.pop %v2020
    %v2022 = vmul.f32 1.0, %v2021
    %v2023 = vtanh.pop %v2016
    %v2024 = vmul.f32 %v2022, %v1933
    %2026 = vrot.lane.b32.xlu0 %v2023, 64
    %v2027 = vpop.permute.xlu0 %2026
    %v2029 = vmul.f32 %v2022, %v2027
    %2031 = vrot.lane.b32.xlu0 %v2029, 32
    %v2032 = vpop.permute.xlu0 %2031
    %v2034 = vadd.f32 %v2024, %v2032
    %v2035 = vtanh.pop %v2034
    %2037 = vrot.lane.b32.xlu0 %v2035, 64
    %v2038 = vpop.permute.xlu0 %2037
    %v2040 = vmul.f32 %v2022, %v2038
    %v2041 = vld [vmem:[%s1260] sm:$0x3]
    %2043 = vrot.lane.b32.xlu0 %v2040, 32
    %v2044 = vpop.permute.xlu0 %2043
    %v2045 = vsel %vm37, %v2044, 0
    %2047 = vmatprep.subr.mxu0 0.0
    %2048 = vmatpush1.msra.mxu0 %v1436
    %2049 = vmatprep.subr.mxu0 0.0
    %2050 = vmatpush1.msra.mxu0 %v1437
    %2051 = vmatprep.subr.mxu0 0.0
    %2052 = vmatpush1.msra.mxu0 %v1438
    %2053 = vmatprep.subr.mxu0 0.0
    %2054 = vmatpush1.msra.mxu0 %v1439
    %2055 = vmatprep.subr.mxu0 0.0
    %2056 = vmatpush1.msra.mxu0 0.0
    %2057 = vmatprep.subr.mxu0 0.0
    %2058 = vmatpush1.msra.mxu0 0.0
    %2059 = vmatprep.subr.mxu0 0.0
    %2060 = vmatpush1.msra.mxu0 0.0
    %2061 = vmatprep.subr.mxu0 0.0
    %2062 = vmatpush1.msra.mxu0 0.0
    %2063 = vmatprep.subr.mxu0 0.0
    %2064 = vmatpush1.msra.mxu0 0.0
    %2065 = vmatprep.subr.mxu0 0.0
    %2066 = vmatpush1.msra.mxu0 0.0
    %2067 = vmatprep.subr.mxu0 0.0
    %2068 = vmatpush1.msra.mxu0 0.0
    %2069 = vmatprep.subr.mxu0 0.0
    %2070 = vmatpush1.msra.mxu0 0.0
    %2071 = vmatprep.subr.mxu0 0.0
    %2072 = vmatpush1.msra.mxu0 0.0
    %2073 = vmatprep.subr.mxu0 0.0
    %2074 = vmatpush1.msra.mxu0 0.0
    %2075 = vmatprep.subr.mxu0 0.0
    %2076 = vmatpush1.msra.mxu0 0.0
    %2077 = vmatprep.subr.mxu0 0.0
    %2078 = vmatpush1.msra.mxu0 0.0
    %2079 = vmatprep.subr.mxu0 0.0
    %2080 = vmatpush1.msra.mxu0 0.0
    %2081 = vmatprep.subr.mxu0 0.0
    %2082 = vmatpush1.msra.mxu0 0.0
    %2083 = vmatprep.subr.mxu0 0.0
    %2084 = vmatpush1.msra.mxu0 0.0
    %2085 = vmatprep.subr.mxu0 0.0
    %2086 = vmatpush1.msra.mxu0 0.0
    %2087 = vmatprep.subr.mxu0 0.0
    %2088 = vmatpush1.msra.mxu0 0.0
    %2089 = vmatprep.subr.mxu0 0.0
    %2090 = vmatpush1.msra.mxu0 0.0
    %2091 = vmatprep.subr.mxu0 0.0
    %2092 = vmatpush1.msra.mxu0 0.0
    %2093 = vmatprep.subr.mxu0 0.0
    %2094 = vmatpush1.msra.mxu0 0.0
    %2095 = vmatprep.subr.mxu0 0.0
    %2096 = vmatpush1.msra.mxu0 0.0
    %2097 = vmatprep.subr.mxu0 0.0
    %2098 = vmatpush1.msra.mxu0 0.0
    %2099 = vmatprep.subr.mxu0 0.0
    %2100 = vmatpush1.msra.mxu0 0.0
    %2101 = vmatprep.subr.mxu0 0.0
    %2102 = vmatpush1.msra.mxu0 0.0
    %2103 = vmatprep.subr.mxu0 0.0
    %2104 = vmatpush1.msra.mxu0 0.0
    %2105 = vmatprep.subr.mxu0 0.0
    %2106 = vmatpush1.msra.mxu0 0.0
    %2107 = vmatprep.subr.mxu0 0.0
    %2108 = vmatpush1.msra.mxu0 0.0
    %2109 = vmatprep.subr.mxu0 0.0
    %2110 = vmatpush1.msra.mxu0 0.0
    %2111 = vmatprep.mubr.f32.mxu0 0.0
    %2112 = vmatmul.mubr.f32.gmra.mrb[0].mxu0 %v2045
    %v2113 = vpop.f32.mrb[0].mxu0
    %v2114 = vadd.f32 0.0, %v2113
    %v2115 = vpop.f32.mrb[0].mxu0
    %2116 = vdwg.mxu0
    %v2117 = vadd.f32 %v2041, %v2114
    %v2118 = vxor.u32 %v2117, 2147483648
    %v2119 = vmul.f32 %v2118, 1.442695
    %v2120 = vpow.pop %v2119
    %v2121 = vadd.f32 %v2120, 1.0
    %v2122 = vrcp.pop %v2121
    %v2123 = vmul.f32 1.0, %v2122
    %v2124 = vtanh.pop %v2117
    %v2125 = vmul.f32 %v2123, %v2034
    %2127 = vrot.lane.b32.xlu0 %v2124, 64
    %v2128 = vpop.permute.xlu0 %2127
    %v2130 = vmul.f32 %v2123, %v2128
    %2132 = vrot.lane.b32.xlu0 %v2130, 32
    %v2133 = vpop.permute.xlu0 %2132
    %v2135 = vadd.f32 %v2125, %v2133
    %v2136 = vtanh.pop %v2135
    %2138 = vrot.lane.b32.xlu0 %v2136, 64
    %v2139 = vpop.permute.xlu0 %2138
    %v2141 = vmul.f32 %v2123, %v2139
    %v2142 = vld [vmem:[%s1434] sm:$0x3]
    %2144 = vrot.lane.b32.xlu0 %v2141, 32
    %v2145 = vpop.permute.xlu0 %2144
    %v2146 = vsel %vm37, %v2145, 0
    %2148 = vmatprep.subr.mxu0 0.0
    %2149 = vmatpush1.msra.mxu0 %v1436
    %2150 = vmatprep.subr.mxu0 0.0
    %2151 = vmatpush1.msra.mxu0 %v1437
    %2152 = vmatprep.subr.mxu0 0.0
    %2153 = vmatpush1.msra.mxu0 %v1438
    %2154 = vmatprep.subr.mxu0 0.0
    %2155 = vmatpush1.msra.mxu0 %v1439
    %2156 = vmatprep.subr.mxu0 0.0
    %2157 = vmatpush1.msra.mxu0 0.0
    %2158 = vmatprep.subr.mxu0 0.0
    %2159 = vmatpush1.msra.mxu0 0.0
    %2160 = vmatprep.subr.mxu0 0.0
    %2161 = vmatpush1.msra.mxu0 0.0
    %2162 = vmatprep.subr.mxu0 0.0
    %2163 = vmatpush1.msra.mxu0 0.0
    %2164 = vmatprep.subr.mxu0 0.0
    %2165 = vmatpush1.msra.mxu0 0.0
    %2166 = vmatprep.subr.mxu0 0.0
    %2167 = vmatpush1.msra.mxu0 0.0
    %2168 = vmatprep.subr.mxu0 0.0
    %2169 = vmatpush1.msra.mxu0 0.0
    %2170 = vmatprep.subr.mxu0 0.0
    %2171 = vmatpush1.msra.mxu0 0.0
    %2172 = vmatprep.subr.mxu0 0.0
    %2173 = vmatpush1.msra.mxu0 0.0
    %2174 = vmatprep.subr.mxu0 0.0
    %2175 = vmatpush1.msra.mxu0 0.0
    %2176 = vmatprep.subr.mxu0 0.0
    %2177 = vmatpush1.msra.mxu0 0.0
    %2178 = vmatprep.subr.mxu0 0.0
    %2179 = vmatpush1.msra.mxu0 0.0
    %2180 = vmatprep.subr.mxu0 0.0
    %2181 = vmatpush1.msra.mxu0 0.0
    %2182 = vmatprep.subr.mxu0 0.0
    %2183 = vmatpush1.msra.mxu0 0.0
    %2184 = vmatprep.subr.mxu0 0.0
    %2185 = vmatpush1.msra.mxu0 0.0
    %2186 = vmatprep.subr.mxu0 0.0
    %2187 = vmatpush1.msra.mxu0 0.0
    %2188 = vmatprep.subr.mxu0 0.0
    %2189 = vmatpush1.msra.mxu0 0.0
    %2190 = vmatprep.subr.mxu0 0.0
    %2191 = vmatpush1.msra.mxu0 0.0
    %2192 = vmatprep.subr.mxu0 0.0
    %2193 = vmatpush1.msra.mxu0 0.0
    %2194 = vmatprep.subr.mxu0 0.0
    %2195 = vmatpush1.msra.mxu0 0.0
    %2196 = vmatprep.subr.mxu0 0.0
    %2197 = vmatpush1.msra.mxu0 0.0
    %2198 = vmatprep.subr.mxu0 0.0
    %2199 = vmatpush1.msra.mxu0 0.0
    %2200 = vmatprep.subr.mxu0 0.0
    %2201 = vmatpush1.msra.mxu0 0.0
    %2202 = vmatprep.subr.mxu0 0.0
    %2203 = vmatpush1.msra.mxu0 0.0
    %2204 = vmatprep.subr.mxu0 0.0
    %2205 = vmatpush1.msra.mxu0 0.0
    %2206 = vmatprep.subr.mxu0 0.0
    %2207 = vmatpush1.msra.mxu0 0.0
    %2208 = vmatprep.subr.mxu0 0.0
    %2209 = vmatpush1.msra.mxu0 0.0
    %2210 = vmatprep.subr.mxu0 0.0
    %2211 = vmatpush1.msra.mxu0 0.0
    %2212 = vmatprep.mubr.f32.mxu0 0.0
    %2213 = vmatmul.mubr.f32.gmra.mrb[0].mxu0 %v2146
    %v2214 = vpop.f32.mrb[0].mxu0
    %v2215 = vadd.f32 0.0, %v2214
    %v2216 = vpop.f32.mrb[0].mxu0
    %2217 = vdwg.mxu0
    %v2218 = vadd.f32 %v2142, %v2215
    %v2219 = vxor.u32 %v2218, 2147483648
    %v2220 = vmul.f32 %v2219, 1.442695
    %v2221 = vpow.pop %v2220
    %v2222 = vadd.f32 %v2221, 1.0
    %v2223 = vrcp.pop %v2222
    %v2224 = vmul.f32 1.0, %v2223
    %v2225 = vtanh.pop %v2218
    %v2226 = vmul.f32 %v2224, %v2135
    %2228 = vrot.lane.b32.xlu0 %v2225, 64
    %v2229 = vpop.permute.xlu0 %2228
    %v2231 = vmul.f32 %v2224, %v2229
    %2233 = vrot.lane.b32.xlu0 %v2231, 32
    %v2234 = vpop.permute.xlu0 %2233
    %v2236 = vadd.f32 %v2226, %v2234
    %v2237 = vtanh.pop %v2236
    %2239 = vrot.lane.b32.xlu0 %v2237, 64
    %v2240 = vpop.permute.xlu0 %2239
    %v2242 = vmul.f32 %v2224, %v2240
    %v2243 = vld [vmem:[%s5] sm:$0xff]
    %v2244 = vld [vmem:[%s5 + $0x8] sm:$0xff]
    %v2245 = vld [vmem:[%s5 + $0x10] sm:$0xff]
    %v2246 = vld [vmem:[%s5 + $0x18] sm:$0xff]
    %v2247 = vld [vmem:[%s6] sm:$0x1]
    %v2249 = vlaneseq
    %v2250 = vshrl.u32 %v2249, 7
    %v2251 = vsub.s32 0, %v2250
    %v2252 = vrot.slane %v2247, %v2251
    %2255 = vrot.lane.b32.xlu0 %v2242, 32
    %v2256 = vpop.permute.xlu0 %2255
    %v2257 = vsel %vm37, %v2256, 0
    %2259 = vmatprep.subr.mxu0 0.0
    %2260 = vmatpush1.msra.mxu0 %v2243
    %2261 = vmatprep.subr.mxu0 0.0
    %2262 = vmatpush1.msra.mxu0 %v2244
    %2263 = vmatprep.subr.mxu0 0.0
    %2264 = vmatpush1.msra.mxu0 %v2245
    %2265 = vmatprep.subr.mxu0 0.0
    %2266 = vmatpush1.msra.mxu0 %v2246
    %2267 = vmatprep.subr.mxu0 0.0
    %2268 = vmatpush1.msra.mxu0 0.0
    %2269 = vmatprep.subr.mxu0 0.0
    %2270 = vmatpush1.msra.mxu0 0.0
    %2271 = vmatprep.subr.mxu0 0.0
    %2272 = vmatpush1.msra.mxu0 0.0
    %2273 = vmatprep.subr.mxu0 0.0
    %2274 = vmatpush1.msra.mxu0 0.0
    %2275 = vmatprep.subr.mxu0 0.0
    %2276 = vmatpush1.msra.mxu0 0.0
    %2277 = vmatprep.subr.mxu0 0.0
    %2278 = vmatpush1.msra.mxu0 0.0
    %2279 = vmatprep.subr.mxu0 0.0
    %2280 = vmatpush1.msra.mxu0 0.0
    %2281 = vmatprep.subr.mxu0 0.0
    %2282 = vmatpush1.msra.mxu0 0.0
    %2283 = vmatprep.subr.mxu0 0.0
    %2284 = vmatpush1.msra.mxu0 0.0
    %2285 = vmatprep.subr.mxu0 0.0
    %2286 = vmatpush1.msra.mxu0 0.0
    %2287 = vmatprep.subr.mxu0 0.0
    %2288 = vmatpush1.msra.mxu0 0.0
    %2289 = vmatprep.subr.mxu0 0.0
    %2290 = vmatpush1.msra.mxu0 0.0
    %2291 = vmatprep.subr.mxu0 0.0
    %2292 = vmatpush1.msra.mxu0 0.0
    %2293 = vmatprep.subr.mxu0 0.0
    %2294 = vmatpush1.msra.mxu0 0.0
    %2295 = vmatprep.subr.mxu0 0.0
    %2296 = vmatpush1.msra.mxu0 0.0
    %2297 = vmatprep.subr.mxu0 0.0
    %2298 = vmatpush1.msra.mxu0 0.0
    %2299 = vmatprep.subr.mxu0 0.0
    %2300 = vmatpush1.msra.mxu0 0.0
    %2301 = vmatprep.subr.mxu0 0.0
    %2302 = vmatpush1.msra.mxu0 0.0
    %2303 = vmatprep.subr.mxu0 0.0
    %2304 = vmatpush1.msra.mxu0 0.0
    %2305 = vmatprep.subr.mxu0 0.0
    %2306 = vmatpush1.msra.mxu0 0.0
    %2307 = vmatprep.subr.mxu0 0.0
    %2308 = vmatpush1.msra.mxu0 0.0
    %2309 = vmatprep.subr.mxu0 0.0
    %2310 = vmatpush1.msra.mxu0 0.0
    %2311 = vmatprep.subr.mxu0 0.0
    %2312 = vmatpush1.msra.mxu0 0.0
    %2313 = vmatprep.subr.mxu0 0.0
    %2314 = vmatpush1.msra.mxu0 0.0
    %2315 = vmatprep.subr.mxu0 0.0
    %2316 = vmatpush1.msra.mxu0 0.0
    %2317 = vmatprep.subr.mxu0 0.0
    %2318 = vmatpush1.msra.mxu0 0.0
    %2319 = vmatprep.subr.mxu0 0.0
    %2320 = vmatpush1.msra.mxu0 0.0
    %2321 = vmatprep.subr.mxu0 0.0
    %2322 = vmatpush1.msra.mxu0 0.0
    %2323 = vmatprep.mubr.f32.mxu0 0.0
    %2324 = vmatmul.mubr.f32.gmra.mrb[0].mxu0 %v2257
    %v2325 = vpop.f32.mrb[0].mxu0
    %v2326 = vadd.f32 %v2252, %v2325
    %v2327 = vpop.f32.mrb[0].mxu0
    %2328 = vdwg.mxu0
    %v2329 = vxor.u32 %v2326, 2147483648
    %v2330 = vmul.f32 %v2329, 1.442695
    %v2331 = vpow.pop %v2330
    %v2332 = vadd.f32 %v2331, 1.0
    %v2333 = vrcp.pop %v2332
    %v2334 = vmul.f32 1.0, %v2333
    %vm2335 = vcmask 25600
    %2336 = vst.msk [vmem:[#allocation3] sm:$0x3] %vm2335, %v2334
    // Predicated region
    $region30: #{rnn_forward.1} parent=1 // pred_check
      _
    $region31: #{rnn_forward.1} parent=1 // pred_check_branch
      %2338 = sbr.rel (0) target = $region33
    $region32: #{rnn_forward.1} parent=1 // pred_region
      %s2340 = ssub.s32 32, 32
      %2341 = vsyncadd [#allocation4], %s2340
      %s2343 = sshll.u32 [#allocation3], 4
      %s2344 = int_to_ptr.vmem [resolvable:$true] %s2343
      %2346 = dma.vmem_to_hbm [thread:$0]  %s2344, 32, %s7, [#allocation4]
    $region33: #{rnn_forward.1} parent=1 // pred_fallthru
      _
    // Predicated region
    $region34: #{rnn_forward.1} parent=1 // pred_check
      _
    $region35: #{rnn_forward.1} parent=1 // pred_check_branch
      %2348 = sbr.rel (0) target = $region37
    $region36: #{rnn_forward.1} parent=1 // pred_region
      %2349 = dma.done [#allocation4], 32
    $region37: #{rnn_forward.1} parent=1 // pred_fallthru
      _
    %2350 = vsyncpa [#allocation4], 1

</llo_original>
